<compile_context>
chip_gen: v7x
topology: tpu7x:2x2x1
jax: 0.10.0
libtpu: 0.0.40
codegen_flags: <defaults>
</compile_context>

<pallas_src>
import functools
import math

import jax
import jax.numpy as jnp
import numpy as np
from jax.experimental import pallas as pl
from jax.experimental.pallas import tpu as pltpu


# ----------------------------- Pallas kernel ---------------------------------
def _encoder_block_kernel(
    mask_ref,                  # (1, 1, S)  int32; 0 == masked key position
    xq_ref,                    # (1, TQ, E) query / residual rows of this tile
    xf_ref,                    # (1, S, E)  full sequence (keys / values)
    wq_ref, bq_ref,            # (h, E, dk), (h, 1, dk)   per-head, pre-transposed
    wk_ref, bk_ref,            # (h, E, dk), (h, 1, dk)
    wv_ref, bv_ref,            # (h, E, dk), (h, 1, dk)
    wo_ref, bo_ref,            # (h, dk, E), (1, E)       per-head rows of Wo^T
    g1_ref, be1_ref,           # (1, E), (1, E)           LayerNorm 1
    w1_ref, b1_ref,            # (E, H), (1, H)           fc1 (pre-transposed)
    w2_ref, b2_ref,            # (H, E), (1, E)           fc2 (pre-transposed)
    g2_ref, be2_ref,           # (1, E), (1, E)           LayerNorm 2
    out_ref,                   # (1, TQ, E)
    *, num_heads: int,
):
    xq = xq_ref[0]                               # (TQ, E) f32
    xf = xf_ref[0]                               # (S,  E) f32
    maskv = mask_ref[0]                          # (1, S)  int32
    TQ, E = xq.shape
    S = xf.shape[0]
    dk = E // num_heads
    scale = 1.0 / math.sqrt(dk)

    # --- head-batched Q/K/V projections (no in-kernel transposes / slices) ---
    xq_b = jnp.broadcast_to(xq[None], (num_heads, TQ, E))
    xf_b = jnp.broadcast_to(xf[None], (num_heads, S, E))
    qh = jnp.einsum("hqe,hed->hqd", xq_b, wq_ref[...],
                    preferred_element_type=jnp.float32) + bq_ref[...]   # (h,TQ,dk)
    kh = jnp.einsum("hke,hed->hkd", xf_b, wk_ref[...],
                    preferred_element_type=jnp.float32) + bk_ref[...]   # (h,S,dk)
    vh = jnp.einsum("hke,hed->hkd", xf_b, wv_ref[...],
                    preferred_element_type=jnp.float32) + bv_ref[...]   # (h,S,dk)

    # --- scaled dot-product attention, all heads batched -----------------
    s = jnp.einsum("hqd,hkd->hqk", qh, kh,
                   preferred_element_type=jnp.float32)                  # (h,TQ,S)
    # masked_fill happens BEFORE the 1/sqrt(dk) scaling, exactly as in PyTorch.
    s = jnp.where(maskv == 0, jnp.float32(-1e10), s)
    s = s * scale
    m = jnp.max(s, axis=-1, keepdims=True)
    e = jnp.exp(s - m)
    p = e / jnp.sum(e, axis=-1, keepdims=True)
    ctx = jnp.einsum("hqk,hkd->hqd", p, vh,
                     preferred_element_type=jnp.float32)                # (h,TQ,dk)

    # Output projection: per-head (dk, E) block of Wo^T, summed over heads.
    # This folds the "concat heads" back together with zero relayout work.
    attn = jnp.einsum("hqd,hde->hqe", ctx, wo_ref[...],
                      preferred_element_type=jnp.float32).sum(axis=0) + bo_ref[...]

    # --- residual + LayerNorm 1 (dropout == identity) ---------------------
    res1 = attn + xq
    mu1 = jnp.mean(res1, axis=-1, keepdims=True)
    var1 = jnp.mean((res1 - mu1) ** 2, axis=-1, keepdims=True)
    sub1 = (res1 - mu1) * jax.lax.rsqrt(var1 + 1e-5) * g1_ref[...] + be1_ref[...]

    # --- feed-forward (pre-transposed weights: x @ W) ---------------------
    hid = jnp.dot(sub1, w1_ref[...], preferred_element_type=jnp.float32) + b1_ref[...]
    hid = jnp.maximum(hid, 0.0)
    ff = jnp.dot(hid, w2_ref[...], preferred_element_type=jnp.float32) + b2_ref[...]

    # --- residual + LayerNorm 2 -------------------------------------------
    res2 = ff + sub1
    mu2 = jnp.mean(res2, axis=-1, keepdims=True)
    var2 = jnp.mean((res2 - mu2) ** 2, axis=-1, keepdims=True)
    sub2 = (res2 - mu2) * jax.lax.rsqrt(var2 + 1e-5) * g2_ref[...] + be2_ref[...]

    out_ref[0] = sub2.astype(out_ref.dtype)


# -------------------------- host-side param packing --------------------------
def _pack_params(p, num_heads):
    """PyTorch-layout params -> kernel layout (pre-transposed, head-major)."""
    E = p["wq"].shape[0]
    dk = E // num_heads
    t = lambda w: jnp.asarray(w).T                                   # (in, out)
    per_head_in = lambda w: t(w).reshape(E, num_heads, dk).transpose(1, 0, 2)
    return dict(
        wq=per_head_in(p["wq"]), bq=p["bq"].reshape(num_heads, 1, dk),
        wk=per_head_in(p["wk"]), bk=p["bk"].reshape(num_heads, 1, dk),
        wv=per_head_in(p["wv"]), bv=p["bv"].reshape(num_heads, 1, dk),
        wo=t(p["wo"]).reshape(num_heads, dk, E), bo=p["bo"],
        g1=p["g1"], be1=p["be1"],
        w1=t(p["w1"]), b1=p["b1"],
        w2=t(p["w2"]), b2=p["b2"],
        g2=p["g2"], be2=p["be2"],
    )


_WEIGHT_ORDER = ["wq", "bq", "wk", "bk", "wv", "bv", "wo", "bo",
                 "g1", "be1", "w1", "b1", "w2", "b2", "g2", "be2"]


def encoder_block_pallas(src_embed, src_mask_i32, params, num_heads):
    """One EncoderBlock forward. src_embed: (B,S,E) f32, src_mask_i32: (B,1,S) i32."""
    B, S, E = src_embed.shape
    packed = _pack_params(params, num_heads)
    weights = [packed[k] for k in _WEIGHT_ORDER]

    # Query tiling: full sequence if it is small / not 128-divisible, else 128
    # rows per grid step (multiple of the 8-sublane granularity).
    TILE_Q = S if (S <= 128 or S % 128 != 0) else 128
    n_q = S // TILE_Q

    def const_spec(arr):
        zeros = (0,) * arr.ndim
        return pl.BlockSpec(arr.shape, lambda b, qi: zeros)

    in_specs = [
        pl.BlockSpec((1, 1, S), lambda b, qi: (b, 0, 0)),        # mask
        pl.BlockSpec((1, TILE_Q, E), lambda b, qi: (b, qi, 0)),  # query rows
        pl.BlockSpec((1, S, E), lambda b, qi: (b, 0, 0)),        # full sequence
    ] + [const_spec(w) for w in weights]

    # Explicit VMEM budget: resident weights + (double-buffered) activation tiles.
    w_bytes = sum(int(w.size) * w.dtype.itemsize for w in weights)
    a_bytes = 4 * (S + S * E + 2 * TILE_Q * E) * 2
    vmem_limit = int(min(max(4 * (w_bytes + a_bytes), 16 * 2**20), 64 * 2**20))

    kernel = functools.partial(_encoder_block_kernel, num_heads=num_heads)
    return pl.pallas_call(
        kernel,
        out_shape=jax.ShapeDtypeStruct((B, S, E), src_embed.dtype),
        grid=(B, n_q),
        in_specs=in_specs,
        out_specs=pl.BlockSpec((1, TILE_Q, E), lambda b, qi: (b, qi, 0)),
        compiler_params=pltpu.CompilerParams(
            dimension_semantics=("parallel", "parallel"),
            vmem_limit_bytes=vmem_limit,
        ),
    )(src_mask_i32, src_embed, src_embed, *weights)


def encoder_pallas(src_embed, src_mask_i32, layer_params, num_heads):
    """Faithful to the PyTorch Encoder: every block sees the ORIGINAL src_embed
    and only the last block's output is returned, so all earlier blocks are
    dead work.  Run only the last block (bit-identical, ~nx times cheaper)."""
    return encoder_block_pallas(src_embed, src_mask_i32, layer_params[-1], num_heads)


# ----------------------- pure-JAX reference (for checking) -------------------
def _block_ref(x, mask_i32, p, h):
    B, S, E = x.shape
    dk = E // h
    lin = lambda a, w, b: a @ w.T + b[0]
    k = lin(x, p["wk"], p["bk"]).reshape(B, S, h, dk).transpose(0, 2, 1, 3)
    q = lin(x, p["wq"], p["bq"]).reshape(B, S, h, dk).transpose(0, 2, 1, 3)
    v = lin(x, p["wv"], p["bv"]).reshape(B, S, h, dk).transpose(0, 2, 1, 3)
    s = jnp.einsum("bhmd,bhnd->bhmn", q, k)
    s = jnp.where(mask_i32[:, None, :, :] == 0, -1e10, s)
    a = jax.nn.softmax(s / dk ** 0.5, axis=3)
    o = jnp.einsum("bhmn,bhnv->bhmv", a, v).transpose(0, 2, 1, 3).reshape(B, S, E)
    o = lin(o, p["wo"], p["bo"])

    def ln(z, g, b):
        mu = z.mean(-1, keepdims=True)
        var = ((z - mu) ** 2).mean(-1, keepdims=True)
        return (z - mu) / jnp.sqrt(var + 1e-5) * g[0] + b[0]

    sub1 = ln(o + x, p["g1"], p["be1"])
    ff = lin(jnp.maximum(lin(sub1, p["w1"], p["b1"]), 0.0), p["w2"], p["b2"])
    return ln(ff + sub1, p["g2"], p["be2"])


def _encoder_ref(x, mask_i32, layer_params, h):
    # Mirrors the PyTorch loop exactly (every block sees x; last result wins).
    out = None
    for p in layer_params:
        out = _block_ref(x, mask_i32, p, h)
    return out


# ----------------------------------- main ------------------------------------
def _init_layer(key, edim, hdim):
    ks = jax.random.split(key, 10)
    u = lambda k, shape, fan_in: jax.random.uniform(
        k, shape, jnp.float32, -1.0 / math.sqrt(fan_in), 1.0 / math.sqrt(fan_in))
    return {
        "wk": u(ks[0], (edim, edim), edim), "bk": u(ks[1], (1, edim), edim),
        "wq": u(ks[2], (edim, edim), edim), "bq": u(ks[3], (1, edim), edim),
        "wv": u(ks[4], (edim, edim), edim), "bv": u(ks[5], (1, edim), edim),
        "wo": u(ks[6], (edim, edim), edim), "bo": u(ks[7], (1, edim), edim),
        "g1": jnp.ones((1, edim), jnp.float32), "be1": jnp.zeros((1, edim), jnp.float32),
        "w1": u(ks[8], (hdim, edim), edim), "b1": jnp.zeros((1, hdim), jnp.float32),
        "w2": u(ks[9], (edim, hdim), hdim), "b2": jnp.zeros((1, edim), jnp.float32),
        "g2": jnp.ones((1, edim), jnp.float32), "be2": jnp.zeros((1, edim), jnp.float32),
    }


if __name__ == "__main__":
    nx, edim, h, hdim = 2, 32, 4, 64
    B, S = 2, 8

    root = jax.random.PRNGKey(0)
    k_x, k_layers = jax.random.split(root)
    src_embed = jax.random.normal(k_x, (B, S, edim), jnp.float32)

    # padding-style mask: batch 0 fully visible, batch 1 has last 2 keys masked
    mask_bool = np.ones((B, 1, S), dtype=bool)
    mask_bool[1, 0, -2:] = False
    src_mask = jnp.asarray(mask_bool.astype(np.int32))   # (B, 1, S) int32

    layer_keys = jax.random.split(k_layers, nx)
    layer_params = [_init_layer(k, edim, hdim) for k in layer_keys]

    out = encoder_pallas(src_embed, src_mask, layer_params, h)
    out = jax.block_until_ready(out)

    ref = _encoder_ref(src_embed, src_mask, layer_params, h)
    np.testing.assert_allclose(np.asarray(out), np.asarray(ref), rtol=1e-4, atol=1e-4)

    print("KERNEL_OK")
</pallas_src>

<mosaic_0001>
module attributes {stable_mosaic.version = 11 : i64} {
  func.func @_encoder_block_kernel(%arg0: i32, %arg1: i32, %arg2: memref<1x1x8xi32, #tpu.memory_space<vmem>>, %arg3: memref<1x8x32xf32, #tpu.memory_space<vmem>>, %arg4: memref<1x8x32xf32, #tpu.memory_space<vmem>>, %arg5: memref<4x32x8xf32, #tpu.memory_space<vmem>>, %arg6: memref<4x1x8xf32, #tpu.memory_space<vmem>>, %arg7: memref<4x32x8xf32, #tpu.memory_space<vmem>>, %arg8: memref<4x1x8xf32, #tpu.memory_space<vmem>>, %arg9: memref<4x32x8xf32, #tpu.memory_space<vmem>>, %arg10: memref<4x1x8xf32, #tpu.memory_space<vmem>>, %arg11: memref<4x8x32xf32, #tpu.memory_space<vmem>>, %arg12: memref<1x32xf32, #tpu.memory_space<vmem>>, %arg13: memref<1x32xf32, #tpu.memory_space<vmem>>, %arg14: memref<1x32xf32, #tpu.memory_space<vmem>>, %arg15: memref<32x64xf32, #tpu.memory_space<vmem>>, %arg16: memref<1x64xf32, #tpu.memory_space<vmem>>, %arg17: memref<64x32xf32, #tpu.memory_space<vmem>>, %arg18: memref<1x32xf32, #tpu.memory_space<vmem>>, %arg19: memref<1x32xf32, #tpu.memory_space<vmem>>, %arg20: memref<1x32xf32, #tpu.memory_space<vmem>>, %arg21: memref<1x8x32xf32, #tpu.memory_space<vmem>>) attributes {dimension_semantics = [#tpu.dimension_semantics<parallel>, #tpu.dimension_semantics<parallel>], iteration_bounds = array<i64: 2, 1>, scalar_prefetch = 0 : i64, scratch_operands = 0 : i64, tpu.core_type = #tpu.core_type<tc>, window_params = [{transform_indices = @transform_0, window_bounds = array<i64: 1, 1, 8>}, {transform_indices = @transform_1, window_bounds = array<i64: 1, 8, 32>}, {transform_indices = @transform_2, window_bounds = array<i64: 1, 8, 32>}, {pipeline_mode = #tpu.pipeline_mode<synchronous>, transform_indices = @transform_3, window_bounds = array<i64: 4, 32, 8>}, {pipeline_mode = #tpu.pipeline_mode<synchronous>, transform_indices = @transform_4, window_bounds = array<i64: 4, 1, 8>}, {pipeline_mode = #tpu.pipeline_mode<synchronous>, transform_indices = @transform_5, window_bounds = array<i64: 4, 32, 8>}, {pipeline_mode = #tpu.pipeline_mode<synchronous>, transform_indices = @transform_6, window_bounds = array<i64: 4, 1, 8>}, {pipeline_mode = #tpu.pipeline_mode<synchronous>, transform_indices = @transform_7, window_bounds = array<i64: 4, 32, 8>}, {pipeline_mode = #tpu.pipeline_mode<synchronous>, transform_indices = @transform_8, window_bounds = array<i64: 4, 1, 8>}, {pipeline_mode = #tpu.pipeline_mode<synchronous>, transform_indices = @transform_9, window_bounds = array<i64: 4, 8, 32>}, {pipeline_mode = #tpu.pipeline_mode<synchronous>, transform_indices = @transform_10, window_bounds = array<i64: 1, 32>}, {pipeline_mode = #tpu.pipeline_mode<synchronous>, transform_indices = @transform_11, window_bounds = array<i64: 1, 32>}, {pipeline_mode = #tpu.pipeline_mode<synchronous>, transform_indices = @transform_12, window_bounds = array<i64: 1, 32>}, {pipeline_mode = #tpu.pipeline_mode<synchronous>, transform_indices = @transform_13, window_bounds = array<i64: 32, 64>}, {pipeline_mode = #tpu.pipeline_mode<synchronous>, transform_indices = @transform_14, window_bounds = array<i64: 1, 64>}, {pipeline_mode = #tpu.pipeline_mode<synchronous>, transform_indices = @transform_15, window_bounds = array<i64: 64, 32>}, {pipeline_mode = #tpu.pipeline_mode<synchronous>, transform_indices = @transform_16, window_bounds = array<i64: 1, 32>}, {pipeline_mode = #tpu.pipeline_mode<synchronous>, transform_indices = @transform_17, window_bounds = array<i64: 1, 32>}, {pipeline_mode = #tpu.pipeline_mode<synchronous>, transform_indices = @transform_18, window_bounds = array<i64: 1, 32>}, {transform_indices = @transform_19, window_bounds = array<i64: 1, 8, 32>}]} {
    %c0 = arith.constant 0 : index
    %c0_0 = arith.constant 0 : index
    %c0_1 = arith.constant 0 : index
    %0 = vector.load %arg3[%c0, %c0_0, %c0_1] : memref<1x8x32xf32, #tpu.memory_space<vmem>>, vector<1x8x32xf32>
    %1 = vector.shape_cast %0 : vector<1x8x32xf32> to vector<8x32xf32>
    %c0_2 = arith.constant 0 : index
    %c0_3 = arith.constant 0 : index
    %c0_4 = arith.constant 0 : index
    %2 = vector.load %arg4[%c0_2, %c0_3, %c0_4] : memref<1x8x32xf32, #tpu.memory_space<vmem>>, vector<1x8x32xf32>
    %3 = vector.shape_cast %2 : vector<1x8x32xf32> to vector<8x32xf32>
    %c0_5 = arith.constant 0 : index
    %c0_6 = arith.constant 0 : index
    %c0_7 = arith.constant 0 : index
    %4 = vector.load %arg2[%c0_5, %c0_6, %c0_7] : memref<1x1x8xi32, #tpu.memory_space<vmem>>, vector<1x1x8xi32>
    %5 = vector.shape_cast %4 : vector<1x1x8xi32> to vector<1x8xi32>
    %6 = vector.shape_cast %1 : vector<8x32xf32> to vector<1x8x32xf32>
    %7 = vector.shape_cast %6 : vector<1x8x32xf32> to vector<1x8x32xf32>
    %8 = vector.broadcast %7 : vector<1x8x32xf32> to vector<4x8x32xf32>
    %9 = vector.shape_cast %3 : vector<8x32xf32> to vector<1x8x32xf32>
    %10 = vector.shape_cast %9 : vector<1x8x32xf32> to vector<1x8x32xf32>
    %11 = vector.broadcast %10 : vector<1x8x32xf32> to vector<4x8x32xf32>
    %c0_8 = arith.constant 0 : index
    %c0_9 = arith.constant 0 : index
    %c0_10 = arith.constant 0 : index
    %12 = vector.load %arg5[%c0_8, %c0_9, %c0_10] : memref<4x32x8xf32, #tpu.memory_space<vmem>>, vector<4x32x8xf32>
    "tpu.trace_start"() <{level = 10 : i32, message = "hqe,hed->hqd"}> : () -> ()
    %cst = arith.constant dense<0.000000e+00> : vector<4x8x8xf32>
    %13 = tpu.matmul %8, %12, %cst {dimension_numbers = #tpu.dot_dimension_numbers<[2], [1], [1], [2], [0, 0, 0, 1, 1, 2], [0], [0]>} : vector<4x8x32xf32>, vector<4x32x8xf32>, vector<4x8x8xf32> -> vector<4x8x8xf32>
    "tpu.trace_stop"() : () -> ()
    %c0_11 = arith.constant 0 : index
    %c0_12 = arith.constant 0 : index
    %c0_13 = arith.constant 0 : index
    %14 = vector.load %arg6[%c0_11, %c0_12, %c0_13] : memref<4x1x8xf32, #tpu.memory_space<vmem>>, vector<4x1x8xf32>
    %15 = vector.broadcast %14 : vector<4x1x8xf32> to vector<4x8x8xf32>
    %16 = arith.addf %13, %15 : vector<4x8x8xf32>
    %c0_14 = arith.constant 0 : index
    %c0_15 = arith.constant 0 : index
    %c0_16 = arith.constant 0 : index
    %17 = vector.load %arg7[%c0_14, %c0_15, %c0_16] : memref<4x32x8xf32, #tpu.memory_space<vmem>>, vector<4x32x8xf32>
    "tpu.trace_start"() <{level = 10 : i32, message = "hke,hed->hkd"}> : () -> ()
    %cst_17 = arith.constant dense<0.000000e+00> : vector<4x8x8xf32>
    %18 = tpu.matmul %11, %17, %cst_17 {dimension_numbers = #tpu.dot_dimension_numbers<[2], [1], [1], [2], [0, 0, 0, 1, 1, 2], [0], [0]>} : vector<4x8x32xf32>, vector<4x32x8xf32>, vector<4x8x8xf32> -> vector<4x8x8xf32>
    "tpu.trace_stop"() : () -> ()
    %c0_18 = arith.constant 0 : index
    %c0_19 = arith.constant 0 : index
    %c0_20 = arith.constant 0 : index
    %19 = vector.load %arg8[%c0_18, %c0_19, %c0_20] : memref<4x1x8xf32, #tpu.memory_space<vmem>>, vector<4x1x8xf32>
    %20 = vector.broadcast %19 : vector<4x1x8xf32> to vector<4x8x8xf32>
    %21 = arith.addf %18, %20 : vector<4x8x8xf32>
    %c0_21 = arith.constant 0 : index
    %c0_22 = arith.constant 0 : index
    %c0_23 = arith.constant 0 : index
    %22 = vector.load %arg9[%c0_21, %c0_22, %c0_23] : memref<4x32x8xf32, #tpu.memory_space<vmem>>, vector<4x32x8xf32>
    "tpu.trace_start"() <{level = 10 : i32, message = "hke,hed->hkd"}> : () -> ()
    %cst_24 = arith.constant dense<0.000000e+00> : vector<4x8x8xf32>
    %23 = tpu.matmul %11, %22, %cst_24 {dimension_numbers = #tpu.dot_dimension_numbers<[2], [1], [1], [2], [0, 0, 0, 1, 1, 2], [0], [0]>} : vector<4x8x32xf32>, vector<4x32x8xf32>, vector<4x8x8xf32> -> vector<4x8x8xf32>
    "tpu.trace_stop"() : () -> ()
    %c0_25 = arith.constant 0 : index
    %c0_26 = arith.constant 0 : index
    %c0_27 = arith.constant 0 : index
    %24 = vector.load %arg10[%c0_25, %c0_26, %c0_27] : memref<4x1x8xf32, #tpu.memory_space<vmem>>, vector<4x1x8xf32>
    %25 = vector.broadcast %24 : vector<4x1x8xf32> to vector<4x8x8xf32>
    %26 = arith.addf %23, %25 : vector<4x8x8xf32>
    "tpu.trace_start"() <{level = 10 : i32, message = "hqd,hkd->hqk"}> : () -> ()
    %cst_28 = arith.constant dense<0.000000e+00> : vector<4x8x8xf32>
    %27 = tpu.matmul %16, %21, %cst_28 {dimension_numbers = #tpu.dot_dimension_numbers<[2], [2], [1], [1], [0, 0, 0, 1, 1, 1], [0], [0]>} : vector<4x8x8xf32>, vector<4x8x8xf32>, vector<4x8x8xf32> -> vector<4x8x8xf32>
    %c0_i32 = arith.constant 0 : i32
    "tpu.trace_stop"() : () -> ()
    %28 = vector.broadcast %c0_i32 : i32 to vector<1x8xi32>
    %29 = arith.cmpi eq, %5, %28 : vector<1x8xi32>
    %cst_29 = arith.constant -1.000000e+10 : f32
    %30 = vector.shape_cast %29 : vector<1x8xi1> to vector<1x1x8xi1>
    %31 = vector.broadcast %30 : vector<1x1x8xi1> to vector<4x8x8xi1>
    %32 = vector.broadcast %cst_29 : f32 to vector<4x8x8xf32>
    %33 = arith.select %31, %32, %27 : vector<4x8x8xi1>, vector<4x8x8xf32>
    %cst_30 = arith.constant 0.353553385 : f32
    %34 = vector.broadcast %cst_30 : f32 to vector<4x8x8xf32>
    %35 = arith.mulf %33, %34 : vector<4x8x8xf32>
    %cst_31 = arith.constant dense<0xFF800000> : vector<4x8xf32>
    %36 = vector.multi_reduction <maximumf>, %35, %cst_31 [2] : vector<4x8x8xf32> to vector<4x8xf32>
    %37 = vector.shape_cast %36 : vector<4x8xf32> to vector<4x8x1xf32>
    %38 = vector.broadcast %37 : vector<4x8x1xf32> to vector<4x8x8xf32>
    %39 = arith.subf %35, %38 : vector<4x8x8xf32>
    %40 = math.exp %39 : vector<4x8x8xf32>
    %cst_32 = arith.constant dense<0.000000e+00> : vector<4x8xf32>
    %41 = vector.multi_reduction <add>, %40, %cst_32 [2] : vector<4x8x8xf32> to vector<4x8xf32>
    %42 = vector.shape_cast %41 : vector<4x8xf32> to vector<4x8x1xf32>
    %43 = vector.broadcast %42 : vector<4x8x1xf32> to vector<4x8x8xf32>
    %44 = arith.divf %40, %43 : vector<4x8x8xf32>
    "tpu.trace_start"() <{level = 10 : i32, message = "hqk,hkd->hqd"}> : () -> ()
    %cst_33 = arith.constant dense<0.000000e+00> : vector<4x8x8xf32>
    %45 = tpu.matmul %44, %26, %cst_33 {dimension_numbers = #tpu.dot_dimension_numbers<[2], [1], [1], [2], [0, 0, 0, 1, 1, 2], [0], [0]>} : vector<4x8x8xf32>, vector<4x8x8xf32>, vector<4x8x8xf32> -> vector<4x8x8xf32>
    "tpu.trace_stop"() : () -> ()
    %c0_34 = arith.constant 0 : index
    %c0_35 = arith.constant 0 : index
    %c0_36 = arith.constant 0 : index
    %46 = vector.load %arg11[%c0_34, %c0_35, %c0_36] : memref<4x8x32xf32, #tpu.memory_space<vmem>>, vector<4x8x32xf32>
    "tpu.trace_start"() <{level = 10 : i32, message = "hqd,hde->hqe"}> : () -> ()
    %cst_37 = arith.constant dense<0.000000e+00> : vector<4x8x32xf32>
    %47 = tpu.matmul %45, %46, %cst_37 {dimension_numbers = #tpu.dot_dimension_numbers<[2], [1], [1], [2], [0, 0, 0, 1, 1, 2], [0], [0]>} : vector<4x8x8xf32>, vector<4x8x32xf32>, vector<4x8x32xf32> -> vector<4x8x32xf32>
    "tpu.trace_stop"() : () -> ()
    %cst_38 = arith.constant dense<0.000000e+00> : vector<8x32xf32>
    %48 = vector.multi_reduction <add>, %47, %cst_38 [0] : vector<4x8x32xf32> to vector<8x32xf32>
    %c0_39 = arith.constant 0 : index
    %c0_40 = arith.constant 0 : index
    %49 = vector.load %arg12[%c0_39, %c0_40] : memref<1x32xf32, #tpu.memory_space<vmem>>, vector<1x32xf32>
    %50 = vector.broadcast %49 : vector<1x32xf32> to vector<8x32xf32>
    %51 = arith.addf %48, %50 : vector<8x32xf32>
    %52 = arith.addf %51, %1 : vector<8x32xf32>
    %cst_41 = arith.constant dense<0.000000e+00> : vector<8xf32>
    %53 = vector.multi_reduction <add>, %52, %cst_41 [1] : vector<8x32xf32> to vector<8xf32>
    %54 = vector.shape_cast %53 : vector<8xf32> to vector<8x1xf32>
    %cst_42 = arith.constant 3.200000e+01 : f32
    %55 = vector.broadcast %cst_42 : f32 to vector<8x1xf32>
    %56 = arith.divf %54, %55 : vector<8x1xf32>
    %57 = vector.broadcast %56 : vector<8x1xf32> to vector<8x32xf32>
    %58 = arith.subf %52, %57 : vector<8x32xf32>
    %59 = arith.mulf %58, %58 : vector<8x32xf32>
    %cst_43 = arith.constant dense<0.000000e+00> : vector<8xf32>
    %60 = vector.multi_reduction <add>, %59, %cst_43 [1] : vector<8x32xf32> to vector<8xf32>
    %61 = vector.shape_cast %60 : vector<8xf32> to vector<8x1xf32>
    %cst_44 = arith.constant 3.200000e+01 : f32
    %62 = vector.broadcast %cst_44 : f32 to vector<8x1xf32>
    %63 = arith.divf %61, %62 : vector<8x1xf32>
    %64 = vector.broadcast %56 : vector<8x1xf32> to vector<8x32xf32>
    %65 = arith.subf %52, %64 : vector<8x32xf32>
    %cst_45 = arith.constant 9.99999974E-6 : f32
    %66 = vector.broadcast %cst_45 : f32 to vector<8x1xf32>
    %67 = arith.addf %63, %66 : vector<8x1xf32>
    %68 = math.rsqrt %67 : vector<8x1xf32>
    %69 = vector.broadcast %68 : vector<8x1xf32> to vector<8x32xf32>
    %70 = arith.mulf %65, %69 : vector<8x32xf32>
    %c0_46 = arith.constant 0 : index
    %c0_47 = arith.constant 0 : index
    %71 = vector.load %arg13[%c0_46, %c0_47] : memref<1x32xf32, #tpu.memory_space<vmem>>, vector<1x32xf32>
    %72 = vector.broadcast %71 : vector<1x32xf32> to vector<8x32xf32>
    %73 = arith.mulf %70, %72 : vector<8x32xf32>
    %c0_48 = arith.constant 0 : index
    %c0_49 = arith.constant 0 : index
    %74 = vector.load %arg14[%c0_48, %c0_49] : memref<1x32xf32, #tpu.memory_space<vmem>>, vector<1x32xf32>
    %75 = vector.broadcast %74 : vector<1x32xf32> to vector<8x32xf32>
    %76 = arith.addf %73, %75 : vector<8x32xf32>
    %c0_50 = arith.constant 0 : index
    %c0_51 = arith.constant 0 : index
    %77 = vector.load %arg15[%c0_50, %c0_51] : memref<32x64xf32, #tpu.memory_space<vmem>>, vector<32x64xf32>
    %cst_52 = arith.constant dense<0.000000e+00> : vector<8x64xf32>
    %78 = tpu.matmul %76, %77, %cst_52 {dimension_numbers = #tpu.dot_dimension_numbers<[1], [0], [0], [1], [0, 0, 1, 1], [], []>} : vector<8x32xf32>, vector<32x64xf32>, vector<8x64xf32> -> vector<8x64xf32>
    %c0_53 = arith.constant 0 : index
    %c0_54 = arith.constant 0 : index
    %79 = vector.load %arg16[%c0_53, %c0_54] : memref<1x64xf32, #tpu.memory_space<vmem>>, vector<1x64xf32>
    %80 = vector.broadcast %79 : vector<1x64xf32> to vector<8x64xf32>
    %81 = arith.addf %78, %80 : vector<8x64xf32>
    %cst_55 = arith.constant 0.000000e+00 : f32
    %82 = vector.broadcast %cst_55 : f32 to vector<8x64xf32>
    %83 = arith.maximumf %81, %82 : vector<8x64xf32>
    %c0_56 = arith.constant 0 : index
    %c0_57 = arith.constant 0 : index
    %84 = vector.load %arg17[%c0_56, %c0_57] : memref<64x32xf32, #tpu.memory_space<vmem>>, vector<64x32xf32>
    %cst_58 = arith.constant dense<0.000000e+00> : vector<8x32xf32>
    %85 = tpu.matmul %83, %84, %cst_58 {dimension_numbers = #tpu.dot_dimension_numbers<[1], [0], [0], [1], [0, 0, 1, 1], [], []>} : vector<8x64xf32>, vector<64x32xf32>, vector<8x32xf32> -> vector<8x32xf32>
    %c0_59 = arith.constant 0 : index
    %c0_60 = arith.constant 0 : index
    %86 = vector.load %arg18[%c0_59, %c0_60] : memref<1x32xf32, #tpu.memory_space<vmem>>, vector<1x32xf32>
    %87 = vector.broadcast %86 : vector<1x32xf32> to vector<8x32xf32>
    %88 = arith.addf %85, %87 : vector<8x32xf32>
    %89 = arith.addf %88, %76 : vector<8x32xf32>
    %cst_61 = arith.constant dense<0.000000e+00> : vector<8xf32>
    %90 = vector.multi_reduction <add>, %89, %cst_61 [1] : vector<8x32xf32> to vector<8xf32>
    %91 = vector.shape_cast %90 : vector<8xf32> to vector<8x1xf32>
    %cst_62 = arith.constant 3.200000e+01 : f32
    %92 = vector.broadcast %cst_62 : f32 to vector<8x1xf32>
    %93 = arith.divf %91, %92 : vector<8x1xf32>
    %94 = vector.broadcast %93 : vector<8x1xf32> to vector<8x32xf32>
    %95 = arith.subf %89, %94 : vector<8x32xf32>
    %96 = arith.mulf %95, %95 : vector<8x32xf32>
    %cst_63 = arith.constant dense<0.000000e+00> : vector<8xf32>
    %97 = vector.multi_reduction <add>, %96, %cst_63 [1] : vector<8x32xf32> to vector<8xf32>
    %98 = vector.shape_cast %97 : vector<8xf32> to vector<8x1xf32>
    %cst_64 = arith.constant 3.200000e+01 : f32
    %99 = vector.broadcast %cst_64 : f32 to vector<8x1xf32>
    %100 = arith.divf %98, %99 : vector<8x1xf32>
    %101 = vector.broadcast %93 : vector<8x1xf32> to vector<8x32xf32>
    %102 = arith.subf %89, %101 : vector<8x32xf32>
    %cst_65 = arith.constant 9.99999974E-6 : f32
    %103 = vector.broadcast %cst_65 : f32 to vector<8x1xf32>
    %104 = arith.addf %100, %103 : vector<8x1xf32>
    %105 = math.rsqrt %104 : vector<8x1xf32>
    %106 = vector.broadcast %105 : vector<8x1xf32> to vector<8x32xf32>
    %107 = arith.mulf %102, %106 : vector<8x32xf32>
    %c0_66 = arith.constant 0 : index
    %c0_67 = arith.constant 0 : index
    %108 = vector.load %arg19[%c0_66, %c0_67] : memref<1x32xf32, #tpu.memory_space<vmem>>, vector<1x32xf32>
    %109 = vector.broadcast %108 : vector<1x32xf32> to vector<8x32xf32>
    %110 = arith.mulf %107, %109 : vector<8x32xf32>
    %c0_68 = arith.constant 0 : index
    %c0_69 = arith.constant 0 : index
    %111 = vector.load %arg20[%c0_68, %c0_69] : memref<1x32xf32, #tpu.memory_space<vmem>>, vector<1x32xf32>
    %112 = vector.broadcast %111 : vector<1x32xf32> to vector<8x32xf32>
    %113 = arith.addf %110, %112 : vector<8x32xf32>
    %c0_70 = arith.constant 0 : index
    %c0_71 = arith.constant 0 : index
    %c0_72 = arith.constant 0 : index
    %114 = vector.load %arg21[%c0_70, %c0_71, %c0_72] : memref<1x8x32xf32, #tpu.memory_space<vmem>>, vector<1x8x32xf32>
    %115 = vector.shape_cast %114 : vector<1x8x32xf32> to vector<8x32xf32>
    %116 = vector.shape_cast %113 : vector<8x32xf32> to vector<1x8x32xf32>
    tpu.vector_store %arg21[%c0_70, %c0_71, %c0_72], %116 {strides = array<i32>} : memref<1x8x32xf32, #tpu.memory_space<vmem>>, vector<1x8x32xf32>,
    return
  }
  func.func @transform_0(%arg0: i32, %arg1: i32) -> (i32, i32, i32) {
    %c0_i32 = arith.constant 0 : i32
    %c0_i32_0 = arith.constant 0 : i32
    %c0_i32_1 = arith.constant 0 : i32
    return %arg0, %c0_i32, %c0_i32_0 : i32, i32, i32
  }
  func.func @transform_1(%arg0: i32, %arg1: i32) -> (i32, i32, i32) {
    %c0_i32 = arith.constant 0 : i32
    %c0_i32_0 = arith.constant 0 : i32
    return %arg0, %arg1, %c0_i32 : i32, i32, i32
  }
  func.func @transform_2(%arg0: i32, %arg1: i32) -> (i32, i32, i32) {
    %c0_i32 = arith.constant 0 : i32
    %c0_i32_0 = arith.constant 0 : i32
    %c0_i32_1 = arith.constant 0 : i32
    return %arg0, %c0_i32, %c0_i32_0 : i32, i32, i32
  }
  func.func @transform_3(%arg0: i32, %arg1: i32) -> (i32, i32, i32) {
    %c0_i32 = arith.constant 0 : i32
    %c0_i32_0 = arith.constant 0 : i32
    %c0_i32_1 = arith.constant 0 : i32
    %c0_i32_2 = arith.constant 0 : i32
    return %c0_i32, %c0_i32_0, %c0_i32_1 : i32, i32, i32
  }
  func.func @transform_4(%arg0: i32, %arg1: i32) -> (i32, i32, i32) {
    %c0_i32 = arith.constant 0 : i32
    %c0_i32_0 = arith.constant 0 : i32
    %c0_i32_1 = arith.constant 0 : i32
    %c0_i32_2 = arith.constant 0 : i32
    return %c0_i32, %c0_i32_0, %c0_i32_1 : i32, i32, i32
  }
  func.func @transform_5(%arg0: i32, %arg1: i32) -> (i32, i32, i32) {
    %c0_i32 = arith.constant 0 : i32
    %c0_i32_0 = arith.constant 0 : i32
    %c0_i32_1 = arith.constant 0 : i32
    %c0_i32_2 = arith.constant 0 : i32
    return %c0_i32, %c0_i32_0, %c0_i32_1 : i32, i32, i32
  }
  func.func @transform_6(%arg0: i32, %arg1: i32) -> (i32, i32, i32) {
    %c0_i32 = arith.constant 0 : i32
    %c0_i32_0 = arith.constant 0 : i32
    %c0_i32_1 = arith.constant 0 : i32
    %c0_i32_2 = arith.constant 0 : i32
    return %c0_i32, %c0_i32_0, %c0_i32_1 : i32, i32, i32
  }
  func.func @transform_7(%arg0: i32, %arg1: i32) -> (i32, i32, i32) {
    %c0_i32 = arith.constant 0 : i32
    %c0_i32_0 = arith.constant 0 : i32
    %c0_i32_1 = arith.constant 0 : i32
    %c0_i32_2 = arith.constant 0 : i32
    return %c0_i32, %c0_i32_0, %c0_i32_1 : i32, i32, i32
  }
  func.func @transform_8(%arg0: i32, %arg1: i32) -> (i32, i32, i32) {
    %c0_i32 = arith.constant 0 : i32
    %c0_i32_0 = arith.constant 0 : i32
    %c0_i32_1 = arith.constant 0 : i32
    %c0_i32_2 = arith.constant 0 : i32
    return %c0_i32, %c0_i32_0, %c0_i32_1 : i32, i32, i32
  }
  func.func @transform_9(%arg0: i32, %arg1: i32) -> (i32, i32, i32) {
    %c0_i32 = arith.constant 0 : i32
    %c0_i32_0 = arith.constant 0 : i32
    %c0_i32_1 = arith.constant 0 : i32
    %c0_i32_2 = arith.constant 0 : i32
    return %c0_i32, %c0_i32_0, %c0_i32_1 : i32, i32, i32
  }
  func.func @transform_10(%arg0: i32, %arg1: i32) -> (i32, i32) {
    %c0_i32 = arith.constant 0 : i32
    %c0_i32_0 = arith.constant 0 : i32
    %c0_i32_1 = arith.constant 0 : i32
    return %c0_i32, %c0_i32_0 : i32, i32
  }
  func.func @transform_11(%arg0: i32, %arg1: i32) -> (i32, i32) {
    %c0_i32 = arith.constant 0 : i32
    %c0_i32_0 = arith.constant 0 : i32
    %c0_i32_1 = arith.constant 0 : i32
    return %c0_i32, %c0_i32_0 : i32, i32
  }
  func.func @transform_12(%arg0: i32, %arg1: i32) -> (i32, i32) {
    %c0_i32 = arith.constant 0 : i32
    %c0_i32_0 = arith.constant 0 : i32
    %c0_i32_1 = arith.constant 0 : i32
    return %c0_i32, %c0_i32_0 : i32, i32
  }
  func.func @transform_13(%arg0: i32, %arg1: i32) -> (i32, i32) {
    %c0_i32 = arith.constant 0 : i32
    %c0_i32_0 = arith.constant 0 : i32
    %c0_i32_1 = arith.constant 0 : i32
    return %c0_i32, %c0_i32_0 : i32, i32
  }
  func.func @transform_14(%arg0: i32, %arg1: i32) -> (i32, i32) {
    %c0_i32 = arith.constant 0 : i32
    %c0_i32_0 = arith.constant 0 : i32
    %c0_i32_1 = arith.constant 0 : i32
    return %c0_i32, %c0_i32_0 : i32, i32
  }
  func.func @transform_15(%arg0: i32, %arg1: i32) -> (i32, i32) {
    %c0_i32 = arith.constant 0 : i32
    %c0_i32_0 = arith.constant 0 : i32
    %c0_i32_1 = arith.constant 0 : i32
    return %c0_i32, %c0_i32_0 : i32, i32
  }
  func.func @transform_16(%arg0: i32, %arg1: i32) -> (i32, i32) {
    %c0_i32 = arith.constant 0 : i32
    %c0_i32_0 = arith.constant 0 : i32
    %c0_i32_1 = arith.constant 0 : i32
    return %c0_i32, %c0_i32_0 : i32, i32
  }
  func.func @transform_17(%arg0: i32, %arg1: i32) -> (i32, i32) {
    %c0_i32 = arith.constant 0 : i32
    %c0_i32_0 = arith.constant 0 : i32
    %c0_i32_1 = arith.constant 0 : i32
    return %c0_i32, %c0_i32_0 : i32, i32
  }
  func.func @transform_18(%arg0: i32, %arg1: i32) -> (i32, i32) {
    %c0_i32 = arith.constant 0 : i32
    %c0_i32_0 = arith.constant 0 : i32
    %c0_i32_1 = arith.constant 0 : i32
    return %c0_i32, %c0_i32_0 : i32, i32
  }
  func.func @transform_19(%arg0: i32, %arg1: i32) -> (i32, i32, i32) {
    %c0_i32 = arith.constant 0 : i32
    %c0_i32_0 = arith.constant 0 : i32
    return %arg0, %arg1, %c0_i32 : i32, i32, i32
  }
}

</mosaic_0001>

<llo_original>
// kernel: tpu_custom_call.1
$region0: #{tpu_custom_call.1}
  #allocation0 [shape = 'u32[]', space=smem, size = 0x4, offset = 0x4, fixed_abs, tag = 'smem constant byte address 0x4 - core index']
  #allocation1 [shape = 'u32[144,128]{1,0:T(1,128)}', space=vmem, size = 0x12000, scoped, tag = 'internal scratch']
  %s0 = inlined_call_operand.vmem [shape: s32[2,1,8], index: 0, kind: input, shape index: {}]
  %s1 = inlined_call_operand.vmem [shape: f32[2,8,32], index: 1, kind: input, shape index: {}]
  %s2 = inlined_call_operand.vmem [shape: f32[2,8,32], index: 2, kind: input, shape index: {}]
  %s3 = inlined_call_operand.vmem [shape: f32[4,32,8], index: 3, kind: input, shape index: {}]
  %s4 = inlined_call_operand.vmem [shape: f32[4,1,8], index: 4, kind: input, shape index: {}]
  %s5 = inlined_call_operand.vmem [shape: f32[4,32,8], index: 5, kind: input, shape index: {}]
  %s6 = inlined_call_operand.vmem [shape: f32[4,1,8], index: 6, kind: input, shape index: {}]
  %s7 = inlined_call_operand.vmem [shape: f32[4,32,8], index: 7, kind: input, shape index: {}]
  %s8 = inlined_call_operand.vmem [shape: f32[4,1,8], index: 8, kind: input, shape index: {}]
  %s9 = inlined_call_operand.vmem [shape: f32[4,8,32], index: 9, kind: input, shape index: {}]
  %s10 = inlined_call_operand.vmem [shape: f32[1,32], index: 10, kind: input, shape index: {}]
  %s11 = inlined_call_operand.vmem [shape: f32[1,32], index: 11, kind: input, shape index: {}]
  %s12 = inlined_call_operand.vmem [shape: f32[1,32], index: 12, kind: input, shape index: {}]
  %s13 = inlined_call_operand.vmem [shape: f32[32,64], index: 13, kind: input, shape index: {}]
  %s14 = inlined_call_operand.vmem [shape: f32[1,64], index: 14, kind: input, shape index: {}]
  %s15 = inlined_call_operand.vmem [shape: f32[64,32], index: 15, kind: input, shape index: {}]
  %s16 = inlined_call_operand.vmem [shape: f32[1,32], index: 16, kind: input, shape index: {}]
  %s17 = inlined_call_operand.vmem [shape: f32[1,32], index: 17, kind: input, shape index: {}]
  %s18 = inlined_call_operand.vmem [shape: f32[1,32], index: 18, kind: input, shape index: {}]
  %s19 = inlined_call_operand.hbm [shape: f32[2,8,32], index: 19, kind: output, shape index: {}]
  %s20 = sld [smem:[#allocation0]]
  $region109: #{tpu_custom_call.1} parent=0
    _
  %s22 = ssub.s32 1, %s20
  %s23 = scalar_select 0, %s22, %s20
  $region1: #{tpu_custom_call.1} parent=0
    #allocation2 [shape = 'u8[8192]{0}', space=vmem, size = 0x2000, scoped, tag = 'output window, operand 0']
    #allocation3 [shape = 's32[2]{0}', space=sflag, size = 0x8, scoped, tag = 'scoped memory for tpu_custom_call.1']
    %24 = vsyncpa [#allocation3], 0
    %s25 = scalar_lea.sflag [#allocation3], 1
    %26 = vsyncpa %s25, 0
    loop: start=0, step=1, limit=4
    $region2: #{tpu_custom_call.1} parent=1 // loop_pre_header
      _
    $region3: #{tpu_custom_call.1} parent=1 // loop_header
      %s28 = sphi 0, %s32
      %p29 = scmp.ge.s32.totalorder %s28, 4
      %s35 = sphi 0, %s47
      %s36 = sphi 0, %s43
      %s37 = sphi 0, %s35
      %s38 = sphi 0, %s36
      %s39 = sphi 0, %s37
      %s40 = sphi 0, %s38
      %s50 = sphi 0, %s52
      %s53 = sphi 0, %s50
      %s54 = sphi 0, %s53
      %s70 = sphi 0, %s54
      %s78 = sphi 0, %s80
      %s81 = sphi 0, %s78
      %s82 = sphi 0, %s81
      %s98 = sphi 0, %s82
      %s104 = sphi 0, %s106
      %s107 = sphi 0, %s104
      %s108 = sphi 0, %s107
      %s124 = sphi 0, %s108
      %s128 = sphi 0, %s128
      %s130 = sphi 0, %s128
      %s131 = sphi 0, %s130
      %s145 = sphi 0, %s131
      %s149 = sphi 0, %s149
      %s151 = sphi 0, %s149
      %s152 = sphi 0, %s151
      %s166 = sphi 0, %s152
      %s170 = sphi 0, %s170
      %s172 = sphi 0, %s170
      %s173 = sphi 0, %s172
      %s187 = sphi 0, %s173
      %s191 = sphi 0, %s191
      %s193 = sphi 0, %s191
      %s194 = sphi 0, %s193
      %s208 = sphi 0, %s194
      %s212 = sphi 0, %s212
      %s214 = sphi 0, %s212
      %s215 = sphi 0, %s214
      %s229 = sphi 0, %s215
      %s233 = sphi 0, %s233
      %s235 = sphi 0, %s233
      %s236 = sphi 0, %s235
      %s250 = sphi 0, %s236
      %s254 = sphi 0, %s254
      %s256 = sphi 0, %s254
      %s257 = sphi 0, %s256
      %s271 = sphi 0, %s257
      %s275 = sphi 0, %s275
      %s277 = sphi 0, %s275
      %s278 = sphi 0, %s277
      %s292 = sphi 0, %s278
      %s296 = sphi 0, %s296
      %s298 = sphi 0, %s296
      %s299 = sphi 0, %s298
      %s313 = sphi 0, %s299
      %s317 = sphi 0, %s317
      %s319 = sphi 0, %s317
      %s320 = sphi 0, %s319
      %s334 = sphi 0, %s320
      %s338 = sphi 0, %s338
      %s340 = sphi 0, %s338
      %s341 = sphi 0, %s340
      %s355 = sphi 0, %s341
      %s359 = sphi 0, %s359
      %s361 = sphi 0, %s359
      %s362 = sphi 0, %s361
      %s376 = sphi 0, %s362
      %s380 = sphi 0, %s380
      %s382 = sphi 0, %s380
      %s383 = sphi 0, %s382
      %s397 = sphi 0, %s383
      %s401 = sphi 0, %s401
      %s403 = sphi 0, %s401
      %s404 = sphi 0, %s403
      %s418 = sphi 0, %s404
      %s422 = sphi 0, %s422
      %s424 = sphi 0, %s422
      %s425 = sphi 0, %s424
      %s439 = sphi 0, %s425
      %s443 = sphi 0, %s443
      %s445 = sphi 0, %s443
      %s446 = sphi 0, %s445
      %s460 = sphi 0, %s446
      %s468 = sphi 0, %s470
      %s471 = sphi 0, %s468
      %s472 = sphi 0, %s471
      %s488 = sphi 0, %s472
    $region4: #{tpu_custom_call.1} parent=1 // loop_header_branch
      %31 = sbr.rel (%p29) target = $region8
    $region5: #{tpu_custom_call.1} parent=1 // loop_body
      %s33 = ssub.s32 %s28, 1
      %s34 = ssub.s32 %s28, 2
      %s41 = sadd.s32 1, %s36
      %p42 = scmp.ge.s32.totalorder %s41, 1
      %s43 = scalar_select %p42, 0, %s41
      %s44 = sadd.s32 1, %s35
      %s45 = scalar_select %p42, %s44, %s35
      %p46 = scmp.ge.s32.totalorder %s45, 2
      %s47 = scalar_select %p46, 0, %s45
      %s48 = ssub.s32 %s35, %s47
      %p49 = scmp.eq.s32.totalorder %s48, 0
      %s51 = sadd.s32 %s50, 1
      %s52 = scalar_select %p49, %s50, %s51
      %p55 = pneg %p49
      %p56 = scmp.eq.s32.totalorder %s28, 1
      %p57 = por %p55, %p56
      %p58 = scmp.ne.s32.totalorder %s50, %s53
      %p59 = scmp.eq.s32.totalorder %s28, 0
      %p60 = por %p58, %p59
      %p61 = scmp.ne.s32.totalorder %s50, %s53
      %p62 = scmp.eq.s32.totalorder %s33, 1
      %p63 = por %p61, %p62
      %p64 = scmp.ne.s32.totalorder %s53, %s54
      %p65 = scmp.eq.s32.totalorder %s33, 0
      %p66 = por %p64, %p65
      %p67 = scmp.ne.s32.totalorder %s53, %s54
      %p68 = scmp.eq.s32.totalorder %s34, 1
      %p69 = por %p67, %p68
      %p71 = scmp.ne.s32.totalorder %s54, %s70
      %p72 = scmp.eq.s32.totalorder %s34, 0
      %p73 = por %p71, %p72
      %s74 = ssub.s32 %s35, %s47
      %s75 = ssub.s32 %s36, %s43
      %s76 = sor.u32 %s74, %s75
      %p77 = scmp.eq.s32.totalorder %s76, 0
      %s79 = sadd.s32 %s78, 1
      %s80 = scalar_select %p77, %s78, %s79
      %p83 = pneg %p77
      %p84 = scmp.eq.s32.totalorder %s28, 1
      %p85 = por %p83, %p84
      %p86 = scmp.ne.s32.totalorder %s78, %s81
      %p87 = scmp.eq.s32.totalorder %s28, 0
      %p88 = por %p86, %p87
      %p89 = scmp.ne.s32.totalorder %s78, %s81
      %p90 = scmp.eq.s32.totalorder %s33, 1
      %p91 = por %p89, %p90
      %p92 = scmp.ne.s32.totalorder %s81, %s82
      %p93 = scmp.eq.s32.totalorder %s33, 0
      %p94 = por %p92, %p93
      %p95 = scmp.ne.s32.totalorder %s81, %s82
      %p96 = scmp.eq.s32.totalorder %s34, 1
      %p97 = por %p95, %p96
      %p99 = scmp.ne.s32.totalorder %s82, %s98
      %p100 = scmp.eq.s32.totalorder %s34, 0
      %p101 = por %p99, %p100
      %s102 = ssub.s32 %s35, %s47
      %p103 = scmp.eq.s32.totalorder %s102, 0
      %s105 = sadd.s32 %s104, 1
      %s106 = scalar_select %p103, %s104, %s105
      %p109 = pneg %p103
      %p110 = scmp.eq.s32.totalorder %s28, 1
      %p111 = por %p109, %p110
      %p112 = scmp.ne.s32.totalorder %s104, %s107
      %p113 = scmp.eq.s32.totalorder %s28, 0
      %p114 = por %p112, %p113
      %p115 = scmp.ne.s32.totalorder %s104, %s107
      %p116 = scmp.eq.s32.totalorder %s33, 1
      %p117 = por %p115, %p116
      %p118 = scmp.ne.s32.totalorder %s107, %s108
      %p119 = scmp.eq.s32.totalorder %s33, 0
      %p120 = por %p118, %p119
      %p121 = scmp.ne.s32.totalorder %s107, %s108
      %p122 = scmp.eq.s32.totalorder %s34, 1
      %p123 = por %p121, %p122
      %p125 = scmp.ne.s32.totalorder %s108, %s124
      %p126 = scmp.eq.s32.totalorder %s34, 0
      %p127 = por %p125, %p126
      %s129 = sadd.s32 %s128, 1
      %p132 = scmp.eq.s32.totalorder %s28, 1
      %p133 = scmp.ne.s32.totalorder %s128, %s130
      %p134 = scmp.eq.s32.totalorder %s28, 0
      %p135 = por %p133, %p134
      %p136 = scmp.ne.s32.totalorder %s128, %s130
      %p137 = scmp.eq.s32.totalorder %s33, 1
      %p138 = por %p136, %p137
      %p139 = scmp.ne.s32.totalorder %s130, %s131
      %p140 = scmp.eq.s32.totalorder %s33, 0
      %p141 = por %p139, %p140
      %p142 = scmp.ne.s32.totalorder %s130, %s131
      %p143 = scmp.eq.s32.totalorder %s34, 1
      %p144 = por %p142, %p143
      %p146 = scmp.ne.s32.totalorder %s131, %s145
      %p147 = scmp.eq.s32.totalorder %s34, 0
      %p148 = por %p146, %p147
      %s150 = sadd.s32 %s149, 1
      %p153 = scmp.eq.s32.totalorder %s28, 1
      %p154 = scmp.ne.s32.totalorder %s149, %s151
      %p155 = scmp.eq.s32.totalorder %s28, 0
      %p156 = por %p154, %p155
      %p157 = scmp.ne.s32.totalorder %s149, %s151
      %p158 = scmp.eq.s32.totalorder %s33, 1
      %p159 = por %p157, %p158
      %p160 = scmp.ne.s32.totalorder %s151, %s152
      %p161 = scmp.eq.s32.totalorder %s33, 0
      %p162 = por %p160, %p161
      %p163 = scmp.ne.s32.totalorder %s151, %s152
      %p164 = scmp.eq.s32.totalorder %s34, 1
      %p165 = por %p163, %p164
      %p167 = scmp.ne.s32.totalorder %s152, %s166
      %p168 = scmp.eq.s32.totalorder %s34, 0
      %p169 = por %p167, %p168
      %s171 = sadd.s32 %s170, 1
      %p174 = scmp.eq.s32.totalorder %s28, 1
      %p175 = scmp.ne.s32.totalorder %s170, %s172
      %p176 = scmp.eq.s32.totalorder %s28, 0
      %p177 = por %p175, %p176
      %p178 = scmp.ne.s32.totalorder %s170, %s172
      %p179 = scmp.eq.s32.totalorder %s33, 1
      %p180 = por %p178, %p179
      %p181 = scmp.ne.s32.totalorder %s172, %s173
      %p182 = scmp.eq.s32.totalorder %s33, 0
      %p183 = por %p181, %p182
      %p184 = scmp.ne.s32.totalorder %s172, %s173
      %p185 = scmp.eq.s32.totalorder %s34, 1
      %p186 = por %p184, %p185
      %p188 = scmp.ne.s32.totalorder %s173, %s187
      %p189 = scmp.eq.s32.totalorder %s34, 0
      %p190 = por %p188, %p189
      %s192 = sadd.s32 %s191, 1
      %p195 = scmp.eq.s32.totalorder %s28, 1
      %p196 = scmp.ne.s32.totalorder %s191, %s193
      %p197 = scmp.eq.s32.totalorder %s28, 0
      %p198 = por %p196, %p197
      %p199 = scmp.ne.s32.totalorder %s191, %s193
      %p200 = scmp.eq.s32.totalorder %s33, 1
      %p201 = por %p199, %p200
      %p202 = scmp.ne.s32.totalorder %s193, %s194
      %p203 = scmp.eq.s32.totalorder %s33, 0
      %p204 = por %p202, %p203
      %p205 = scmp.ne.s32.totalorder %s193, %s194
      %p206 = scmp.eq.s32.totalorder %s34, 1
      %p207 = por %p205, %p206
      %p209 = scmp.ne.s32.totalorder %s194, %s208
      %p210 = scmp.eq.s32.totalorder %s34, 0
      %p211 = por %p209, %p210
      %s213 = sadd.s32 %s212, 1
      %p216 = scmp.eq.s32.totalorder %s28, 1
      %p217 = scmp.ne.s32.totalorder %s212, %s214
      %p218 = scmp.eq.s32.totalorder %s28, 0
      %p219 = por %p217, %p218
      %p220 = scmp.ne.s32.totalorder %s212, %s214
      %p221 = scmp.eq.s32.totalorder %s33, 1
      %p222 = por %p220, %p221
      %p223 = scmp.ne.s32.totalorder %s214, %s215
      %p224 = scmp.eq.s32.totalorder %s33, 0
      %p225 = por %p223, %p224
      %p226 = scmp.ne.s32.totalorder %s214, %s215
      %p227 = scmp.eq.s32.totalorder %s34, 1
      %p228 = por %p226, %p227
      %p230 = scmp.ne.s32.totalorder %s215, %s229
      %p231 = scmp.eq.s32.totalorder %s34, 0
      %p232 = por %p230, %p231
      %s234 = sadd.s32 %s233, 1
      %p237 = scmp.eq.s32.totalorder %s28, 1
      %p238 = scmp.ne.s32.totalorder %s233, %s235
      %p239 = scmp.eq.s32.totalorder %s28, 0
      %p240 = por %p238, %p239
      %p241 = scmp.ne.s32.totalorder %s233, %s235
      %p242 = scmp.eq.s32.totalorder %s33, 1
      %p243 = por %p241, %p242
      %p244 = scmp.ne.s32.totalorder %s235, %s236
      %p245 = scmp.eq.s32.totalorder %s33, 0
      %p246 = por %p244, %p245
      %p247 = scmp.ne.s32.totalorder %s235, %s236
      %p248 = scmp.eq.s32.totalorder %s34, 1
      %p249 = por %p247, %p248
      %p251 = scmp.ne.s32.totalorder %s236, %s250
      %p252 = scmp.eq.s32.totalorder %s34, 0
      %p253 = por %p251, %p252
      %s255 = sadd.s32 %s254, 1
      %p258 = scmp.eq.s32.totalorder %s28, 1
      %p259 = scmp.ne.s32.totalorder %s254, %s256
      %p260 = scmp.eq.s32.totalorder %s28, 0
      %p261 = por %p259, %p260
      %p262 = scmp.ne.s32.totalorder %s254, %s256
      %p263 = scmp.eq.s32.totalorder %s33, 1
      %p264 = por %p262, %p263
      %p265 = scmp.ne.s32.totalorder %s256, %s257
      %p266 = scmp.eq.s32.totalorder %s33, 0
      %p267 = por %p265, %p266
      %p268 = scmp.ne.s32.totalorder %s256, %s257
      %p269 = scmp.eq.s32.totalorder %s34, 1
      %p270 = por %p268, %p269
      %p272 = scmp.ne.s32.totalorder %s257, %s271
      %p273 = scmp.eq.s32.totalorder %s34, 0
      %p274 = por %p272, %p273
      %s276 = sadd.s32 %s275, 1
      %p279 = scmp.eq.s32.totalorder %s28, 1
      %p280 = scmp.ne.s32.totalorder %s275, %s277
      %p281 = scmp.eq.s32.totalorder %s28, 0
      %p282 = por %p280, %p281
      %p283 = scmp.ne.s32.totalorder %s275, %s277
      %p284 = scmp.eq.s32.totalorder %s33, 1
      %p285 = por %p283, %p284
      %p286 = scmp.ne.s32.totalorder %s277, %s278
      %p287 = scmp.eq.s32.totalorder %s33, 0
      %p288 = por %p286, %p287
      %p289 = scmp.ne.s32.totalorder %s277, %s278
      %p290 = scmp.eq.s32.totalorder %s34, 1
      %p291 = por %p289, %p290
      %p293 = scmp.ne.s32.totalorder %s278, %s292
      %p294 = scmp.eq.s32.totalorder %s34, 0
      %p295 = por %p293, %p294
      %s297 = sadd.s32 %s296, 1
      %p300 = scmp.eq.s32.totalorder %s28, 1
      %p301 = scmp.ne.s32.totalorder %s296, %s298
      %p302 = scmp.eq.s32.totalorder %s28, 0
      %p303 = por %p301, %p302
      %p304 = scmp.ne.s32.totalorder %s296, %s298
      %p305 = scmp.eq.s32.totalorder %s33, 1
      %p306 = por %p304, %p305
      %p307 = scmp.ne.s32.totalorder %s298, %s299
      %p308 = scmp.eq.s32.totalorder %s33, 0
      %p309 = por %p307, %p308
      %p310 = scmp.ne.s32.totalorder %s298, %s299
      %p311 = scmp.eq.s32.totalorder %s34, 1
      %p312 = por %p310, %p311
      %p314 = scmp.ne.s32.totalorder %s299, %s313
      %p315 = scmp.eq.s32.totalorder %s34, 0
      %p316 = por %p314, %p315
      %s318 = sadd.s32 %s317, 1
      %p321 = scmp.eq.s32.totalorder %s28, 1
      %p322 = scmp.ne.s32.totalorder %s317, %s319
      %p323 = scmp.eq.s32.totalorder %s28, 0
      %p324 = por %p322, %p323
      %p325 = scmp.ne.s32.totalorder %s317, %s319
      %p326 = scmp.eq.s32.totalorder %s33, 1
      %p327 = por %p325, %p326
      %p328 = scmp.ne.s32.totalorder %s319, %s320
      %p329 = scmp.eq.s32.totalorder %s33, 0
      %p330 = por %p328, %p329
      %p331 = scmp.ne.s32.totalorder %s319, %s320
      %p332 = scmp.eq.s32.totalorder %s34, 1
      %p333 = por %p331, %p332
      %p335 = scmp.ne.s32.totalorder %s320, %s334
      %p336 = scmp.eq.s32.totalorder %s34, 0
      %p337 = por %p335, %p336
      %s339 = sadd.s32 %s338, 1
      %p342 = scmp.eq.s32.totalorder %s28, 1
      %p343 = scmp.ne.s32.totalorder %s338, %s340
      %p344 = scmp.eq.s32.totalorder %s28, 0
      %p345 = por %p343, %p344
      %p346 = scmp.ne.s32.totalorder %s338, %s340
      %p347 = scmp.eq.s32.totalorder %s33, 1
      %p348 = por %p346, %p347
      %p349 = scmp.ne.s32.totalorder %s340, %s341
      %p350 = scmp.eq.s32.totalorder %s33, 0
      %p351 = por %p349, %p350
      %p352 = scmp.ne.s32.totalorder %s340, %s341
      %p353 = scmp.eq.s32.totalorder %s34, 1
      %p354 = por %p352, %p353
      %p356 = scmp.ne.s32.totalorder %s341, %s355
      %p357 = scmp.eq.s32.totalorder %s34, 0
      %p358 = por %p356, %p357
      %s360 = sadd.s32 %s359, 1
      %p363 = scmp.eq.s32.totalorder %s28, 1
      %p364 = scmp.ne.s32.totalorder %s359, %s361
      %p365 = scmp.eq.s32.totalorder %s28, 0
      %p366 = por %p364, %p365
      %p367 = scmp.ne.s32.totalorder %s359, %s361
      %p368 = scmp.eq.s32.totalorder %s33, 1
      %p369 = por %p367, %p368
      %p370 = scmp.ne.s32.totalorder %s361, %s362
      %p371 = scmp.eq.s32.totalorder %s33, 0
      %p372 = por %p370, %p371
      %p373 = scmp.ne.s32.totalorder %s361, %s362
      %p374 = scmp.eq.s32.totalorder %s34, 1
      %p375 = por %p373, %p374
      %p377 = scmp.ne.s32.totalorder %s362, %s376
      %p378 = scmp.eq.s32.totalorder %s34, 0
      %p379 = por %p377, %p378
      %s381 = sadd.s32 %s380, 1
      %p384 = scmp.eq.s32.totalorder %s28, 1
      %p385 = scmp.ne.s32.totalorder %s380, %s382
      %p386 = scmp.eq.s32.totalorder %s28, 0
      %p387 = por %p385, %p386
      %p388 = scmp.ne.s32.totalorder %s380, %s382
      %p389 = scmp.eq.s32.totalorder %s33, 1
      %p390 = por %p388, %p389
      %p391 = scmp.ne.s32.totalorder %s382, %s383
      %p392 = scmp.eq.s32.totalorder %s33, 0
      %p393 = por %p391, %p392
      %p394 = scmp.ne.s32.totalorder %s382, %s383
      %p395 = scmp.eq.s32.totalorder %s34, 1
      %p396 = por %p394, %p395
      %p398 = scmp.ne.s32.totalorder %s383, %s397
      %p399 = scmp.eq.s32.totalorder %s34, 0
      %p400 = por %p398, %p399
      %s402 = sadd.s32 %s401, 1
      %p405 = scmp.eq.s32.totalorder %s28, 1
      %p406 = scmp.ne.s32.totalorder %s401, %s403
      %p407 = scmp.eq.s32.totalorder %s28, 0
      %p408 = por %p406, %p407
      %p409 = scmp.ne.s32.totalorder %s401, %s403
      %p410 = scmp.eq.s32.totalorder %s33, 1
      %p411 = por %p409, %p410
      %p412 = scmp.ne.s32.totalorder %s403, %s404
      %p413 = scmp.eq.s32.totalorder %s33, 0
      %p414 = por %p412, %p413
      %p415 = scmp.ne.s32.totalorder %s403, %s404
      %p416 = scmp.eq.s32.totalorder %s34, 1
      %p417 = por %p415, %p416
      %p419 = scmp.ne.s32.totalorder %s404, %s418
      %p420 = scmp.eq.s32.totalorder %s34, 0
      %p421 = por %p419, %p420
      %s423 = sadd.s32 %s422, 1
      %p426 = scmp.eq.s32.totalorder %s28, 1
      %p427 = scmp.ne.s32.totalorder %s422, %s424
      %p428 = scmp.eq.s32.totalorder %s28, 0
      %p429 = por %p427, %p428
      %p430 = scmp.ne.s32.totalorder %s422, %s424
      %p431 = scmp.eq.s32.totalorder %s33, 1
      %p432 = por %p430, %p431
      %p433 = scmp.ne.s32.totalorder %s424, %s425
      %p434 = scmp.eq.s32.totalorder %s33, 0
      %p435 = por %p433, %p434
      %p436 = scmp.ne.s32.totalorder %s424, %s425
      %p437 = scmp.eq.s32.totalorder %s34, 1
      %p438 = por %p436, %p437
      %p440 = scmp.ne.s32.totalorder %s425, %s439
      %p441 = scmp.eq.s32.totalorder %s34, 0
      %p442 = por %p440, %p441
      %s444 = sadd.s32 %s443, 1
      %p447 = scmp.eq.s32.totalorder %s28, 1
      %p448 = scmp.ne.s32.totalorder %s443, %s445
      %p449 = scmp.eq.s32.totalorder %s28, 0
      %p450 = por %p448, %p449
      %p451 = scmp.ne.s32.totalorder %s443, %s445
      %p452 = scmp.eq.s32.totalorder %s33, 1
      %p453 = por %p451, %p452
      %p454 = scmp.ne.s32.totalorder %s445, %s446
      %p455 = scmp.eq.s32.totalorder %s33, 0
      %p456 = por %p454, %p455
      %p457 = scmp.ne.s32.totalorder %s445, %s446
      %p458 = scmp.eq.s32.totalorder %s34, 1
      %p459 = por %p457, %p458
      %p461 = scmp.ne.s32.totalorder %s446, %s460
      %p462 = scmp.eq.s32.totalorder %s34, 0
      %p463 = por %p461, %p462
      %s464 = ssub.s32 %s35, %s47
      %s465 = ssub.s32 %s36, %s43
      %s466 = sor.u32 %s464, %s465
      %p467 = scmp.eq.s32.totalorder %s466, 0
      %s469 = sadd.s32 %s468, 1
      %s470 = scalar_select %p467, %s468, %s469
      %p473 = pneg %p467
      %p474 = scmp.eq.s32.totalorder %s28, 1
      %p475 = por %p473, %p474
      %p476 = scmp.ne.s32.totalorder %s468, %s471
      %p477 = scmp.eq.s32.totalorder %s28, 0
      %p478 = por %p476, %p477
      %p479 = scmp.ne.s32.totalorder %s468, %s471
      %p480 = scmp.eq.s32.totalorder %s33, 1
      %p481 = por %p479, %p480
      %p482 = scmp.ne.s32.totalorder %s471, %s472
      %p483 = scmp.eq.s32.totalorder %s33, 0
      %p484 = por %p482, %p483
      %p485 = scmp.ne.s32.totalorder %s471, %s472
      %p486 = scmp.eq.s32.totalorder %s34, 1
      %p487 = por %p485, %p486
      %p489 = scmp.ne.s32.totalorder %s472, %s488
      %p490 = scmp.eq.s32.totalorder %s34, 0
      %p491 = por %p489, %p490
      %p492 = scmp.le.s32.totalorder 1, %s28
      %p493 = scmp.lt.s32.totalorder %s28, 3
      %p494 = pnand %p492, %p493
      %p495 = pneg %p494
      // Predicated region
      $region9: #{tpu_custom_call.1} parent=5 // pred_check
        _
      $region10: #{tpu_custom_call.1} parent=5 // pred_check_branch
        %497 = sbr.rel (%p494) target = $region12
      $region11: #{tpu_custom_call.1} parent=5 // pred_region
        %s498 = ssub.s32 %s28, 1
        // Predicated region
        $region13: #{tpu_custom_call.1} parent=11 // pred_check
          %p499 = pneg %p141
        $region14: #{tpu_custom_call.1} parent=11 // pred_check_branch
          %501 = sbr.rel (%p499) target = $region16
        $region15: #{tpu_custom_call.1} parent=11 // pred_region
          _
        $region16: #{tpu_custom_call.1} parent=11 // pred_fallthru
          _
        // Predicated region
        $region17: #{tpu_custom_call.1} parent=11 // pred_check
          %p502 = pneg %p162
        $region18: #{tpu_custom_call.1} parent=11 // pred_check_branch
          %504 = sbr.rel (%p502) target = $region20
        $region19: #{tpu_custom_call.1} parent=11 // pred_region
          _
        $region20: #{tpu_custom_call.1} parent=11 // pred_fallthru
          _
        // Predicated region
        $region21: #{tpu_custom_call.1} parent=11 // pred_check
          %p505 = pneg %p183
        $region22: #{tpu_custom_call.1} parent=11 // pred_check_branch
          %507 = sbr.rel (%p505) target = $region24
        $region23: #{tpu_custom_call.1} parent=11 // pred_region
          _
        $region24: #{tpu_custom_call.1} parent=11 // pred_fallthru
          _
        // Predicated region
        $region25: #{tpu_custom_call.1} parent=11 // pred_check
          %p508 = pneg %p204
        $region26: #{tpu_custom_call.1} parent=11 // pred_check_branch
          %510 = sbr.rel (%p508) target = $region28
        $region27: #{tpu_custom_call.1} parent=11 // pred_region
          _
        $region28: #{tpu_custom_call.1} parent=11 // pred_fallthru
          _
        // Predicated region
        $region29: #{tpu_custom_call.1} parent=11 // pred_check
          %p511 = pneg %p225
        $region30: #{tpu_custom_call.1} parent=11 // pred_check_branch
          %513 = sbr.rel (%p511) target = $region32
        $region31: #{tpu_custom_call.1} parent=11 // pred_region
          _
        $region32: #{tpu_custom_call.1} parent=11 // pred_fallthru
          _
        // Predicated region
        $region33: #{tpu_custom_call.1} parent=11 // pred_check
          %p514 = pneg %p246
        $region34: #{tpu_custom_call.1} parent=11 // pred_check_branch
          %516 = sbr.rel (%p514) target = $region36
        $region35: #{tpu_custom_call.1} parent=11 // pred_region
          _
        $region36: #{tpu_custom_call.1} parent=11 // pred_fallthru
          _
        // Predicated region
        $region37: #{tpu_custom_call.1} parent=11 // pred_check
          %p517 = pneg %p267
        $region38: #{tpu_custom_call.1} parent=11 // pred_check_branch
          %519 = sbr.rel (%p517) target = $region40
        $region39: #{tpu_custom_call.1} parent=11 // pred_region
          _
        $region40: #{tpu_custom_call.1} parent=11 // pred_fallthru
          _
        // Predicated region
        $region41: #{tpu_custom_call.1} parent=11 // pred_check
          %p520 = pneg %p288
        $region42: #{tpu_custom_call.1} parent=11 // pred_check_branch
          %522 = sbr.rel (%p520) target = $region44
        $region43: #{tpu_custom_call.1} parent=11 // pred_region
          _
        $region44: #{tpu_custom_call.1} parent=11 // pred_fallthru
          _
        // Predicated region
        $region45: #{tpu_custom_call.1} parent=11 // pred_check
          %p523 = pneg %p309
        $region46: #{tpu_custom_call.1} parent=11 // pred_check_branch
          %525 = sbr.rel (%p523) target = $region48
        $region47: #{tpu_custom_call.1} parent=11 // pred_region
          _
        $region48: #{tpu_custom_call.1} parent=11 // pred_fallthru
          _
        // Predicated region
        $region49: #{tpu_custom_call.1} parent=11 // pred_check
          %p526 = pneg %p330
        $region50: #{tpu_custom_call.1} parent=11 // pred_check_branch
          %528 = sbr.rel (%p526) target = $region52
        $region51: #{tpu_custom_call.1} parent=11 // pred_region
          _
        $region52: #{tpu_custom_call.1} parent=11 // pred_fallthru
          _
        // Predicated region
        $region53: #{tpu_custom_call.1} parent=11 // pred_check
          %p529 = pneg %p351
        $region54: #{tpu_custom_call.1} parent=11 // pred_check_branch
          %531 = sbr.rel (%p529) target = $region56
        $region55: #{tpu_custom_call.1} parent=11 // pred_region
          _
        $region56: #{tpu_custom_call.1} parent=11 // pred_fallthru
          _
        // Predicated region
        $region57: #{tpu_custom_call.1} parent=11 // pred_check
          %p532 = pneg %p372
        $region58: #{tpu_custom_call.1} parent=11 // pred_check_branch
          %534 = sbr.rel (%p532) target = $region60
        $region59: #{tpu_custom_call.1} parent=11 // pred_region
          _
        $region60: #{tpu_custom_call.1} parent=11 // pred_fallthru
          _
        // Predicated region
        $region61: #{tpu_custom_call.1} parent=11 // pred_check
          %p535 = pneg %p393
        $region62: #{tpu_custom_call.1} parent=11 // pred_check_branch
          %537 = sbr.rel (%p535) target = $region64
        $region63: #{tpu_custom_call.1} parent=11 // pred_region
          _
        $region64: #{tpu_custom_call.1} parent=11 // pred_fallthru
          _
        // Predicated region
        $region65: #{tpu_custom_call.1} parent=11 // pred_check
          %p538 = pneg %p414
        $region66: #{tpu_custom_call.1} parent=11 // pred_check_branch
          %540 = sbr.rel (%p538) target = $region68
        $region67: #{tpu_custom_call.1} parent=11 // pred_region
          _
        $region68: #{tpu_custom_call.1} parent=11 // pred_fallthru
          _
        // Predicated region
        $region69: #{tpu_custom_call.1} parent=11 // pred_check
          %p541 = pneg %p435
        $region70: #{tpu_custom_call.1} parent=11 // pred_check_branch
          %543 = sbr.rel (%p541) target = $region72
        $region71: #{tpu_custom_call.1} parent=11 // pred_region
          _
        $region72: #{tpu_custom_call.1} parent=11 // pred_fallthru
          _
        // Predicated region
        $region73: #{tpu_custom_call.1} parent=11 // pred_check
          %p544 = pneg %p456
        $region74: #{tpu_custom_call.1} parent=11 // pred_check_branch
          %546 = sbr.rel (%p544) target = $region76
        $region75: #{tpu_custom_call.1} parent=11 // pred_region
          _
        $region76: #{tpu_custom_call.1} parent=11 // pred_fallthru
          _
      $region12: #{tpu_custom_call.1} parent=5 // pred_fallthru
        _
      %p547 = scmp.lt.s32.totalorder %s28, 2
      // Predicated region
      $region77: #{tpu_custom_call.1} parent=5 // pred_check
        %p548 = pneg %p547
      $region78: #{tpu_custom_call.1} parent=5 // pred_check_branch
        %550 = sbr.rel (%p548) target = $region80
      $region79: #{tpu_custom_call.1} parent=5 // pred_region
        // Predicated region
        $region81: #{tpu_custom_call.1} parent=79 // pred_check
          %p551 = pneg %p60
        $region82: #{tpu_custom_call.1} parent=79 // pred_check_branch
          %553 = sbr.rel (%p551) target = $region84
        $region83: #{tpu_custom_call.1} parent=79 // pred_region
          %p554 = scmp.lt.s32.totalorder %s35, 1
          %s555 = scalar_select %p554, %s35, 1
          %s556 = scalar_lea.vmem %s0, %s555
        $region84: #{tpu_custom_call.1} parent=79 // pred_fallthru
          _
        // Predicated region
        $region85: #{tpu_custom_call.1} parent=79 // pred_check
          %p557 = pneg %p88
        $region86: #{tpu_custom_call.1} parent=79 // pred_check_branch
          %559 = sbr.rel (%p557) target = $region88
        $region87: #{tpu_custom_call.1} parent=79 // pred_region
          %p560 = scmp.lt.s32.totalorder %s35, 1
          %s561 = scalar_select %p560, %s35, 1
          %p562 = scmp.lt.s32.totalorder %s36, 0
          %s563 = scalar_select %p562, %s36, 0
          %s564 = sadd.s32 %s563, %s561
          %s565 = smul.addr %s564, 8
          %s566 = scalar_lea.vmem %s1, %s565
        $region88: #{tpu_custom_call.1} parent=79 // pred_fallthru
          _
        // Predicated region
        $region89: #{tpu_custom_call.1} parent=79 // pred_check
          %p567 = pneg %p114
        $region90: #{tpu_custom_call.1} parent=79 // pred_check_branch
          %569 = sbr.rel (%p567) target = $region92
        $region91: #{tpu_custom_call.1} parent=79 // pred_region
          %p570 = scmp.lt.s32.totalorder %s35, 1
          %s571 = scalar_select %p570, %s35, 1
          %s572 = smul.addr %s571, 8
          %s573 = scalar_lea.vmem %s2, %s572
        $region92: #{tpu_custom_call.1} parent=79 // pred_fallthru
          _
      $region80: #{tpu_custom_call.1} parent=5 // pred_fallthru
        _
      %p574 = scmp.le.s32.totalorder 1, %s28
      %p575 = scmp.lt.s32.totalorder %s28, 3
      %p576 = pnand %p574, %p575
      %p577 = pneg %p576
      // Predicated region
      $region93: #{tpu_custom_call.1} parent=5 // pred_check
        _
      $region94: #{tpu_custom_call.1} parent=5 // pred_check_branch
        %579 = sbr.rel (%p576) target = $region96
      $region95: #{tpu_custom_call.1} parent=5 // pred_region
        %s580 = ssub.s32 %s28, 1
        %p581 = scmp.lt.s32.totalorder %s37, 1
        %s582 = scalar_select %p581, %s37, 1
        %s583 = scalar_lea.vmem %s0, %s582
        %p584 = pneg %p66
        %p585 = pneg %p63
        %p586 = scmp.lt.s32.totalorder %s37, 1
        %s587 = scalar_select %p586, %s37, 1
        %p588 = scmp.lt.s32.totalorder %s38, 0
        %s589 = scalar_select %p588, %s38, 0
        %s590 = sadd.s32 %s589, %s587
        %s591 = smul.addr %s590, 8
        %s592 = scalar_lea.vmem %s1, %s591
        %p593 = pneg %p94
        %p594 = pneg %p91
        %p595 = scmp.lt.s32.totalorder %s37, 1
        %s596 = scalar_select %p595, %s37, 1
        %s597 = smul.addr %s596, 8
        %s598 = scalar_lea.vmem %s2, %s597
        %p599 = pneg %p120
        %p600 = pneg %p117
        %p601 = pneg %p141
        %p602 = pneg %p138
        %p603 = pneg %p162
        %p604 = pneg %p159
        %p605 = pneg %p183
        %p606 = pneg %p180
        %p607 = pneg %p204
        %p608 = pneg %p201
        %p609 = pneg %p225
        %p610 = pneg %p222
        %p611 = pneg %p246
        %p612 = pneg %p243
        %p613 = pneg %p267
        %p614 = pneg %p264
        %p615 = pneg %p288
        %p616 = pneg %p285
        %p617 = pneg %p309
        %p618 = pneg %p306
        %p619 = pneg %p330
        %p620 = pneg %p327
        %p621 = pneg %p351
        %p622 = pneg %p348
        %p623 = pneg %p372
        %p624 = pneg %p369
        %p625 = pneg %p393
        %p626 = pneg %p390
        %p627 = pneg %p414
        %p628 = pneg %p411
        %p629 = pneg %p435
        %p630 = pneg %p432
        %p631 = pneg %p456
        %p632 = pneg %p453
        %p633 = pneg %p484
        %p634 = pneg %p481
        %s635 = sand.u32 %s471, 1
        %s636 = scalar_lea.sflag [#allocation3], %s635
        %s637 = sand.u32 %s471, 1
        %s638 = smul.addr %s637, 8
        %s639 = scalar_lea.vmem [#allocation2], %s638
        %p640 = scmp.lt.s32.totalorder %s37, 1
        %s641 = scalar_select %p640, %s37, 1
        %s642 = scalar_lea.vmem %s0, %s641
        %p643 = scmp.lt.s32.totalorder %s37, 1
        %s644 = scalar_select %p643, %s37, 1
        %p645 = scmp.lt.s32.totalorder %s38, 0
        %s646 = scalar_select %p645, %s38, 0
        %s647 = sadd.s32 %s646, %s644
        %s648 = smul.addr %s647, 8
        %s649 = scalar_lea.vmem %s1, %s648
        %p650 = scmp.lt.s32.totalorder %s37, 1
        %s651 = scalar_select %p650, %s37, 1
        %s652 = smul.addr %s651, 8
        %s653 = scalar_lea.vmem %s2, %s652
        %v654 = vld [vmem:[%s649] sm:$0xff]
        %v655 = vld [vmem:[%s653] sm:$0xff]
        %v656 = vld [vmem:[%s642] sm:$0x1]
        %v657 = vld [vmem:[%s3] sm:$0xff]
        %v658 = vld [vmem:[%s3 + $0x8] sm:$0xff]
        %v659 = vld [vmem:[%s3 + $0x10] sm:$0xff]
        %v660 = vld [vmem:[%s3 + $0x18] sm:$0xff]
        %v661 = vld [vmem:[%s3 + $0x20] sm:$0xff]
        %v662 = vld [vmem:[%s3 + $0x28] sm:$0xff]
        %v663 = vld [vmem:[%s3 + $0x30] sm:$0xff]
        %v664 = vld [vmem:[%s3 + $0x38] sm:$0xff]
        %v665 = vld [vmem:[%s3 + $0x40] sm:$0xff]
        %v666 = vld [vmem:[%s3 + $0x48] sm:$0xff]
        %v667 = vld [vmem:[%s3 + $0x50] sm:$0xff]
        %v668 = vld [vmem:[%s3 + $0x58] sm:$0xff]
        %v669 = vld [vmem:[%s3 + $0x60] sm:$0xff]
        %v670 = vld [vmem:[%s3 + $0x68] sm:$0xff]
        %v671 = vld [vmem:[%s3 + $0x70] sm:$0xff]
        %v672 = vld [vmem:[%s3 + $0x78] sm:$0xff]
        %v673 = vld [vmem:[%s4] sm:$0x1]
        %v674 = vld [vmem:[%s4 + $0x1] sm:$0x1]
        %v675 = vld [vmem:[%s4 + $0x2] sm:$0x1]
        %v676 = vld [vmem:[%s4 + $0x3] sm:$0x1]
        %v681 = vlaneseq
        %v682 = vshrl.u32 %v681, 7
        %v683 = vsub.s32 0, %v682
        %v684 = vrot.slane %v673, %v683
        %v685 = vlaneseq
        %v686 = vshrl.u32 %v685, 7
        %v687 = vsub.s32 0, %v686
        %v688 = vrot.slane %v674, %v687
        %v689 = vlaneseq
        %v690 = vshrl.u32 %v689, 7
        %v691 = vsub.s32 0, %v690
        %v692 = vrot.slane %v675, %v691
        %v693 = vlaneseq
        %v694 = vshrl.u32 %v693, 7
        %v695 = vsub.s32 0, %v694
        %v696 = vrot.slane %v676, %v695
        %vm701 = vcmask 261120
        %v703 = vsel %vm701, %v654, 0
        %705 = vmatprep.subr.mxu0 0.0
        %706 = vmatpush1.msra.mxu0 %v657
        %707 = vmatprep.subr.mxu0 0.0
        %708 = vmatpush1.msra.mxu0 %v658
        %709 = vmatprep.subr.mxu0 0.0
        %710 = vmatpush1.msra.mxu0 %v659
        %711 = vmatprep.subr.mxu0 0.0
        %712 = vmatpush1.msra.mxu0 %v660
        %713 = vmatprep.subr.mxu0 0.0
        %714 = vmatpush1.msra.mxu0 0.0
        %715 = vmatprep.subr.mxu0 0.0
        %716 = vmatpush1.msra.mxu0 0.0
        %717 = vmatprep.subr.mxu0 0.0
        %718 = vmatpush1.msra.mxu0 0.0
        %719 = vmatprep.subr.mxu0 0.0
        %720 = vmatpush1.msra.mxu0 0.0
        %721 = vmatprep.subr.mxu0 0.0
        %722 = vmatpush1.msra.mxu0 0.0
        %723 = vmatprep.subr.mxu0 0.0
        %724 = vmatpush1.msra.mxu0 0.0
        %725 = vmatprep.subr.mxu0 0.0
        %726 = vmatpush1.msra.mxu0 0.0
        %727 = vmatprep.subr.mxu0 0.0
        %728 = vmatpush1.msra.mxu0 0.0
        %729 = vmatprep.subr.mxu0 0.0
        %730 = vmatpush1.msra.mxu0 0.0
        %731 = vmatprep.subr.mxu0 0.0
        %732 = vmatpush1.msra.mxu0 0.0
        %733 = vmatprep.subr.mxu0 0.0
        %734 = vmatpush1.msra.mxu0 0.0
        %735 = vmatprep.subr.mxu0 0.0
        %736 = vmatpush1.msra.mxu0 0.0
        %737 = vmatprep.subr.mxu0 0.0
        %738 = vmatpush1.msra.mxu0 0.0
        %739 = vmatprep.subr.mxu0 0.0
        %740 = vmatpush1.msra.mxu0 0.0
        %741 = vmatprep.subr.mxu0 0.0
        %742 = vmatpush1.msra.mxu0 0.0
        %743 = vmatprep.subr.mxu0 0.0
        %744 = vmatpush1.msra.mxu0 0.0
        %745 = vmatprep.subr.mxu0 0.0
        %746 = vmatpush1.msra.mxu0 0.0
        %747 = vmatprep.subr.mxu0 0.0
        %748 = vmatpush1.msra.mxu0 0.0
        %749 = vmatprep.subr.mxu0 0.0
        %750 = vmatpush1.msra.mxu0 0.0
        %751 = vmatprep.subr.mxu0 0.0
        %752 = vmatpush1.msra.mxu0 0.0
        %753 = vmatprep.subr.mxu0 0.0
        %754 = vmatpush1.msra.mxu0 0.0
        %755 = vmatprep.subr.mxu0 0.0
        %756 = vmatpush1.msra.mxu0 0.0
        %757 = vmatprep.subr.mxu0 0.0
        %758 = vmatpush1.msra.mxu0 0.0
        %759 = vmatprep.subr.mxu0 0.0
        %760 = vmatpush1.msra.mxu0 0.0
        %761 = vmatprep.subr.mxu0 0.0
        %762 = vmatpush1.msra.mxu0 0.0
        %763 = vmatprep.subr.mxu0 0.0
        %764 = vmatpush1.msra.mxu0 0.0
        %765 = vmatprep.subr.mxu0 0.0
        %766 = vmatpush1.msra.mxu0 0.0
        %767 = vmatprep.subr.mxu0 0.0
        %768 = vmatpush1.msra.mxu0 0.0
        %769 = vmatprep.mubr.f32.mxu0 0.0
        %770 = vmatmul.mubr.f32.gmra.mrb[0].mxu0 %v703
        %v771 = vpop.f32.mrb[0].mxu0
        %v772 = vadd.f32 %v684, %v771
        %v773 = vpop.f32.mrb[0].mxu0
        %774 = vdwg.mxu0
        %775 = vmatprep.subr.mxu0 0.0
        %776 = vmatpush1.msra.mxu0 %v661
        %777 = vmatprep.subr.mxu0 0.0
        %778 = vmatpush1.msra.mxu0 %v662
        %779 = vmatprep.subr.mxu0 0.0
        %780 = vmatpush1.msra.mxu0 %v663
        %781 = vmatprep.subr.mxu0 0.0
        %782 = vmatpush1.msra.mxu0 %v664
        %783 = vmatprep.subr.mxu0 0.0
        %784 = vmatpush1.msra.mxu0 0.0
        %785 = vmatprep.subr.mxu0 0.0
        %786 = vmatpush1.msra.mxu0 0.0
        %787 = vmatprep.subr.mxu0 0.0
        %788 = vmatpush1.msra.mxu0 0.0
        %789 = vmatprep.subr.mxu0 0.0
        %790 = vmatpush1.msra.mxu0 0.0
        %791 = vmatprep.subr.mxu0 0.0
        %792 = vmatpush1.msra.mxu0 0.0
        %793 = vmatprep.subr.mxu0 0.0
        %794 = vmatpush1.msra.mxu0 0.0
        %795 = vmatprep.subr.mxu0 0.0
        %796 = vmatpush1.msra.mxu0 0.0
        %797 = vmatprep.subr.mxu0 0.0
        %798 = vmatpush1.msra.mxu0 0.0
        %799 = vmatprep.subr.mxu0 0.0
        %800 = vmatpush1.msra.mxu0 0.0
        %801 = vmatprep.subr.mxu0 0.0
        %802 = vmatpush1.msra.mxu0 0.0
        %803 = vmatprep.subr.mxu0 0.0
        %804 = vmatpush1.msra.mxu0 0.0
        %805 = vmatprep.subr.mxu0 0.0
        %806 = vmatpush1.msra.mxu0 0.0
        %807 = vmatprep.subr.mxu0 0.0
        %808 = vmatpush1.msra.mxu0 0.0
        %809 = vmatprep.subr.mxu0 0.0
        %810 = vmatpush1.msra.mxu0 0.0
        %811 = vmatprep.subr.mxu0 0.0
        %812 = vmatpush1.msra.mxu0 0.0
        %813 = vmatprep.subr.mxu0 0.0
        %814 = vmatpush1.msra.mxu0 0.0
        %815 = vmatprep.subr.mxu0 0.0
        %816 = vmatpush1.msra.mxu0 0.0
        %817 = vmatprep.subr.mxu0 0.0
        %818 = vmatpush1.msra.mxu0 0.0
        %819 = vmatprep.subr.mxu0 0.0
        %820 = vmatpush1.msra.mxu0 0.0
        %821 = vmatprep.subr.mxu0 0.0
        %822 = vmatpush1.msra.mxu0 0.0
        %823 = vmatprep.subr.mxu0 0.0
        %824 = vmatpush1.msra.mxu0 0.0
        %825 = vmatprep.subr.mxu0 0.0
        %826 = vmatpush1.msra.mxu0 0.0
        %827 = vmatprep.subr.mxu0 0.0
        %828 = vmatpush1.msra.mxu0 0.0
        %829 = vmatprep.subr.mxu0 0.0
        %830 = vmatpush1.msra.mxu0 0.0
        %831 = vmatprep.subr.mxu0 0.0
        %832 = vmatpush1.msra.mxu0 0.0
        %833 = vmatprep.subr.mxu0 0.0
        %834 = vmatpush1.msra.mxu0 0.0
        %835 = vmatprep.subr.mxu0 0.0
        %836 = vmatpush1.msra.mxu0 0.0
        %837 = vmatprep.subr.mxu0 0.0
        %838 = vmatpush1.msra.mxu0 0.0
        %839 = vmatprep.mubr.f32.mxu0 0.0
        %840 = vmatmul.mubr.f32.gmra.mrb[0].mxu0 %v703
        %v841 = vpop.f32.mrb[0].mxu0
        %v842 = vadd.f32 %v688, %v841
        %v843 = vpop.f32.mrb[0].mxu0
        %844 = vdwg.mxu0
        %845 = vmatprep.subr.mxu0 0.0
        %846 = vmatpush1.msra.mxu0 %v665
        %847 = vmatprep.subr.mxu0 0.0
        %848 = vmatpush1.msra.mxu0 %v666
        %849 = vmatprep.subr.mxu0 0.0
        %850 = vmatpush1.msra.mxu0 %v667
        %851 = vmatprep.subr.mxu0 0.0
        %852 = vmatpush1.msra.mxu0 %v668
        %853 = vmatprep.subr.mxu0 0.0
        %854 = vmatpush1.msra.mxu0 0.0
        %855 = vmatprep.subr.mxu0 0.0
        %856 = vmatpush1.msra.mxu0 0.0
        %857 = vmatprep.subr.mxu0 0.0
        %858 = vmatpush1.msra.mxu0 0.0
        %859 = vmatprep.subr.mxu0 0.0
        %860 = vmatpush1.msra.mxu0 0.0
        %861 = vmatprep.subr.mxu0 0.0
        %862 = vmatpush1.msra.mxu0 0.0
        %863 = vmatprep.subr.mxu0 0.0
        %864 = vmatpush1.msra.mxu0 0.0
        %865 = vmatprep.subr.mxu0 0.0
        %866 = vmatpush1.msra.mxu0 0.0
        %867 = vmatprep.subr.mxu0 0.0
        %868 = vmatpush1.msra.mxu0 0.0
        %869 = vmatprep.subr.mxu0 0.0
        %870 = vmatpush1.msra.mxu0 0.0
        %871 = vmatprep.subr.mxu0 0.0
        %872 = vmatpush1.msra.mxu0 0.0
        %873 = vmatprep.subr.mxu0 0.0
        %874 = vmatpush1.msra.mxu0 0.0
        %875 = vmatprep.subr.mxu0 0.0
        %876 = vmatpush1.msra.mxu0 0.0
        %877 = vmatprep.subr.mxu0 0.0
        %878 = vmatpush1.msra.mxu0 0.0
        %879 = vmatprep.subr.mxu0 0.0
        %880 = vmatpush1.msra.mxu0 0.0
        %881 = vmatprep.subr.mxu0 0.0
        %882 = vmatpush1.msra.mxu0 0.0
        %883 = vmatprep.subr.mxu0 0.0
        %884 = vmatpush1.msra.mxu0 0.0
        %885 = vmatprep.subr.mxu0 0.0
        %886 = vmatpush1.msra.mxu0 0.0
        %887 = vmatprep.subr.mxu0 0.0
        %888 = vmatpush1.msra.mxu0 0.0
        %889 = vmatprep.subr.mxu0 0.0
        %890 = vmatpush1.msra.mxu0 0.0
        %891 = vmatprep.subr.mxu0 0.0
        %892 = vmatpush1.msra.mxu0 0.0
        %893 = vmatprep.subr.mxu0 0.0
        %894 = vmatpush1.msra.mxu0 0.0
        %895 = vmatprep.subr.mxu0 0.0
        %896 = vmatpush1.msra.mxu0 0.0
        %897 = vmatprep.subr.mxu0 0.0
        %898 = vmatpush1.msra.mxu0 0.0
        %899 = vmatprep.subr.mxu0 0.0
        %900 = vmatpush1.msra.mxu0 0.0
        %901 = vmatprep.subr.mxu0 0.0
        %902 = vmatpush1.msra.mxu0 0.0
        %903 = vmatprep.subr.mxu0 0.0
        %904 = vmatpush1.msra.mxu0 0.0
        %905 = vmatprep.subr.mxu0 0.0
        %906 = vmatpush1.msra.mxu0 0.0
        %907 = vmatprep.subr.mxu0 0.0
        %908 = vmatpush1.msra.mxu0 0.0
        %909 = vmatprep.mubr.f32.mxu0 0.0
        %910 = vmatmul.mubr.f32.gmra.mrb[0].mxu0 %v703
        %v911 = vpop.f32.mrb[0].mxu0
        %v912 = vadd.f32 %v692, %v911
        %v913 = vpop.f32.mrb[0].mxu0
        %914 = vdwg.mxu0
        %915 = vmatprep.subr.mxu0 0.0
        %916 = vmatpush1.msra.mxu0 %v669
        %917 = vmatprep.subr.mxu0 0.0
        %918 = vmatpush1.msra.mxu0 %v670
        %919 = vmatprep.subr.mxu0 0.0
        %920 = vmatpush1.msra.mxu0 %v671
        %921 = vmatprep.subr.mxu0 0.0
        %922 = vmatpush1.msra.mxu0 %v672
        %923 = vmatprep.subr.mxu0 0.0
        %924 = vmatpush1.msra.mxu0 0.0
        %925 = vmatprep.subr.mxu0 0.0
        %926 = vmatpush1.msra.mxu0 0.0
        %927 = vmatprep.subr.mxu0 0.0
        %928 = vmatpush1.msra.mxu0 0.0
        %929 = vmatprep.subr.mxu0 0.0
        %930 = vmatpush1.msra.mxu0 0.0
        %931 = vmatprep.subr.mxu0 0.0
        %932 = vmatpush1.msra.mxu0 0.0
        %933 = vmatprep.subr.mxu0 0.0
        %934 = vmatpush1.msra.mxu0 0.0
        %935 = vmatprep.subr.mxu0 0.0
        %936 = vmatpush1.msra.mxu0 0.0
        %937 = vmatprep.subr.mxu0 0.0
        %938 = vmatpush1.msra.mxu0 0.0
        %939 = vmatprep.subr.mxu0 0.0
        %940 = vmatpush1.msra.mxu0 0.0
        %941 = vmatprep.subr.mxu0 0.0
        %942 = vmatpush1.msra.mxu0 0.0
        %943 = vmatprep.subr.mxu0 0.0
        %944 = vmatpush1.msra.mxu0 0.0
        %945 = vmatprep.subr.mxu0 0.0
        %946 = vmatpush1.msra.mxu0 0.0
        %947 = vmatprep.subr.mxu0 0.0
        %948 = vmatpush1.msra.mxu0 0.0
        %949 = vmatprep.subr.mxu0 0.0
        %950 = vmatpush1.msra.mxu0 0.0
        %951 = vmatprep.subr.mxu0 0.0
        %952 = vmatpush1.msra.mxu0 0.0
        %953 = vmatprep.subr.mxu0 0.0
        %954 = vmatpush1.msra.mxu0 0.0
        %955 = vmatprep.subr.mxu0 0.0
        %956 = vmatpush1.msra.mxu0 0.0
        %957 = vmatprep.subr.mxu0 0.0
        %958 = vmatpush1.msra.mxu0 0.0
        %959 = vmatprep.subr.mxu0 0.0
        %960 = vmatpush1.msra.mxu0 0.0
        %961 = vmatprep.subr.mxu0 0.0
        %962 = vmatpush1.msra.mxu0 0.0
        %963 = vmatprep.subr.mxu0 0.0
        %964 = vmatpush1.msra.mxu0 0.0
        %965 = vmatprep.subr.mxu0 0.0
        %966 = vmatpush1.msra.mxu0 0.0
        %967 = vmatprep.subr.mxu0 0.0
        %968 = vmatpush1.msra.mxu0 0.0
        %969 = vmatprep.subr.mxu0 0.0
        %970 = vmatpush1.msra.mxu0 0.0
        %971 = vmatprep.subr.mxu0 0.0
        %972 = vmatpush1.msra.mxu0 0.0
        %973 = vmatprep.subr.mxu0 0.0
        %974 = vmatpush1.msra.mxu0 0.0
        %975 = vmatprep.subr.mxu0 0.0
        %976 = vmatpush1.msra.mxu0 0.0
        %977 = vmatprep.subr.mxu0 0.0
        %978 = vmatpush1.msra.mxu0 0.0
        %979 = vmatprep.mubr.f32.mxu0 0.0
        %980 = vmatmul.mubr.f32.gmra.mrb[0].mxu0 %v703
        %v981 = vpop.f32.mrb[0].mxu0
        %v982 = vadd.f32 %v696, %v981
        %v983 = vpop.f32.mrb[0].mxu0
        %984 = vdwg.mxu0
        %v985 = vld [vmem:[%s5] sm:$0xff]
        %v986 = vld [vmem:[%s5 + $0x8] sm:$0xff]
        %v987 = vld [vmem:[%s5 + $0x10] sm:$0xff]
        %v988 = vld [vmem:[%s5 + $0x18] sm:$0xff]
        %v989 = vld [vmem:[%s5 + $0x20] sm:$0xff]
        %v990 = vld [vmem:[%s5 + $0x28] sm:$0xff]
        %v991 = vld [vmem:[%s5 + $0x30] sm:$0xff]
        %v992 = vld [vmem:[%s5 + $0x38] sm:$0xff]
        %v993 = vld [vmem:[%s5 + $0x40] sm:$0xff]
        %v994 = vld [vmem:[%s5 + $0x48] sm:$0xff]
        %v995 = vld [vmem:[%s5 + $0x50] sm:$0xff]
        %v996 = vld [vmem:[%s5 + $0x58] sm:$0xff]
        %v997 = vld [vmem:[%s5 + $0x60] sm:$0xff]
        %v998 = vld [vmem:[%s5 + $0x68] sm:$0xff]
        %v999 = vld [vmem:[%s5 + $0x70] sm:$0xff]
        %v1000 = vld [vmem:[%s5 + $0x78] sm:$0xff]
        %v1001 = vld [vmem:[%s6] sm:$0x1]
        %v1002 = vld [vmem:[%s6 + $0x1] sm:$0x1]
        %v1003 = vld [vmem:[%s6 + $0x2] sm:$0x1]
        %v1004 = vld [vmem:[%s6 + $0x3] sm:$0x1]
        %v1009 = vlaneseq
        %v1010 = vshrl.u32 %v1009, 7
        %v1011 = vsub.s32 0, %v1010
        %v1012 = vrot.slane %v1001, %v1011
        %v1013 = vlaneseq
        %v1014 = vshrl.u32 %v1013, 7
        %v1015 = vsub.s32 0, %v1014
        %v1016 = vrot.slane %v1002, %v1015
        %v1017 = vlaneseq
        %v1018 = vshrl.u32 %v1017, 7
        %v1019 = vsub.s32 0, %v1018
        %v1020 = vrot.slane %v1003, %v1019
        %v1021 = vlaneseq
        %v1022 = vshrl.u32 %v1021, 7
        %v1023 = vsub.s32 0, %v1022
        %v1024 = vrot.slane %v1004, %v1023
        %v1030 = vsel %vm701, %v655, 0
        %1032 = vmatprep.subr.mxu0 0.0
        %1033 = vmatpush1.msra.mxu0 %v985
        %1034 = vmatprep.subr.mxu0 0.0
        %1035 = vmatpush1.msra.mxu0 %v986
        %1036 = vmatprep.subr.mxu0 0.0
        %1037 = vmatpush1.msra.mxu0 %v987
        %1038 = vmatprep.subr.mxu0 0.0
        %1039 = vmatpush1.msra.mxu0 %v988
        %1040 = vmatprep.subr.mxu0 0.0
        %1041 = vmatpush1.msra.mxu0 0.0
        %1042 = vmatprep.subr.mxu0 0.0
        %1043 = vmatpush1.msra.mxu0 0.0
        %1044 = vmatprep.subr.mxu0 0.0
        %1045 = vmatpush1.msra.mxu0 0.0
        %1046 = vmatprep.subr.mxu0 0.0
        %1047 = vmatpush1.msra.mxu0 0.0
        %1048 = vmatprep.subr.mxu0 0.0
        %1049 = vmatpush1.msra.mxu0 0.0
        %1050 = vmatprep.subr.mxu0 0.0
        %1051 = vmatpush1.msra.mxu0 0.0
        %1052 = vmatprep.subr.mxu0 0.0
        %1053 = vmatpush1.msra.mxu0 0.0
        %1054 = vmatprep.subr.mxu0 0.0
        %1055 = vmatpush1.msra.mxu0 0.0
        %1056 = vmatprep.subr.mxu0 0.0
        %1057 = vmatpush1.msra.mxu0 0.0
        %1058 = vmatprep.subr.mxu0 0.0
        %1059 = vmatpush1.msra.mxu0 0.0
        %1060 = vmatprep.subr.mxu0 0.0
        %1061 = vmatpush1.msra.mxu0 0.0
        %1062 = vmatprep.subr.mxu0 0.0
        %1063 = vmatpush1.msra.mxu0 0.0
        %1064 = vmatprep.subr.mxu0 0.0
        %1065 = vmatpush1.msra.mxu0 0.0
        %1066 = vmatprep.subr.mxu0 0.0
        %1067 = vmatpush1.msra.mxu0 0.0
        %1068 = vmatprep.subr.mxu0 0.0
        %1069 = vmatpush1.msra.mxu0 0.0
        %1070 = vmatprep.subr.mxu0 0.0
        %1071 = vmatpush1.msra.mxu0 0.0
        %1072 = vmatprep.subr.mxu0 0.0
        %1073 = vmatpush1.msra.mxu0 0.0
        %1074 = vmatprep.subr.mxu0 0.0
        %1075 = vmatpush1.msra.mxu0 0.0
        %1076 = vmatprep.subr.mxu0 0.0
        %1077 = vmatpush1.msra.mxu0 0.0
        %1078 = vmatprep.subr.mxu0 0.0
        %1079 = vmatpush1.msra.mxu0 0.0
        %1080 = vmatprep.subr.mxu0 0.0
        %1081 = vmatpush1.msra.mxu0 0.0
        %1082 = vmatprep.subr.mxu0 0.0
        %1083 = vmatpush1.msra.mxu0 0.0
        %1084 = vmatprep.subr.mxu0 0.0
        %1085 = vmatpush1.msra.mxu0 0.0
        %1086 = vmatprep.subr.mxu0 0.0
        %1087 = vmatpush1.msra.mxu0 0.0
        %1088 = vmatprep.subr.mxu0 0.0
        %1089 = vmatpush1.msra.mxu0 0.0
        %1090 = vmatprep.subr.mxu0 0.0
        %1091 = vmatpush1.msra.mxu0 0.0
        %1092 = vmatprep.subr.mxu0 0.0
        %1093 = vmatpush1.msra.mxu0 0.0
        %1094 = vmatprep.subr.mxu0 0.0
        %1095 = vmatpush1.msra.mxu0 0.0
        %1096 = vmatprep.mubr.f32.mxu0 0.0
        %1097 = vmatmul.mubr.f32.gmra.mrb[0].mxu0 %v1030
        %v1098 = vpop.f32.mrb[0].mxu0
        %v1099 = vadd.f32 %v1012, %v1098
        %v1100 = vpop.f32.mrb[0].mxu0
        %1101 = vdwg.mxu0
        %1102 = vmatprep.subr.mxu0 0.0
        %1103 = vmatpush1.msra.mxu0 %v989
        %1104 = vmatprep.subr.mxu0 0.0
        %1105 = vmatpush1.msra.mxu0 %v990
        %1106 = vmatprep.subr.mxu0 0.0
        %1107 = vmatpush1.msra.mxu0 %v991
        %1108 = vmatprep.subr.mxu0 0.0
        %1109 = vmatpush1.msra.mxu0 %v992
        %1110 = vmatprep.subr.mxu0 0.0
        %1111 = vmatpush1.msra.mxu0 0.0
        %1112 = vmatprep.subr.mxu0 0.0
        %1113 = vmatpush1.msra.mxu0 0.0
        %1114 = vmatprep.subr.mxu0 0.0
        %1115 = vmatpush1.msra.mxu0 0.0
        %1116 = vmatprep.subr.mxu0 0.0
        %1117 = vmatpush1.msra.mxu0 0.0
        %1118 = vmatprep.subr.mxu0 0.0
        %1119 = vmatpush1.msra.mxu0 0.0
        %1120 = vmatprep.subr.mxu0 0.0
        %1121 = vmatpush1.msra.mxu0 0.0
        %1122 = vmatprep.subr.mxu0 0.0
        %1123 = vmatpush1.msra.mxu0 0.0
        %1124 = vmatprep.subr.mxu0 0.0
        %1125 = vmatpush1.msra.mxu0 0.0
        %1126 = vmatprep.subr.mxu0 0.0
        %1127 = vmatpush1.msra.mxu0 0.0
        %1128 = vmatprep.subr.mxu0 0.0
        %1129 = vmatpush1.msra.mxu0 0.0
        %1130 = vmatprep.subr.mxu0 0.0
        %1131 = vmatpush1.msra.mxu0 0.0
        %1132 = vmatprep.subr.mxu0 0.0
        %1133 = vmatpush1.msra.mxu0 0.0
        %1134 = vmatprep.subr.mxu0 0.0
        %1135 = vmatpush1.msra.mxu0 0.0
        %1136 = vmatprep.subr.mxu0 0.0
        %1137 = vmatpush1.msra.mxu0 0.0
        %1138 = vmatprep.subr.mxu0 0.0
        %1139 = vmatpush1.msra.mxu0 0.0
        %1140 = vmatprep.subr.mxu0 0.0
        %1141 = vmatpush1.msra.mxu0 0.0
        %1142 = vmatprep.subr.mxu0 0.0
        %1143 = vmatpush1.msra.mxu0 0.0
        %1144 = vmatprep.subr.mxu0 0.0
        %1145 = vmatpush1.msra.mxu0 0.0
        %1146 = vmatprep.subr.mxu0 0.0
        %1147 = vmatpush1.msra.mxu0 0.0
        %1148 = vmatprep.subr.mxu0 0.0
        %1149 = vmatpush1.msra.mxu0 0.0
        %1150 = vmatprep.subr.mxu0 0.0
        %1151 = vmatpush1.msra.mxu0 0.0
        %1152 = vmatprep.subr.mxu0 0.0
        %1153 = vmatpush1.msra.mxu0 0.0
        %1154 = vmatprep.subr.mxu0 0.0
        %1155 = vmatpush1.msra.mxu0 0.0
        %1156 = vmatprep.subr.mxu0 0.0
        %1157 = vmatpush1.msra.mxu0 0.0
        %1158 = vmatprep.subr.mxu0 0.0
        %1159 = vmatpush1.msra.mxu0 0.0
        %1160 = vmatprep.subr.mxu0 0.0
        %1161 = vmatpush1.msra.mxu0 0.0
        %1162 = vmatprep.subr.mxu0 0.0
        %1163 = vmatpush1.msra.mxu0 0.0
        %1164 = vmatprep.subr.mxu0 0.0
        %1165 = vmatpush1.msra.mxu0 0.0
        %1166 = vmatprep.mubr.f32.mxu0 0.0
        %1167 = vmatmul.mubr.f32.gmra.mrb[0].mxu0 %v1030
        %v1168 = vpop.f32.mrb[0].mxu0
        %v1169 = vadd.f32 %v1016, %v1168
        %v1170 = vpop.f32.mrb[0].mxu0
        %1171 = vdwg.mxu0
        %1172 = vmatprep.subr.mxu0 0.0
        %1173 = vmatpush1.msra.mxu0 %v993
        %1174 = vmatprep.subr.mxu0 0.0
        %1175 = vmatpush1.msra.mxu0 %v994
        %1176 = vmatprep.subr.mxu0 0.0
        %1177 = vmatpush1.msra.mxu0 %v995
        %1178 = vmatprep.subr.mxu0 0.0
        %1179 = vmatpush1.msra.mxu0 %v996
        %1180 = vmatprep.subr.mxu0 0.0
        %1181 = vmatpush1.msra.mxu0 0.0
        %1182 = vmatprep.subr.mxu0 0.0
        %1183 = vmatpush1.msra.mxu0 0.0
        %1184 = vmatprep.subr.mxu0 0.0
        %1185 = vmatpush1.msra.mxu0 0.0
        %1186 = vmatprep.subr.mxu0 0.0
        %1187 = vmatpush1.msra.mxu0 0.0
        %1188 = vmatprep.subr.mxu0 0.0
        %1189 = vmatpush1.msra.mxu0 0.0
        %1190 = vmatprep.subr.mxu0 0.0
        %1191 = vmatpush1.msra.mxu0 0.0
        %1192 = vmatprep.subr.mxu0 0.0
        %1193 = vmatpush1.msra.mxu0 0.0
        %1194 = vmatprep.subr.mxu0 0.0
        %1195 = vmatpush1.msra.mxu0 0.0
        %1196 = vmatprep.subr.mxu0 0.0
        %1197 = vmatpush1.msra.mxu0 0.0
        %1198 = vmatprep.subr.mxu0 0.0
        %1199 = vmatpush1.msra.mxu0 0.0
        %1200 = vmatprep.subr.mxu0 0.0
        %1201 = vmatpush1.msra.mxu0 0.0
        %1202 = vmatprep.subr.mxu0 0.0
        %1203 = vmatpush1.msra.mxu0 0.0
        %1204 = vmatprep.subr.mxu0 0.0
        %1205 = vmatpush1.msra.mxu0 0.0
        %1206 = vmatprep.subr.mxu0 0.0
        %1207 = vmatpush1.msra.mxu0 0.0
        %1208 = vmatprep.subr.mxu0 0.0
        %1209 = vmatpush1.msra.mxu0 0.0
        %1210 = vmatprep.subr.mxu0 0.0
        %1211 = vmatpush1.msra.mxu0 0.0
        %1212 = vmatprep.subr.mxu0 0.0
        %1213 = vmatpush1.msra.mxu0 0.0
        %1214 = vmatprep.subr.mxu0 0.0
        %1215 = vmatpush1.msra.mxu0 0.0
        %1216 = vmatprep.subr.mxu0 0.0
        %1217 = vmatpush1.msra.mxu0 0.0
        %1218 = vmatprep.subr.mxu0 0.0
        %1219 = vmatpush1.msra.mxu0 0.0
        %1220 = vmatprep.subr.mxu0 0.0
        %1221 = vmatpush1.msra.mxu0 0.0
        %1222 = vmatprep.subr.mxu0 0.0
        %1223 = vmatpush1.msra.mxu0 0.0
        %1224 = vmatprep.subr.mxu0 0.0
        %1225 = vmatpush1.msra.mxu0 0.0
        %1226 = vmatprep.subr.mxu0 0.0
        %1227 = vmatpush1.msra.mxu0 0.0
        %1228 = vmatprep.subr.mxu0 0.0
        %1229 = vmatpush1.msra.mxu0 0.0
        %1230 = vmatprep.subr.mxu0 0.0
        %1231 = vmatpush1.msra.mxu0 0.0
        %1232 = vmatprep.subr.mxu0 0.0
        %1233 = vmatpush1.msra.mxu0 0.0
        %1234 = vmatprep.subr.mxu0 0.0
        %1235 = vmatpush1.msra.mxu0 0.0
        %1236 = vmatprep.mubr.f32.mxu0 0.0
        %1237 = vmatmul.mubr.f32.gmra.mrb[0].mxu0 %v1030
        %v1238 = vpop.f32.mrb[0].mxu0
        %v1239 = vadd.f32 %v1020, %v1238
        %v1240 = vpop.f32.mrb[0].mxu0
        %1241 = vdwg.mxu0
        %1242 = vmatprep.subr.mxu0 0.0
        %1243 = vmatpush1.msra.mxu0 %v997
        %1244 = vmatprep.subr.mxu0 0.0
        %1245 = vmatpush1.msra.mxu0 %v998
        %1246 = vmatprep.subr.mxu0 0.0
        %1247 = vmatpush1.msra.mxu0 %v999
        %1248 = vmatprep.subr.mxu0 0.0
        %1249 = vmatpush1.msra.mxu0 %v1000
        %1250 = vmatprep.subr.mxu0 0.0
        %1251 = vmatpush1.msra.mxu0 0.0
        %1252 = vmatprep.subr.mxu0 0.0
        %1253 = vmatpush1.msra.mxu0 0.0
        %1254 = vmatprep.subr.mxu0 0.0
        %1255 = vmatpush1.msra.mxu0 0.0
        %1256 = vmatprep.subr.mxu0 0.0
        %1257 = vmatpush1.msra.mxu0 0.0
        %1258 = vmatprep.subr.mxu0 0.0
        %1259 = vmatpush1.msra.mxu0 0.0
        %1260 = vmatprep.subr.mxu0 0.0
        %1261 = vmatpush1.msra.mxu0 0.0
        %1262 = vmatprep.subr.mxu0 0.0
        %1263 = vmatpush1.msra.mxu0 0.0
        %1264 = vmatprep.subr.mxu0 0.0
        %1265 = vmatpush1.msra.mxu0 0.0
        %1266 = vmatprep.subr.mxu0 0.0
        %1267 = vmatpush1.msra.mxu0 0.0
        %1268 = vmatprep.subr.mxu0 0.0
        %1269 = vmatpush1.msra.mxu0 0.0
        %1270 = vmatprep.subr.mxu0 0.0
        %1271 = vmatpush1.msra.mxu0 0.0
        %1272 = vmatprep.subr.mxu0 0.0
        %1273 = vmatpush1.msra.mxu0 0.0
        %1274 = vmatprep.subr.mxu0 0.0
        %1275 = vmatpush1.msra.mxu0 0.0
        %1276 = vmatprep.subr.mxu0 0.0
        %1277 = vmatpush1.msra.mxu0 0.0
        %1278 = vmatprep.subr.mxu0 0.0
        %1279 = vmatpush1.msra.mxu0 0.0
        %1280 = vmatprep.subr.mxu0 0.0
        %1281 = vmatpush1.msra.mxu0 0.0
        %1282 = vmatprep.subr.mxu0 0.0
        %1283 = vmatpush1.msra.mxu0 0.0
        %1284 = vmatprep.subr.mxu0 0.0
        %1285 = vmatpush1.msra.mxu0 0.0
        %1286 = vmatprep.subr.mxu0 0.0
        %1287 = vmatpush1.msra.mxu0 0.0
        %1288 = vmatprep.subr.mxu0 0.0
        %1289 = vmatpush1.msra.mxu0 0.0
        %1290 = vmatprep.subr.mxu0 0.0
        %1291 = vmatpush1.msra.mxu0 0.0
        %1292 = vmatprep.subr.mxu0 0.0
        %1293 = vmatpush1.msra.mxu0 0.0
        %1294 = vmatprep.subr.mxu0 0.0
        %1295 = vmatpush1.msra.mxu0 0.0
        %1296 = vmatprep.subr.mxu0 0.0
        %1297 = vmatpush1.msra.mxu0 0.0
        %1298 = vmatprep.subr.mxu0 0.0
        %1299 = vmatpush1.msra.mxu0 0.0
        %1300 = vmatprep.subr.mxu0 0.0
        %1301 = vmatpush1.msra.mxu0 0.0
        %1302 = vmatprep.subr.mxu0 0.0
        %1303 = vmatpush1.msra.mxu0 0.0
        %1304 = vmatprep.subr.mxu0 0.0
        %1305 = vmatpush1.msra.mxu0 0.0
        %1306 = vmatprep.mubr.f32.mxu0 0.0
        %1307 = vmatmul.mubr.f32.gmra.mrb[0].mxu0 %v1030
        %v1308 = vpop.f32.mrb[0].mxu0
        %v1309 = vadd.f32 %v1024, %v1308
        %v1310 = vpop.f32.mrb[0].mxu0
        %1311 = vdwg.mxu0
        %v1312 = vld [vmem:[%s7] sm:$0xff]
        %v1313 = vld [vmem:[%s7 + $0x8] sm:$0xff]
        %v1314 = vld [vmem:[%s7 + $0x10] sm:$0xff]
        %v1315 = vld [vmem:[%s7 + $0x18] sm:$0xff]
        %v1316 = vld [vmem:[%s7 + $0x20] sm:$0xff]
        %v1317 = vld [vmem:[%s7 + $0x28] sm:$0xff]
        %v1318 = vld [vmem:[%s7 + $0x30] sm:$0xff]
        %v1319 = vld [vmem:[%s7 + $0x38] sm:$0xff]
        %v1320 = vld [vmem:[%s7 + $0x40] sm:$0xff]
        %v1321 = vld [vmem:[%s7 + $0x48] sm:$0xff]
        %v1322 = vld [vmem:[%s7 + $0x50] sm:$0xff]
        %v1323 = vld [vmem:[%s7 + $0x58] sm:$0xff]
        %v1324 = vld [vmem:[%s7 + $0x60] sm:$0xff]
        %v1325 = vld [vmem:[%s7 + $0x68] sm:$0xff]
        %v1326 = vld [vmem:[%s7 + $0x70] sm:$0xff]
        %v1327 = vld [vmem:[%s7 + $0x78] sm:$0xff]
        %v1328 = vld [vmem:[%s8] sm:$0x1]
        %v1329 = vld [vmem:[%s8 + $0x1] sm:$0x1]
        %v1330 = vld [vmem:[%s8 + $0x2] sm:$0x1]
        %v1331 = vld [vmem:[%s8 + $0x3] sm:$0x1]
        %v1336 = vlaneseq
        %v1337 = vshrl.u32 %v1336, 7
        %v1338 = vsub.s32 0, %v1337
        %v1339 = vrot.slane %v1328, %v1338
        %v1340 = vlaneseq
        %v1341 = vshrl.u32 %v1340, 7
        %v1342 = vsub.s32 0, %v1341
        %v1343 = vrot.slane %v1329, %v1342
        %v1344 = vlaneseq
        %v1345 = vshrl.u32 %v1344, 7
        %v1346 = vsub.s32 0, %v1345
        %v1347 = vrot.slane %v1330, %v1346
        %v1348 = vlaneseq
        %v1349 = vshrl.u32 %v1348, 7
        %v1350 = vsub.s32 0, %v1349
        %v1351 = vrot.slane %v1331, %v1350
        %1356 = vmatprep.subr.mxu0 0.0
        %1357 = vmatpush1.msra.mxu0 %v1312
        %1358 = vmatprep.subr.mxu0 0.0
        %1359 = vmatpush1.msra.mxu0 %v1313
        %1360 = vmatprep.subr.mxu0 0.0
        %1361 = vmatpush1.msra.mxu0 %v1314
        %1362 = vmatprep.subr.mxu0 0.0
        %1363 = vmatpush1.msra.mxu0 %v1315
        %1364 = vmatprep.subr.mxu0 0.0
        %1365 = vmatpush1.msra.mxu0 0.0
        %1366 = vmatprep.subr.mxu0 0.0
        %1367 = vmatpush1.msra.mxu0 0.0
        %1368 = vmatprep.subr.mxu0 0.0
        %1369 = vmatpush1.msra.mxu0 0.0
        %1370 = vmatprep.subr.mxu0 0.0
        %1371 = vmatpush1.msra.mxu0 0.0
        %1372 = vmatprep.subr.mxu0 0.0
        %1373 = vmatpush1.msra.mxu0 0.0
        %1374 = vmatprep.subr.mxu0 0.0
        %1375 = vmatpush1.msra.mxu0 0.0
        %1376 = vmatprep.subr.mxu0 0.0
        %1377 = vmatpush1.msra.mxu0 0.0
        %1378 = vmatprep.subr.mxu0 0.0
        %1379 = vmatpush1.msra.mxu0 0.0
        %1380 = vmatprep.subr.mxu0 0.0
        %1381 = vmatpush1.msra.mxu0 0.0
        %1382 = vmatprep.subr.mxu0 0.0
        %1383 = vmatpush1.msra.mxu0 0.0
        %1384 = vmatprep.subr.mxu0 0.0
        %1385 = vmatpush1.msra.mxu0 0.0
        %1386 = vmatprep.subr.mxu0 0.0
        %1387 = vmatpush1.msra.mxu0 0.0
        %1388 = vmatprep.subr.mxu0 0.0
        %1389 = vmatpush1.msra.mxu0 0.0
        %1390 = vmatprep.subr.mxu0 0.0
        %1391 = vmatpush1.msra.mxu0 0.0
        %1392 = vmatprep.subr.mxu0 0.0
        %1393 = vmatpush1.msra.mxu0 0.0
        %1394 = vmatprep.subr.mxu0 0.0
        %1395 = vmatpush1.msra.mxu0 0.0
        %1396 = vmatprep.subr.mxu0 0.0
        %1397 = vmatpush1.msra.mxu0 0.0
        %1398 = vmatprep.subr.mxu0 0.0
        %1399 = vmatpush1.msra.mxu0 0.0
        %1400 = vmatprep.subr.mxu0 0.0
        %1401 = vmatpush1.msra.mxu0 0.0
        %1402 = vmatprep.subr.mxu0 0.0
        %1403 = vmatpush1.msra.mxu0 0.0
        %1404 = vmatprep.subr.mxu0 0.0
        %1405 = vmatpush1.msra.mxu0 0.0
        %1406 = vmatprep.subr.mxu0 0.0
        %1407 = vmatpush1.msra.mxu0 0.0
        %1408 = vmatprep.subr.mxu0 0.0
        %1409 = vmatpush1.msra.mxu0 0.0
        %1410 = vmatprep.subr.mxu0 0.0
        %1411 = vmatpush1.msra.mxu0 0.0
        %1412 = vmatprep.subr.mxu0 0.0
        %1413 = vmatpush1.msra.mxu0 0.0
        %1414 = vmatprep.subr.mxu0 0.0
        %1415 = vmatpush1.msra.mxu0 0.0
        %1416 = vmatprep.subr.mxu0 0.0
        %1417 = vmatpush1.msra.mxu0 0.0
        %1418 = vmatprep.subr.mxu0 0.0
        %1419 = vmatpush1.msra.mxu0 0.0
        %1420 = vmatprep.mubr.f32.mxu0 0.0
        %1421 = vmatmul.mubr.f32.gmra.mrb[0].mxu0 %v1030
        %v1422 = vpop.f32.mrb[0].mxu0
        %v1423 = vadd.f32 %v1339, %v1422
        %v1424 = vpop.f32.mrb[0].mxu0
        %1425 = vdwg.mxu0
        %1426 = vmatprep.subr.mxu0 0.0
        %1427 = vmatpush1.msra.mxu0 %v1316
        %1428 = vmatprep.subr.mxu0 0.0
        %1429 = vmatpush1.msra.mxu0 %v1317
        %1430 = vmatprep.subr.mxu0 0.0
        %1431 = vmatpush1.msra.mxu0 %v1318
        %1432 = vmatprep.subr.mxu0 0.0
        %1433 = vmatpush1.msra.mxu0 %v1319
        %1434 = vmatprep.subr.mxu0 0.0
        %1435 = vmatpush1.msra.mxu0 0.0
        %1436 = vmatprep.subr.mxu0 0.0
        %1437 = vmatpush1.msra.mxu0 0.0
        %1438 = vmatprep.subr.mxu0 0.0
        %1439 = vmatpush1.msra.mxu0 0.0
        %1440 = vmatprep.subr.mxu0 0.0
        %1441 = vmatpush1.msra.mxu0 0.0
        %1442 = vmatprep.subr.mxu0 0.0
        %1443 = vmatpush1.msra.mxu0 0.0
        %1444 = vmatprep.subr.mxu0 0.0
        %1445 = vmatpush1.msra.mxu0 0.0
        %1446 = vmatprep.subr.mxu0 0.0
        %1447 = vmatpush1.msra.mxu0 0.0
        %1448 = vmatprep.subr.mxu0 0.0
        %1449 = vmatpush1.msra.mxu0 0.0
        %1450 = vmatprep.subr.mxu0 0.0
        %1451 = vmatpush1.msra.mxu0 0.0
        %1452 = vmatprep.subr.mxu0 0.0
        %1453 = vmatpush1.msra.mxu0 0.0
        %1454 = vmatprep.subr.mxu0 0.0
        %1455 = vmatpush1.msra.mxu0 0.0
        %1456 = vmatprep.subr.mxu0 0.0
        %1457 = vmatpush1.msra.mxu0 0.0
        %1458 = vmatprep.subr.mxu0 0.0
        %1459 = vmatpush1.msra.mxu0 0.0
        %1460 = vmatprep.subr.mxu0 0.0
        %1461 = vmatpush1.msra.mxu0 0.0
        %1462 = vmatprep.subr.mxu0 0.0
        %1463 = vmatpush1.msra.mxu0 0.0
        %1464 = vmatprep.subr.mxu0 0.0
        %1465 = vmatpush1.msra.mxu0 0.0
        %1466 = vmatprep.subr.mxu0 0.0
        %1467 = vmatpush1.msra.mxu0 0.0
        %1468 = vmatprep.subr.mxu0 0.0
        %1469 = vmatpush1.msra.mxu0 0.0
        %1470 = vmatprep.subr.mxu0 0.0
        %1471 = vmatpush1.msra.mxu0 0.0
        %1472 = vmatprep.subr.mxu0 0.0
        %1473 = vmatpush1.msra.mxu0 0.0
        %1474 = vmatprep.subr.mxu0 0.0
        %1475 = vmatpush1.msra.mxu0 0.0
        %1476 = vmatprep.subr.mxu0 0.0
        %1477 = vmatpush1.msra.mxu0 0.0
        %1478 = vmatprep.subr.mxu0 0.0
        %1479 = vmatpush1.msra.mxu0 0.0
        %1480 = vmatprep.subr.mxu0 0.0
        %1481 = vmatpush1.msra.mxu0 0.0
        %1482 = vmatprep.subr.mxu0 0.0
        %1483 = vmatpush1.msra.mxu0 0.0
        %1484 = vmatprep.subr.mxu0 0.0
        %1485 = vmatpush1.msra.mxu0 0.0
        %1486 = vmatprep.subr.mxu0 0.0
        %1487 = vmatpush1.msra.mxu0 0.0
        %1488 = vmatprep.subr.mxu0 0.0
        %1489 = vmatpush1.msra.mxu0 0.0
        %1490 = vmatprep.mubr.f32.mxu0 0.0
        %1491 = vmatmul.mubr.f32.gmra.mrb[0].mxu0 %v1030
        %v1492 = vpop.f32.mrb[0].mxu0
        %v1493 = vadd.f32 %v1343, %v1492
        %v1494 = vpop.f32.mrb[0].mxu0
        %1495 = vdwg.mxu0
        %1496 = vmatprep.subr.mxu0 0.0
        %1497 = vmatpush1.msra.mxu0 %v1320
        %1498 = vmatprep.subr.mxu0 0.0
        %1499 = vmatpush1.msra.mxu0 %v1321
        %1500 = vmatprep.subr.mxu0 0.0
        %1501 = vmatpush1.msra.mxu0 %v1322
        %1502 = vmatprep.subr.mxu0 0.0
        %1503 = vmatpush1.msra.mxu0 %v1323
        %1504 = vmatprep.subr.mxu0 0.0
        %1505 = vmatpush1.msra.mxu0 0.0
        %1506 = vmatprep.subr.mxu0 0.0
        %1507 = vmatpush1.msra.mxu0 0.0
        %1508 = vmatprep.subr.mxu0 0.0
        %1509 = vmatpush1.msra.mxu0 0.0
        %1510 = vmatprep.subr.mxu0 0.0
        %1511 = vmatpush1.msra.mxu0 0.0
        %1512 = vmatprep.subr.mxu0 0.0
        %1513 = vmatpush1.msra.mxu0 0.0
        %1514 = vmatprep.subr.mxu0 0.0
        %1515 = vmatpush1.msra.mxu0 0.0
        %1516 = vmatprep.subr.mxu0 0.0
        %1517 = vmatpush1.msra.mxu0 0.0
        %1518 = vmatprep.subr.mxu0 0.0
        %1519 = vmatpush1.msra.mxu0 0.0
        %1520 = vmatprep.subr.mxu0 0.0
        %1521 = vmatpush1.msra.mxu0 0.0
        %1522 = vmatprep.subr.mxu0 0.0
        %1523 = vmatpush1.msra.mxu0 0.0
        %1524 = vmatprep.subr.mxu0 0.0
        %1525 = vmatpush1.msra.mxu0 0.0
        %1526 = vmatprep.subr.mxu0 0.0
        %1527 = vmatpush1.msra.mxu0 0.0
        %1528 = vmatprep.subr.mxu0 0.0
        %1529 = vmatpush1.msra.mxu0 0.0
        %1530 = vmatprep.subr.mxu0 0.0
        %1531 = vmatpush1.msra.mxu0 0.0
        %1532 = vmatprep.subr.mxu0 0.0
        %1533 = vmatpush1.msra.mxu0 0.0
        %1534 = vmatprep.subr.mxu0 0.0
        %1535 = vmatpush1.msra.mxu0 0.0
        %1536 = vmatprep.subr.mxu0 0.0
        %1537 = vmatpush1.msra.mxu0 0.0
        %1538 = vmatprep.subr.mxu0 0.0
        %1539 = vmatpush1.msra.mxu0 0.0
        %1540 = vmatprep.subr.mxu0 0.0
        %1541 = vmatpush1.msra.mxu0 0.0
        %1542 = vmatprep.subr.mxu0 0.0
        %1543 = vmatpush1.msra.mxu0 0.0
        %1544 = vmatprep.subr.mxu0 0.0
        %1545 = vmatpush1.msra.mxu0 0.0
        %1546 = vmatprep.subr.mxu0 0.0
        %1547 = vmatpush1.msra.mxu0 0.0
        %1548 = vmatprep.subr.mxu0 0.0
        %1549 = vmatpush1.msra.mxu0 0.0
        %1550 = vmatprep.subr.mxu0 0.0
        %1551 = vmatpush1.msra.mxu0 0.0
        %1552 = vmatprep.subr.mxu0 0.0
        %1553 = vmatpush1.msra.mxu0 0.0
        %1554 = vmatprep.subr.mxu0 0.0
        %1555 = vmatpush1.msra.mxu0 0.0
        %1556 = vmatprep.subr.mxu0 0.0
        %1557 = vmatpush1.msra.mxu0 0.0
        %1558 = vmatprep.subr.mxu0 0.0
        %1559 = vmatpush1.msra.mxu0 0.0
        %1560 = vmatprep.mubr.f32.mxu0 0.0
        %1561 = vmatmul.mubr.f32.gmra.mrb[0].mxu0 %v1030
        %v1562 = vpop.f32.mrb[0].mxu0
        %v1563 = vadd.f32 %v1347, %v1562
        %v1564 = vpop.f32.mrb[0].mxu0
        %1565 = vdwg.mxu0
        %1566 = vmatprep.subr.mxu0 0.0
        %1567 = vmatpush1.msra.mxu0 %v1324
        %1568 = vmatprep.subr.mxu0 0.0
        %1569 = vmatpush1.msra.mxu0 %v1325
        %1570 = vmatprep.subr.mxu0 0.0
        %1571 = vmatpush1.msra.mxu0 %v1326
        %1572 = vmatprep.subr.mxu0 0.0
        %1573 = vmatpush1.msra.mxu0 %v1327
        %1574 = vmatprep.subr.mxu0 0.0
        %1575 = vmatpush1.msra.mxu0 0.0
        %1576 = vmatprep.subr.mxu0 0.0
        %1577 = vmatpush1.msra.mxu0 0.0
        %1578 = vmatprep.subr.mxu0 0.0
        %1579 = vmatpush1.msra.mxu0 0.0
        %1580 = vmatprep.subr.mxu0 0.0
        %1581 = vmatpush1.msra.mxu0 0.0
        %1582 = vmatprep.subr.mxu0 0.0
        %1583 = vmatpush1.msra.mxu0 0.0
        %1584 = vmatprep.subr.mxu0 0.0
        %1585 = vmatpush1.msra.mxu0 0.0
        %1586 = vmatprep.subr.mxu0 0.0
        %1587 = vmatpush1.msra.mxu0 0.0
        %1588 = vmatprep.subr.mxu0 0.0
        %1589 = vmatpush1.msra.mxu0 0.0
        %1590 = vmatprep.subr.mxu0 0.0
        %1591 = vmatpush1.msra.mxu0 0.0
        %1592 = vmatprep.subr.mxu0 0.0
        %1593 = vmatpush1.msra.mxu0 0.0
        %1594 = vmatprep.subr.mxu0 0.0
        %1595 = vmatpush1.msra.mxu0 0.0
        %1596 = vmatprep.subr.mxu0 0.0
        %1597 = vmatpush1.msra.mxu0 0.0
        %1598 = vmatprep.subr.mxu0 0.0
        %1599 = vmatpush1.msra.mxu0 0.0
        %1600 = vmatprep.subr.mxu0 0.0
        %1601 = vmatpush1.msra.mxu0 0.0
        %1602 = vmatprep.subr.mxu0 0.0
        %1603 = vmatpush1.msra.mxu0 0.0
        %1604 = vmatprep.subr.mxu0 0.0
        %1605 = vmatpush1.msra.mxu0 0.0
        %1606 = vmatprep.subr.mxu0 0.0
        %1607 = vmatpush1.msra.mxu0 0.0
        %1608 = vmatprep.subr.mxu0 0.0
        %1609 = vmatpush1.msra.mxu0 0.0
        %1610 = vmatprep.subr.mxu0 0.0
        %1611 = vmatpush1.msra.mxu0 0.0
        %1612 = vmatprep.subr.mxu0 0.0
        %1613 = vmatpush1.msra.mxu0 0.0
        %1614 = vmatprep.subr.mxu0 0.0
        %1615 = vmatpush1.msra.mxu0 0.0
        %1616 = vmatprep.subr.mxu0 0.0
        %1617 = vmatpush1.msra.mxu0 0.0
        %1618 = vmatprep.subr.mxu0 0.0
        %1619 = vmatpush1.msra.mxu0 0.0
        %1620 = vmatprep.subr.mxu0 0.0
        %1621 = vmatpush1.msra.mxu0 0.0
        %1622 = vmatprep.subr.mxu0 0.0
        %1623 = vmatpush1.msra.mxu0 0.0
        %1624 = vmatprep.subr.mxu0 0.0
        %1625 = vmatpush1.msra.mxu0 0.0
        %1626 = vmatprep.subr.mxu0 0.0
        %1627 = vmatpush1.msra.mxu0 0.0
        %1628 = vmatprep.subr.mxu0 0.0
        %1629 = vmatpush1.msra.mxu0 0.0
        %1630 = vmatprep.mubr.f32.mxu0 0.0
        %1631 = vmatmul.mubr.f32.gmra.mrb[0].mxu0 %v1030
        %v1632 = vpop.f32.mrb[0].mxu0
        %v1633 = vadd.f32 %v1351, %v1632
        %v1634 = vpop.f32.mrb[0].mxu0
        %1635 = vdwg.mxu0
        %vm1636 = vcmask 64512
        %v1638 = vsel %vm1636, %v772, 0
        %v1641 = vsel %vm1636, %v1099, 0
        %1643 = vmatprep.subr.mxu0 0.0
        %1644 = vmatpush1.xpose.msra.mxu0 %v1641
        %1645 = vmatprep.subr.mxu0 0.0
        %1646 = vmatpush1.xpose.msra.mxu0 0.0
        %1647 = vmatprep.subr.mxu0 0.0
        %1648 = vmatpush1.xpose.msra.mxu0 0.0
        %1649 = vmatprep.subr.mxu0 0.0
        %1650 = vmatpush1.xpose.msra.mxu0 0.0
        %1651 = vmatprep.subr.mxu0 0.0
        %1652 = vmatpush1.xpose.msra.mxu0 0.0
        %1653 = vmatprep.subr.mxu0 0.0
        %1654 = vmatpush1.xpose.msra.mxu0 0.0
        %1655 = vmatprep.subr.mxu0 0.0
        %1656 = vmatpush1.xpose.msra.mxu0 0.0
        %1657 = vmatprep.subr.mxu0 0.0
        %1658 = vmatpush1.xpose.msra.mxu0 0.0
        %1659 = vmatprep.subr.mxu0 0.0
        %1660 = vmatpush1.xpose.msra.mxu0 0.0
        %1661 = vmatprep.subr.mxu0 0.0
        %1662 = vmatpush1.xpose.msra.mxu0 0.0
        %1663 = vmatprep.subr.mxu0 0.0
        %1664 = vmatpush1.xpose.msra.mxu0 0.0
        %1665 = vmatprep.subr.mxu0 0.0
        %1666 = vmatpush1.xpose.msra.mxu0 0.0
        %1667 = vmatprep.subr.mxu0 0.0
        %1668 = vmatpush1.xpose.msra.mxu0 0.0
        %1669 = vmatprep.subr.mxu0 0.0
        %1670 = vmatpush1.xpose.msra.mxu0 0.0
        %1671 = vmatprep.subr.mxu0 0.0
        %1672 = vmatpush1.xpose.msra.mxu0 0.0
        %1673 = vmatprep.subr.mxu0 0.0
        %1674 = vmatpush1.xpose.msra.mxu0 0.0
        %1675 = vmatprep.subr.mxu0 0.0
        %1676 = vmatpush1.xpose.msra.mxu0 0.0
        %1677 = vmatprep.subr.mxu0 0.0
        %1678 = vmatpush1.xpose.msra.mxu0 0.0
        %1679 = vmatprep.subr.mxu0 0.0
        %1680 = vmatpush1.xpose.msra.mxu0 0.0
        %1681 = vmatprep.subr.mxu0 0.0
        %1682 = vmatpush1.xpose.msra.mxu0 0.0
        %1683 = vmatprep.subr.mxu0 0.0
        %1684 = vmatpush1.xpose.msra.mxu0 0.0
        %1685 = vmatprep.subr.mxu0 0.0
        %1686 = vmatpush1.xpose.msra.mxu0 0.0
        %1687 = vmatprep.subr.mxu0 0.0
        %1688 = vmatpush1.xpose.msra.mxu0 0.0
        %1689 = vmatprep.subr.mxu0 0.0
        %1690 = vmatpush1.xpose.msra.mxu0 0.0
        %1691 = vmatprep.subr.mxu0 0.0
        %1692 = vmatpush1.xpose.msra.mxu0 0.0
        %1693 = vmatprep.subr.mxu0 0.0
        %1694 = vmatpush1.xpose.msra.mxu0 0.0
        %1695 = vmatprep.subr.mxu0 0.0
        %1696 = vmatpush1.xpose.msra.mxu0 0.0
        %1697 = vmatprep.subr.mxu0 0.0
        %1698 = vmatpush1.xpose.msra.mxu0 0.0
        %1699 = vmatprep.subr.mxu0 0.0
        %1700 = vmatpush1.xpose.msra.mxu0 0.0
        %1701 = vmatprep.subr.mxu0 0.0
        %1702 = vmatpush1.xpose.msra.mxu0 0.0
        %1703 = vmatprep.subr.mxu0 0.0
        %1704 = vmatpush1.xpose.msra.mxu0 0.0
        %1705 = vmatprep.subr.mxu0 0.0
        %1706 = vmatpush1.xpose.msra.mxu0 0.0
        %1707 = vmatprep.mubr.f32.mxu0 0.0
        %1708 = vmatmul.mubr.f32.gmra.mrb[0].mxu0 %v1638
        %v1709 = vpop.f32.mrb[0].mxu0
        %v1710 = vadd.f32 0.0, %v1709
        %v1711 = vpop.f32.mrb[0].mxu0
        %1712 = vdwg.mxu0
        %v1714 = vsel %vm1636, %v842, 0
        %v1717 = vsel %vm1636, %v1169, 0
        %1719 = vmatprep.subr.mxu0 0.0
        %1720 = vmatpush1.xpose.msra.mxu0 %v1717
        %1721 = vmatprep.subr.mxu0 0.0
        %1722 = vmatpush1.xpose.msra.mxu0 0.0
        %1723 = vmatprep.subr.mxu0 0.0
        %1724 = vmatpush1.xpose.msra.mxu0 0.0
        %1725 = vmatprep.subr.mxu0 0.0
        %1726 = vmatpush1.xpose.msra.mxu0 0.0
        %1727 = vmatprep.subr.mxu0 0.0
        %1728 = vmatpush1.xpose.msra.mxu0 0.0
        %1729 = vmatprep.subr.mxu0 0.0
        %1730 = vmatpush1.xpose.msra.mxu0 0.0
        %1731 = vmatprep.subr.mxu0 0.0
        %1732 = vmatpush1.xpose.msra.mxu0 0.0
        %1733 = vmatprep.subr.mxu0 0.0
        %1734 = vmatpush1.xpose.msra.mxu0 0.0
        %1735 = vmatprep.subr.mxu0 0.0
        %1736 = vmatpush1.xpose.msra.mxu0 0.0
        %1737 = vmatprep.subr.mxu0 0.0
        %1738 = vmatpush1.xpose.msra.mxu0 0.0
        %1739 = vmatprep.subr.mxu0 0.0
        %1740 = vmatpush1.xpose.msra.mxu0 0.0
        %1741 = vmatprep.subr.mxu0 0.0
        %1742 = vmatpush1.xpose.msra.mxu0 0.0
        %1743 = vmatprep.subr.mxu0 0.0
        %1744 = vmatpush1.xpose.msra.mxu0 0.0
        %1745 = vmatprep.subr.mxu0 0.0
        %1746 = vmatpush1.xpose.msra.mxu0 0.0
        %1747 = vmatprep.subr.mxu0 0.0
        %1748 = vmatpush1.xpose.msra.mxu0 0.0
        %1749 = vmatprep.subr.mxu0 0.0
        %1750 = vmatpush1.xpose.msra.mxu0 0.0
        %1751 = vmatprep.subr.mxu0 0.0
        %1752 = vmatpush1.xpose.msra.mxu0 0.0
        %1753 = vmatprep.subr.mxu0 0.0
        %1754 = vmatpush1.xpose.msra.mxu0 0.0
        %1755 = vmatprep.subr.mxu0 0.0
        %1756 = vmatpush1.xpose.msra.mxu0 0.0
        %1757 = vmatprep.subr.mxu0 0.0
        %1758 = vmatpush1.xpose.msra.mxu0 0.0
        %1759 = vmatprep.subr.mxu0 0.0
        %1760 = vmatpush1.xpose.msra.mxu0 0.0
        %1761 = vmatprep.subr.mxu0 0.0
        %1762 = vmatpush1.xpose.msra.mxu0 0.0
        %1763 = vmatprep.subr.mxu0 0.0
        %1764 = vmatpush1.xpose.msra.mxu0 0.0
        %1765 = vmatprep.subr.mxu0 0.0
        %1766 = vmatpush1.xpose.msra.mxu0 0.0
        %1767 = vmatprep.subr.mxu0 0.0
        %1768 = vmatpush1.xpose.msra.mxu0 0.0
        %1769 = vmatprep.subr.mxu0 0.0
        %1770 = vmatpush1.xpose.msra.mxu0 0.0
        %1771 = vmatprep.subr.mxu0 0.0
        %1772 = vmatpush1.xpose.msra.mxu0 0.0
        %1773 = vmatprep.subr.mxu0 0.0
        %1774 = vmatpush1.xpose.msra.mxu0 0.0
        %1775 = vmatprep.subr.mxu0 0.0
        %1776 = vmatpush1.xpose.msra.mxu0 0.0
        %1777 = vmatprep.subr.mxu0 0.0
        %1778 = vmatpush1.xpose.msra.mxu0 0.0
        %1779 = vmatprep.subr.mxu0 0.0
        %1780 = vmatpush1.xpose.msra.mxu0 0.0
        %1781 = vmatprep.subr.mxu0 0.0
        %1782 = vmatpush1.xpose.msra.mxu0 0.0
        %1783 = vmatprep.mubr.f32.mxu0 0.0
        %1784 = vmatmul.mubr.f32.gmra.mrb[0].mxu0 %v1714
        %v1785 = vpop.f32.mrb[0].mxu0
        %v1786 = vadd.f32 0.0, %v1785
        %v1787 = vpop.f32.mrb[0].mxu0
        %1788 = vdwg.mxu0
        %v1790 = vsel %vm1636, %v912, 0
        %v1793 = vsel %vm1636, %v1239, 0
        %1795 = vmatprep.subr.mxu0 0.0
        %1796 = vmatpush1.xpose.msra.mxu0 %v1793
        %1797 = vmatprep.subr.mxu0 0.0
        %1798 = vmatpush1.xpose.msra.mxu0 0.0
        %1799 = vmatprep.subr.mxu0 0.0
        %1800 = vmatpush1.xpose.msra.mxu0 0.0
        %1801 = vmatprep.subr.mxu0 0.0
        %1802 = vmatpush1.xpose.msra.mxu0 0.0
        %1803 = vmatprep.subr.mxu0 0.0
        %1804 = vmatpush1.xpose.msra.mxu0 0.0
        %1805 = vmatprep.subr.mxu0 0.0
        %1806 = vmatpush1.xpose.msra.mxu0 0.0
        %1807 = vmatprep.subr.mxu0 0.0
        %1808 = vmatpush1.xpose.msra.mxu0 0.0
        %1809 = vmatprep.subr.mxu0 0.0
        %1810 = vmatpush1.xpose.msra.mxu0 0.0
        %1811 = vmatprep.subr.mxu0 0.0
        %1812 = vmatpush1.xpose.msra.mxu0 0.0
        %1813 = vmatprep.subr.mxu0 0.0
        %1814 = vmatpush1.xpose.msra.mxu0 0.0
        %1815 = vmatprep.subr.mxu0 0.0
        %1816 = vmatpush1.xpose.msra.mxu0 0.0
        %1817 = vmatprep.subr.mxu0 0.0
        %1818 = vmatpush1.xpose.msra.mxu0 0.0
        %1819 = vmatprep.subr.mxu0 0.0
        %1820 = vmatpush1.xpose.msra.mxu0 0.0
        %1821 = vmatprep.subr.mxu0 0.0
        %1822 = vmatpush1.xpose.msra.mxu0 0.0
        %1823 = vmatprep.subr.mxu0 0.0
        %1824 = vmatpush1.xpose.msra.mxu0 0.0
        %1825 = vmatprep.subr.mxu0 0.0
        %1826 = vmatpush1.xpose.msra.mxu0 0.0
        %1827 = vmatprep.subr.mxu0 0.0
        %1828 = vmatpush1.xpose.msra.mxu0 0.0
        %1829 = vmatprep.subr.mxu0 0.0
        %1830 = vmatpush1.xpose.msra.mxu0 0.0
        %1831 = vmatprep.subr.mxu0 0.0
        %1832 = vmatpush1.xpose.msra.mxu0 0.0
        %1833 = vmatprep.subr.mxu0 0.0
        %1834 = vmatpush1.xpose.msra.mxu0 0.0
        %1835 = vmatprep.subr.mxu0 0.0
        %1836 = vmatpush1.xpose.msra.mxu0 0.0
        %1837 = vmatprep.subr.mxu0 0.0
        %1838 = vmatpush1.xpose.msra.mxu0 0.0
        %1839 = vmatprep.subr.mxu0 0.0
        %1840 = vmatpush1.xpose.msra.mxu0 0.0
        %1841 = vmatprep.subr.mxu0 0.0
        %1842 = vmatpush1.xpose.msra.mxu0 0.0
        %1843 = vmatprep.subr.mxu0 0.0
        %1844 = vmatpush1.xpose.msra.mxu0 0.0
        %1845 = vmatprep.subr.mxu0 0.0
        %1846 = vmatpush1.xpose.msra.mxu0 0.0
        %1847 = vmatprep.subr.mxu0 0.0
        %1848 = vmatpush1.xpose.msra.mxu0 0.0
        %1849 = vmatprep.subr.mxu0 0.0
        %1850 = vmatpush1.xpose.msra.mxu0 0.0
        %1851 = vmatprep.subr.mxu0 0.0
        %1852 = vmatpush1.xpose.msra.mxu0 0.0
        %1853 = vmatprep.subr.mxu0 0.0
        %1854 = vmatpush1.xpose.msra.mxu0 0.0
        %1855 = vmatprep.subr.mxu0 0.0
        %1856 = vmatpush1.xpose.msra.mxu0 0.0
        %1857 = vmatprep.subr.mxu0 0.0
        %1858 = vmatpush1.xpose.msra.mxu0 0.0
        %1859 = vmatprep.mubr.f32.mxu0 0.0
        %1860 = vmatmul.mubr.f32.gmra.mrb[0].mxu0 %v1790
        %v1861 = vpop.f32.mrb[0].mxu0
        %v1862 = vadd.f32 0.0, %v1861
        %v1863 = vpop.f32.mrb[0].mxu0
        %1864 = vdwg.mxu0
        %v1866 = vsel %vm1636, %v982, 0
        %v1869 = vsel %vm1636, %v1309, 0
        %1871 = vmatprep.subr.mxu0 0.0
        %1872 = vmatpush1.xpose.msra.mxu0 %v1869
        %1873 = vmatprep.subr.mxu0 0.0
        %1874 = vmatpush1.xpose.msra.mxu0 0.0
        %1875 = vmatprep.subr.mxu0 0.0
        %1876 = vmatpush1.xpose.msra.mxu0 0.0
        %1877 = vmatprep.subr.mxu0 0.0
        %1878 = vmatpush1.xpose.msra.mxu0 0.0
        %1879 = vmatprep.subr.mxu0 0.0
        %1880 = vmatpush1.xpose.msra.mxu0 0.0
        %1881 = vmatprep.subr.mxu0 0.0
        %1882 = vmatpush1.xpose.msra.mxu0 0.0
        %1883 = vmatprep.subr.mxu0 0.0
        %1884 = vmatpush1.xpose.msra.mxu0 0.0
        %1885 = vmatprep.subr.mxu0 0.0
        %1886 = vmatpush1.xpose.msra.mxu0 0.0
        %1887 = vmatprep.subr.mxu0 0.0
        %1888 = vmatpush1.xpose.msra.mxu0 0.0
        %1889 = vmatprep.subr.mxu0 0.0
        %1890 = vmatpush1.xpose.msra.mxu0 0.0
        %1891 = vmatprep.subr.mxu0 0.0
        %1892 = vmatpush1.xpose.msra.mxu0 0.0
        %1893 = vmatprep.subr.mxu0 0.0
        %1894 = vmatpush1.xpose.msra.mxu0 0.0
        %1895 = vmatprep.subr.mxu0 0.0
        %1896 = vmatpush1.xpose.msra.mxu0 0.0
        %1897 = vmatprep.subr.mxu0 0.0
        %1898 = vmatpush1.xpose.msra.mxu0 0.0
        %1899 = vmatprep.subr.mxu0 0.0
        %1900 = vmatpush1.xpose.msra.mxu0 0.0
        %1901 = vmatprep.subr.mxu0 0.0
        %1902 = vmatpush1.xpose.msra.mxu0 0.0
        %1903 = vmatprep.subr.mxu0 0.0
        %1904 = vmatpush1.xpose.msra.mxu0 0.0
        %1905 = vmatprep.subr.mxu0 0.0
        %1906 = vmatpush1.xpose.msra.mxu0 0.0
        %1907 = vmatprep.subr.mxu0 0.0
        %1908 = vmatpush1.xpose.msra.mxu0 0.0
        %1909 = vmatprep.subr.mxu0 0.0
        %1910 = vmatpush1.xpose.msra.mxu0 0.0
        %1911 = vmatprep.subr.mxu0 0.0
        %1912 = vmatpush1.xpose.msra.mxu0 0.0
        %1913 = vmatprep.subr.mxu0 0.0
        %1914 = vmatpush1.xpose.msra.mxu0 0.0
        %1915 = vmatprep.subr.mxu0 0.0
        %1916 = vmatpush1.xpose.msra.mxu0 0.0
        %1917 = vmatprep.subr.mxu0 0.0
        %1918 = vmatpush1.xpose.msra.mxu0 0.0
        %1919 = vmatprep.subr.mxu0 0.0
        %1920 = vmatpush1.xpose.msra.mxu0 0.0
        %1921 = vmatprep.subr.mxu0 0.0
        %1922 = vmatpush1.xpose.msra.mxu0 0.0
        %1923 = vmatprep.subr.mxu0 0.0
        %1924 = vmatpush1.xpose.msra.mxu0 0.0
        %1925 = vmatprep.subr.mxu0 0.0
        %1926 = vmatpush1.xpose.msra.mxu0 0.0
        %1927 = vmatprep.subr.mxu0 0.0
        %1928 = vmatpush1.xpose.msra.mxu0 0.0
        %1929 = vmatprep.subr.mxu0 0.0
        %1930 = vmatpush1.xpose.msra.mxu0 0.0
        %1931 = vmatprep.subr.mxu0 0.0
        %1932 = vmatpush1.xpose.msra.mxu0 0.0
        %1933 = vmatprep.subr.mxu0 0.0
        %1934 = vmatpush1.xpose.msra.mxu0 0.0
        %1935 = vmatprep.mubr.f32.mxu0 0.0
        %1936 = vmatmul.mubr.f32.gmra.mrb[0].mxu0 %v1866
        %v1937 = vpop.f32.mrb[0].mxu0
        %v1938 = vadd.f32 0.0, %v1937
        %v1939 = vpop.f32.mrb[0].mxu0
        %1940 = vdwg.mxu0
        %vm1941 = vcmp.eq.s32.totalorder %v656, 0
        %v1942 = vsel %vm1941, 1, 0
        %v1943 = vlaneseq
        %v1944 = vshrl.u32 %v1943, 7
        %v1945 = vsub.s32 0, %v1944
        %v1946 = vrot.slane %v1942, %v1945
        %vm1947 = vcmp.eq.s32.totalorder %v1946, 1
        %v1948 = vsel %vm1947, -1e+10, %v1710
        %v1949 = vsel %vm1947, -1e+10, %v1786
        %v1950 = vsel %vm1947, -1e+10, %v1862
        %v1951 = vsel %vm1947, -1e+10, %v1938
        %v1952 = vmul.f32 %v1948, 0.35355338
        %v1953 = vmul.f32 %v1949, 0.35355338
        %v1954 = vmul.f32 %v1950, 0.35355338
        %v1955 = vmul.f32 %v1951, 0.35355338
        %v1956 = vsel %vm1636, %v1952, -inf
        %1957 = vmax.xlane.f32.xlu0 %v1956
        %v1958 = vpop.xlane.xlu0 %1957
        %v1959 = vsel %vm1636, %v1953, -inf
        %1960 = vmax.xlane.f32.xlu0 %v1959
        %v1961 = vpop.xlane.xlu0 %1960
        %v1962 = vsel %vm1636, %v1954, -inf
        %1963 = vmax.xlane.f32.xlu0 %v1962
        %v1964 = vpop.xlane.xlu0 %1963
        %v1965 = vsel %vm1636, %v1955, -inf
        %1966 = vmax.xlane.f32.xlu0 %v1965
        %v1967 = vpop.xlane.xlu0 %1966
        %v1968 = vsub.f32 %v1952, %v1958
        %v1969 = vsub.f32 %v1953, %v1961
        %v1970 = vsub.f32 %v1954, %v1964
        %v1971 = vsub.f32 %v1955, %v1967
        %v1972 = vmul.f32 %v1968, 1.442695
        %v1973 = vpow.pop %v1972
        %v1974 = vmul.f32 %v1969, 1.442695
        %v1975 = vpow.pop %v1974
        %v1976 = vmul.f32 %v1970, 1.442695
        %v1977 = vpow.pop %v1976
        %v1978 = vmul.f32 %v1971, 1.442695
        %v1979 = vpow.pop %v1978
        %v1980 = vsel %vm1636, %v1973, 0.0
        %1981 = vadd.xlane.f32.xlu0 %v1980
        %v1982 = vpop.xlane.xlu0 %1981
        %v1983 = vsel %vm1636, %v1975, 0.0
        %1984 = vadd.xlane.f32.xlu0 %v1983
        %v1985 = vpop.xlane.xlu0 %1984
        %v1986 = vsel %vm1636, %v1977, 0.0
        %1987 = vadd.xlane.f32.xlu0 %v1986
        %v1988 = vpop.xlane.xlu0 %1987
        %v1989 = vsel %vm1636, %v1979, 0.0
        %1990 = vadd.xlane.f32.xlu0 %v1989
        %v1991 = vpop.xlane.xlu0 %1990
        %v1992 = vrcp.pop %v1982
        %v1993 = vmul.f32 %v1973, %v1992
        %v1994 = vrcp.pop %v1985
        %v1995 = vmul.f32 %v1975, %v1994
        %v1996 = vrcp.pop %v1988
        %v1997 = vmul.f32 %v1977, %v1996
        %v1998 = vrcp.pop %v1991
        %v1999 = vmul.f32 %v1979, %v1998
        %v2001 = vsel %vm1636, %v1993, 0
        %2003 = vmatprep.subr.mxu0 0.0
        %2004 = vmatpush1.msra.mxu0 %v1423
        %2005 = vmatprep.subr.mxu0 0.0
        %2006 = vmatpush1.msra.mxu0 0.0
        %2007 = vmatprep.subr.mxu0 0.0
        %2008 = vmatpush1.msra.mxu0 0.0
        %2009 = vmatprep.subr.mxu0 0.0
        %2010 = vmatpush1.msra.mxu0 0.0
        %2011 = vmatprep.subr.mxu0 0.0
        %2012 = vmatpush1.msra.mxu0 0.0
        %2013 = vmatprep.subr.mxu0 0.0
        %2014 = vmatpush1.msra.mxu0 0.0
        %2015 = vmatprep.subr.mxu0 0.0
        %2016 = vmatpush1.msra.mxu0 0.0
        %2017 = vmatprep.subr.mxu0 0.0
        %2018 = vmatpush1.msra.mxu0 0.0
        %2019 = vmatprep.subr.mxu0 0.0
        %2020 = vmatpush1.msra.mxu0 0.0
        %2021 = vmatprep.subr.mxu0 0.0
        %2022 = vmatpush1.msra.mxu0 0.0
        %2023 = vmatprep.subr.mxu0 0.0
        %2024 = vmatpush1.msra.mxu0 0.0
        %2025 = vmatprep.subr.mxu0 0.0
        %2026 = vmatpush1.msra.mxu0 0.0
        %2027 = vmatprep.subr.mxu0 0.0
        %2028 = vmatpush1.msra.mxu0 0.0
        %2029 = vmatprep.subr.mxu0 0.0
        %2030 = vmatpush1.msra.mxu0 0.0
        %2031 = vmatprep.subr.mxu0 0.0
        %2032 = vmatpush1.msra.mxu0 0.0
        %2033 = vmatprep.subr.mxu0 0.0
        %2034 = vmatpush1.msra.mxu0 0.0
        %2035 = vmatprep.subr.mxu0 0.0
        %2036 = vmatpush1.msra.mxu0 0.0
        %2037 = vmatprep.subr.mxu0 0.0
        %2038 = vmatpush1.msra.mxu0 0.0
        %2039 = vmatprep.subr.mxu0 0.0
        %2040 = vmatpush1.msra.mxu0 0.0
        %2041 = vmatprep.subr.mxu0 0.0
        %2042 = vmatpush1.msra.mxu0 0.0
        %2043 = vmatprep.subr.mxu0 0.0
        %2044 = vmatpush1.msra.mxu0 0.0
        %2045 = vmatprep.subr.mxu0 0.0
        %2046 = vmatpush1.msra.mxu0 0.0
        %2047 = vmatprep.subr.mxu0 0.0
        %2048 = vmatpush1.msra.mxu0 0.0
        %2049 = vmatprep.subr.mxu0 0.0
        %2050 = vmatpush1.msra.mxu0 0.0
        %2051 = vmatprep.subr.mxu0 0.0
        %2052 = vmatpush1.msra.mxu0 0.0
        %2053 = vmatprep.subr.mxu0 0.0
        %2054 = vmatpush1.msra.mxu0 0.0
        %2055 = vmatprep.subr.mxu0 0.0
        %2056 = vmatpush1.msra.mxu0 0.0
        %2057 = vmatprep.subr.mxu0 0.0
        %2058 = vmatpush1.msra.mxu0 0.0
        %2059 = vmatprep.subr.mxu0 0.0
        %2060 = vmatpush1.msra.mxu0 0.0
        %2061 = vmatprep.subr.mxu0 0.0
        %2062 = vmatpush1.msra.mxu0 0.0
        %2063 = vmatprep.subr.mxu0 0.0
        %2064 = vmatpush1.msra.mxu0 0.0
        %2065 = vmatprep.subr.mxu0 0.0
        %2066 = vmatpush1.msra.mxu0 0.0
        %2067 = vmatprep.mubr.f32.mxu0 0.0
        %2068 = vmatmul.mubr.f32.gmra.mrb[0].mxu0 %v2001
        %v2069 = vpop.f32.mrb[0].mxu0
        %v2070 = vadd.f32 0.0, %v2069
        %v2071 = vpop.f32.mrb[0].mxu0
        %2072 = vdwg.mxu0
        %v2074 = vsel %vm1636, %v1995, 0
        %2076 = vmatprep.subr.mxu0 0.0
        %2077 = vmatpush1.msra.mxu0 %v1493
        %2078 = vmatprep.subr.mxu0 0.0
        %2079 = vmatpush1.msra.mxu0 0.0
        %2080 = vmatprep.subr.mxu0 0.0
        %2081 = vmatpush1.msra.mxu0 0.0
        %2082 = vmatprep.subr.mxu0 0.0
        %2083 = vmatpush1.msra.mxu0 0.0
        %2084 = vmatprep.subr.mxu0 0.0
        %2085 = vmatpush1.msra.mxu0 0.0
        %2086 = vmatprep.subr.mxu0 0.0
        %2087 = vmatpush1.msra.mxu0 0.0
        %2088 = vmatprep.subr.mxu0 0.0
        %2089 = vmatpush1.msra.mxu0 0.0
        %2090 = vmatprep.subr.mxu0 0.0
        %2091 = vmatpush1.msra.mxu0 0.0
        %2092 = vmatprep.subr.mxu0 0.0
        %2093 = vmatpush1.msra.mxu0 0.0
        %2094 = vmatprep.subr.mxu0 0.0
        %2095 = vmatpush1.msra.mxu0 0.0
        %2096 = vmatprep.subr.mxu0 0.0
        %2097 = vmatpush1.msra.mxu0 0.0
        %2098 = vmatprep.subr.mxu0 0.0
        %2099 = vmatpush1.msra.mxu0 0.0
        %2100 = vmatprep.subr.mxu0 0.0
        %2101 = vmatpush1.msra.mxu0 0.0
        %2102 = vmatprep.subr.mxu0 0.0
        %2103 = vmatpush1.msra.mxu0 0.0
        %2104 = vmatprep.subr.mxu0 0.0
        %2105 = vmatpush1.msra.mxu0 0.0
        %2106 = vmatprep.subr.mxu0 0.0
        %2107 = vmatpush1.msra.mxu0 0.0
        %2108 = vmatprep.subr.mxu0 0.0
        %2109 = vmatpush1.msra.mxu0 0.0
        %2110 = vmatprep.subr.mxu0 0.0
        %2111 = vmatpush1.msra.mxu0 0.0
        %2112 = vmatprep.subr.mxu0 0.0
        %2113 = vmatpush1.msra.mxu0 0.0
        %2114 = vmatprep.subr.mxu0 0.0
        %2115 = vmatpush1.msra.mxu0 0.0
        %2116 = vmatprep.subr.mxu0 0.0
        %2117 = vmatpush1.msra.mxu0 0.0
        %2118 = vmatprep.subr.mxu0 0.0
        %2119 = vmatpush1.msra.mxu0 0.0
        %2120 = vmatprep.subr.mxu0 0.0
        %2121 = vmatpush1.msra.mxu0 0.0
        %2122 = vmatprep.subr.mxu0 0.0
        %2123 = vmatpush1.msra.mxu0 0.0
        %2124 = vmatprep.subr.mxu0 0.0
        %2125 = vmatpush1.msra.mxu0 0.0
        %2126 = vmatprep.subr.mxu0 0.0
        %2127 = vmatpush1.msra.mxu0 0.0
        %2128 = vmatprep.subr.mxu0 0.0
        %2129 = vmatpush1.msra.mxu0 0.0
        %2130 = vmatprep.subr.mxu0 0.0
        %2131 = vmatpush1.msra.mxu0 0.0
        %2132 = vmatprep.subr.mxu0 0.0
        %2133 = vmatpush1.msra.mxu0 0.0
        %2134 = vmatprep.subr.mxu0 0.0
        %2135 = vmatpush1.msra.mxu0 0.0
        %2136 = vmatprep.subr.mxu0 0.0
        %2137 = vmatpush1.msra.mxu0 0.0
        %2138 = vmatprep.subr.mxu0 0.0
        %2139 = vmatpush1.msra.mxu0 0.0
        %2140 = vmatprep.mubr.f32.mxu0 0.0
        %2141 = vmatmul.mubr.f32.gmra.mrb[0].mxu0 %v2074
        %v2142 = vpop.f32.mrb[0].mxu0
        %v2143 = vadd.f32 0.0, %v2142
        %v2144 = vpop.f32.mrb[0].mxu0
        %2145 = vdwg.mxu0
        %v2147 = vsel %vm1636, %v1997, 0
        %2149 = vmatprep.subr.mxu0 0.0
        %2150 = vmatpush1.msra.mxu0 %v1563
        %2151 = vmatprep.subr.mxu0 0.0
        %2152 = vmatpush1.msra.mxu0 0.0
        %2153 = vmatprep.subr.mxu0 0.0
        %2154 = vmatpush1.msra.mxu0 0.0
        %2155 = vmatprep.subr.mxu0 0.0
        %2156 = vmatpush1.msra.mxu0 0.0
        %2157 = vmatprep.subr.mxu0 0.0
        %2158 = vmatpush1.msra.mxu0 0.0
        %2159 = vmatprep.subr.mxu0 0.0
        %2160 = vmatpush1.msra.mxu0 0.0
        %2161 = vmatprep.subr.mxu0 0.0
        %2162 = vmatpush1.msra.mxu0 0.0
        %2163 = vmatprep.subr.mxu0 0.0
        %2164 = vmatpush1.msra.mxu0 0.0
        %2165 = vmatprep.subr.mxu0 0.0
        %2166 = vmatpush1.msra.mxu0 0.0
        %2167 = vmatprep.subr.mxu0 0.0
        %2168 = vmatpush1.msra.mxu0 0.0
        %2169 = vmatprep.subr.mxu0 0.0
        %2170 = vmatpush1.msra.mxu0 0.0
        %2171 = vmatprep.subr.mxu0 0.0
        %2172 = vmatpush1.msra.mxu0 0.0
        %2173 = vmatprep.subr.mxu0 0.0
        %2174 = vmatpush1.msra.mxu0 0.0
        %2175 = vmatprep.subr.mxu0 0.0
        %2176 = vmatpush1.msra.mxu0 0.0
        %2177 = vmatprep.subr.mxu0 0.0
        %2178 = vmatpush1.msra.mxu0 0.0
        %2179 = vmatprep.subr.mxu0 0.0
        %2180 = vmatpush1.msra.mxu0 0.0
        %2181 = vmatprep.subr.mxu0 0.0
        %2182 = vmatpush1.msra.mxu0 0.0
        %2183 = vmatprep.subr.mxu0 0.0
        %2184 = vmatpush1.msra.mxu0 0.0
        %2185 = vmatprep.subr.mxu0 0.0
        %2186 = vmatpush1.msra.mxu0 0.0
        %2187 = vmatprep.subr.mxu0 0.0
        %2188 = vmatpush1.msra.mxu0 0.0
        %2189 = vmatprep.subr.mxu0 0.0
        %2190 = vmatpush1.msra.mxu0 0.0
        %2191 = vmatprep.subr.mxu0 0.0
        %2192 = vmatpush1.msra.mxu0 0.0
        %2193 = vmatprep.subr.mxu0 0.0
        %2194 = vmatpush1.msra.mxu0 0.0
        %2195 = vmatprep.subr.mxu0 0.0
        %2196 = vmatpush1.msra.mxu0 0.0
        %2197 = vmatprep.subr.mxu0 0.0
        %2198 = vmatpush1.msra.mxu0 0.0
        %2199 = vmatprep.subr.mxu0 0.0
        %2200 = vmatpush1.msra.mxu0 0.0
        %2201 = vmatprep.subr.mxu0 0.0
        %2202 = vmatpush1.msra.mxu0 0.0
        %2203 = vmatprep.subr.mxu0 0.0
        %2204 = vmatpush1.msra.mxu0 0.0
        %2205 = vmatprep.subr.mxu0 0.0
        %2206 = vmatpush1.msra.mxu0 0.0
        %2207 = vmatprep.subr.mxu0 0.0
        %2208 = vmatpush1.msra.mxu0 0.0
        %2209 = vmatprep.subr.mxu0 0.0
        %2210 = vmatpush1.msra.mxu0 0.0
        %2211 = vmatprep.subr.mxu0 0.0
        %2212 = vmatpush1.msra.mxu0 0.0
        %2213 = vmatprep.mubr.f32.mxu0 0.0
        %2214 = vmatmul.mubr.f32.gmra.mrb[0].mxu0 %v2147
        %v2215 = vpop.f32.mrb[0].mxu0
        %v2216 = vadd.f32 0.0, %v2215
        %v2217 = vpop.f32.mrb[0].mxu0
        %2218 = vdwg.mxu0
        %v2220 = vsel %vm1636, %v1999, 0
        %2222 = vmatprep.subr.mxu0 0.0
        %2223 = vmatpush1.msra.mxu0 %v1633
        %2224 = vmatprep.subr.mxu0 0.0
        %2225 = vmatpush1.msra.mxu0 0.0
        %2226 = vmatprep.subr.mxu0 0.0
        %2227 = vmatpush1.msra.mxu0 0.0
        %2228 = vmatprep.subr.mxu0 0.0
        %2229 = vmatpush1.msra.mxu0 0.0
        %2230 = vmatprep.subr.mxu0 0.0
        %2231 = vmatpush1.msra.mxu0 0.0
        %2232 = vmatprep.subr.mxu0 0.0
        %2233 = vmatpush1.msra.mxu0 0.0
        %2234 = vmatprep.subr.mxu0 0.0
        %2235 = vmatpush1.msra.mxu0 0.0
        %2236 = vmatprep.subr.mxu0 0.0
        %2237 = vmatpush1.msra.mxu0 0.0
        %2238 = vmatprep.subr.mxu0 0.0
        %2239 = vmatpush1.msra.mxu0 0.0
        %2240 = vmatprep.subr.mxu0 0.0
        %2241 = vmatpush1.msra.mxu0 0.0
        %2242 = vmatprep.subr.mxu0 0.0
        %2243 = vmatpush1.msra.mxu0 0.0
        %2244 = vmatprep.subr.mxu0 0.0
        %2245 = vmatpush1.msra.mxu0 0.0
        %2246 = vmatprep.subr.mxu0 0.0
        %2247 = vmatpush1.msra.mxu0 0.0
        %2248 = vmatprep.subr.mxu0 0.0
        %2249 = vmatpush1.msra.mxu0 0.0
        %2250 = vmatprep.subr.mxu0 0.0
        %2251 = vmatpush1.msra.mxu0 0.0
        %2252 = vmatprep.subr.mxu0 0.0
        %2253 = vmatpush1.msra.mxu0 0.0
        %2254 = vmatprep.subr.mxu0 0.0
        %2255 = vmatpush1.msra.mxu0 0.0
        %2256 = vmatprep.subr.mxu0 0.0
        %2257 = vmatpush1.msra.mxu0 0.0
        %2258 = vmatprep.subr.mxu0 0.0
        %2259 = vmatpush1.msra.mxu0 0.0
        %2260 = vmatprep.subr.mxu0 0.0
        %2261 = vmatpush1.msra.mxu0 0.0
        %2262 = vmatprep.subr.mxu0 0.0
        %2263 = vmatpush1.msra.mxu0 0.0
        %2264 = vmatprep.subr.mxu0 0.0
        %2265 = vmatpush1.msra.mxu0 0.0
        %2266 = vmatprep.subr.mxu0 0.0
        %2267 = vmatpush1.msra.mxu0 0.0
        %2268 = vmatprep.subr.mxu0 0.0
        %2269 = vmatpush1.msra.mxu0 0.0
        %2270 = vmatprep.subr.mxu0 0.0
        %2271 = vmatpush1.msra.mxu0 0.0
        %2272 = vmatprep.subr.mxu0 0.0
        %2273 = vmatpush1.msra.mxu0 0.0
        %2274 = vmatprep.subr.mxu0 0.0
        %2275 = vmatpush1.msra.mxu0 0.0
        %2276 = vmatprep.subr.mxu0 0.0
        %2277 = vmatpush1.msra.mxu0 0.0
        %2278 = vmatprep.subr.mxu0 0.0
        %2279 = vmatpush1.msra.mxu0 0.0
        %2280 = vmatprep.subr.mxu0 0.0
        %2281 = vmatpush1.msra.mxu0 0.0
        %2282 = vmatprep.subr.mxu0 0.0
        %2283 = vmatpush1.msra.mxu0 0.0
        %2284 = vmatprep.subr.mxu0 0.0
        %2285 = vmatpush1.msra.mxu0 0.0
        %2286 = vmatprep.mubr.f32.mxu0 0.0
        %2287 = vmatmul.mubr.f32.gmra.mrb[0].mxu0 %v2220
        %v2288 = vpop.f32.mrb[0].mxu0
        %v2289 = vadd.f32 0.0, %v2288
        %v2290 = vpop.f32.mrb[0].mxu0
        %2291 = vdwg.mxu0
        %v2292 = vld [vmem:[%s9] sm:$0xff]
        %v2293 = vld [vmem:[%s9 + $0x8] sm:$0xff]
        %v2294 = vld [vmem:[%s9 + $0x10] sm:$0xff]
        %v2295 = vld [vmem:[%s9 + $0x18] sm:$0xff]
        %v2297 = vsel %vm1636, %v2070, 0
        %2299 = vmatprep.subr.mxu0 0.0
        %2300 = vmatpush1.msra.mxu0 %v2292
        %2301 = vmatprep.subr.mxu0 0.0
        %2302 = vmatpush1.msra.mxu0 0.0
        %2303 = vmatprep.subr.mxu0 0.0
        %2304 = vmatpush1.msra.mxu0 0.0
        %2305 = vmatprep.subr.mxu0 0.0
        %2306 = vmatpush1.msra.mxu0 0.0
        %2307 = vmatprep.subr.mxu0 0.0
        %2308 = vmatpush1.msra.mxu0 0.0
        %2309 = vmatprep.subr.mxu0 0.0
        %2310 = vmatpush1.msra.mxu0 0.0
        %2311 = vmatprep.subr.mxu0 0.0
        %2312 = vmatpush1.msra.mxu0 0.0
        %2313 = vmatprep.subr.mxu0 0.0
        %2314 = vmatpush1.msra.mxu0 0.0
        %2315 = vmatprep.subr.mxu0 0.0
        %2316 = vmatpush1.msra.mxu0 0.0
        %2317 = vmatprep.subr.mxu0 0.0
        %2318 = vmatpush1.msra.mxu0 0.0
        %2319 = vmatprep.subr.mxu0 0.0
        %2320 = vmatpush1.msra.mxu0 0.0
        %2321 = vmatprep.subr.mxu0 0.0
        %2322 = vmatpush1.msra.mxu0 0.0
        %2323 = vmatprep.subr.mxu0 0.0
        %2324 = vmatpush1.msra.mxu0 0.0
        %2325 = vmatprep.subr.mxu0 0.0
        %2326 = vmatpush1.msra.mxu0 0.0
        %2327 = vmatprep.subr.mxu0 0.0
        %2328 = vmatpush1.msra.mxu0 0.0
        %2329 = vmatprep.subr.mxu0 0.0
        %2330 = vmatpush1.msra.mxu0 0.0
        %2331 = vmatprep.subr.mxu0 0.0
        %2332 = vmatpush1.msra.mxu0 0.0
        %2333 = vmatprep.subr.mxu0 0.0
        %2334 = vmatpush1.msra.mxu0 0.0
        %2335 = vmatprep.subr.mxu0 0.0
        %2336 = vmatpush1.msra.mxu0 0.0
        %2337 = vmatprep.subr.mxu0 0.0
        %2338 = vmatpush1.msra.mxu0 0.0
        %2339 = vmatprep.subr.mxu0 0.0
        %2340 = vmatpush1.msra.mxu0 0.0
        %2341 = vmatprep.subr.mxu0 0.0
        %2342 = vmatpush1.msra.mxu0 0.0
        %2343 = vmatprep.subr.mxu0 0.0
        %2344 = vmatpush1.msra.mxu0 0.0
        %2345 = vmatprep.subr.mxu0 0.0
        %2346 = vmatpush1.msra.mxu0 0.0
        %2347 = vmatprep.subr.mxu0 0.0
        %2348 = vmatpush1.msra.mxu0 0.0
        %2349 = vmatprep.subr.mxu0 0.0
        %2350 = vmatpush1.msra.mxu0 0.0
        %2351 = vmatprep.subr.mxu0 0.0
        %2352 = vmatpush1.msra.mxu0 0.0
        %2353 = vmatprep.subr.mxu0 0.0
        %2354 = vmatpush1.msra.mxu0 0.0
        %2355 = vmatprep.subr.mxu0 0.0
        %2356 = vmatpush1.msra.mxu0 0.0
        %2357 = vmatprep.subr.mxu0 0.0
        %2358 = vmatpush1.msra.mxu0 0.0
        %2359 = vmatprep.subr.mxu0 0.0
        %2360 = vmatpush1.msra.mxu0 0.0
        %2361 = vmatprep.subr.mxu0 0.0
        %2362 = vmatpush1.msra.mxu0 0.0
        %2363 = vmatprep.mubr.f32.mxu0 0.0
        %2364 = vmatmul.mubr.f32.gmra.mrb[0].mxu0 %v2297
        %v2365 = vpop.f32.mrb[0].mxu0
        %v2366 = vadd.f32 0.0, %v2365
        %v2367 = vpop.f32.mrb[0].mxu0
        %2368 = vdwg.mxu0
        %v2370 = vsel %vm1636, %v2143, 0
        %2372 = vmatprep.subr.mxu0 0.0
        %2373 = vmatpush1.msra.mxu0 %v2293
        %2374 = vmatprep.subr.mxu0 0.0
        %2375 = vmatpush1.msra.mxu0 0.0
        %2376 = vmatprep.subr.mxu0 0.0
        %2377 = vmatpush1.msra.mxu0 0.0
        %2378 = vmatprep.subr.mxu0 0.0
        %2379 = vmatpush1.msra.mxu0 0.0
        %2380 = vmatprep.subr.mxu0 0.0
        %2381 = vmatpush1.msra.mxu0 0.0
        %2382 = vmatprep.subr.mxu0 0.0
        %2383 = vmatpush1.msra.mxu0 0.0
        %2384 = vmatprep.subr.mxu0 0.0
        %2385 = vmatpush1.msra.mxu0 0.0
        %2386 = vmatprep.subr.mxu0 0.0
        %2387 = vmatpush1.msra.mxu0 0.0
        %2388 = vmatprep.subr.mxu0 0.0
        %2389 = vmatpush1.msra.mxu0 0.0
        %2390 = vmatprep.subr.mxu0 0.0
        %2391 = vmatpush1.msra.mxu0 0.0
        %2392 = vmatprep.subr.mxu0 0.0
        %2393 = vmatpush1.msra.mxu0 0.0
        %2394 = vmatprep.subr.mxu0 0.0
        %2395 = vmatpush1.msra.mxu0 0.0
        %2396 = vmatprep.subr.mxu0 0.0
        %2397 = vmatpush1.msra.mxu0 0.0
        %2398 = vmatprep.subr.mxu0 0.0
        %2399 = vmatpush1.msra.mxu0 0.0
        %2400 = vmatprep.subr.mxu0 0.0
        %2401 = vmatpush1.msra.mxu0 0.0
        %2402 = vmatprep.subr.mxu0 0.0
        %2403 = vmatpush1.msra.mxu0 0.0
        %2404 = vmatprep.subr.mxu0 0.0
        %2405 = vmatpush1.msra.mxu0 0.0
        %2406 = vmatprep.subr.mxu0 0.0
        %2407 = vmatpush1.msra.mxu0 0.0
        %2408 = vmatprep.subr.mxu0 0.0
        %2409 = vmatpush1.msra.mxu0 0.0
        %2410 = vmatprep.subr.mxu0 0.0
        %2411 = vmatpush1.msra.mxu0 0.0
        %2412 = vmatprep.subr.mxu0 0.0
        %2413 = vmatpush1.msra.mxu0 0.0
        %2414 = vmatprep.subr.mxu0 0.0
        %2415 = vmatpush1.msra.mxu0 0.0
        %2416 = vmatprep.subr.mxu0 0.0
        %2417 = vmatpush1.msra.mxu0 0.0
        %2418 = vmatprep.subr.mxu0 0.0
        %2419 = vmatpush1.msra.mxu0 0.0
        %2420 = vmatprep.subr.mxu0 0.0
        %2421 = vmatpush1.msra.mxu0 0.0
        %2422 = vmatprep.subr.mxu0 0.0
        %2423 = vmatpush1.msra.mxu0 0.0
        %2424 = vmatprep.subr.mxu0 0.0
        %2425 = vmatpush1.msra.mxu0 0.0
        %2426 = vmatprep.subr.mxu0 0.0
        %2427 = vmatpush1.msra.mxu0 0.0
        %2428 = vmatprep.subr.mxu0 0.0
        %2429 = vmatpush1.msra.mxu0 0.0
        %2430 = vmatprep.subr.mxu0 0.0
        %2431 = vmatpush1.msra.mxu0 0.0
        %2432 = vmatprep.subr.mxu0 0.0
        %2433 = vmatpush1.msra.mxu0 0.0
        %2434 = vmatprep.subr.mxu0 0.0
        %2435 = vmatpush1.msra.mxu0 0.0
        %2436 = vmatprep.mubr.f32.mxu0 0.0
        %2437 = vmatmul.mubr.f32.gmra.mrb[0].mxu0 %v2370
        %v2438 = vpop.f32.mrb[0].mxu0
        %v2439 = vadd.f32 0.0, %v2438
        %v2440 = vpop.f32.mrb[0].mxu0
        %2441 = vdwg.mxu0
        %v2443 = vsel %vm1636, %v2216, 0
        %2445 = vmatprep.subr.mxu0 0.0
        %2446 = vmatpush1.msra.mxu0 %v2294
        %2447 = vmatprep.subr.mxu0 0.0
        %2448 = vmatpush1.msra.mxu0 0.0
        %2449 = vmatprep.subr.mxu0 0.0
        %2450 = vmatpush1.msra.mxu0 0.0
        %2451 = vmatprep.subr.mxu0 0.0
        %2452 = vmatpush1.msra.mxu0 0.0
        %2453 = vmatprep.subr.mxu0 0.0
        %2454 = vmatpush1.msra.mxu0 0.0
        %2455 = vmatprep.subr.mxu0 0.0
        %2456 = vmatpush1.msra.mxu0 0.0
        %2457 = vmatprep.subr.mxu0 0.0
        %2458 = vmatpush1.msra.mxu0 0.0
        %2459 = vmatprep.subr.mxu0 0.0
        %2460 = vmatpush1.msra.mxu0 0.0
        %2461 = vmatprep.subr.mxu0 0.0
        %2462 = vmatpush1.msra.mxu0 0.0
        %2463 = vmatprep.subr.mxu0 0.0
        %2464 = vmatpush1.msra.mxu0 0.0
        %2465 = vmatprep.subr.mxu0 0.0
        %2466 = vmatpush1.msra.mxu0 0.0
        %2467 = vmatprep.subr.mxu0 0.0
        %2468 = vmatpush1.msra.mxu0 0.0
        %2469 = vmatprep.subr.mxu0 0.0
        %2470 = vmatpush1.msra.mxu0 0.0
        %2471 = vmatprep.subr.mxu0 0.0
        %2472 = vmatpush1.msra.mxu0 0.0
        %2473 = vmatprep.subr.mxu0 0.0
        %2474 = vmatpush1.msra.mxu0 0.0
        %2475 = vmatprep.subr.mxu0 0.0
        %2476 = vmatpush1.msra.mxu0 0.0
        %2477 = vmatprep.subr.mxu0 0.0
        %2478 = vmatpush1.msra.mxu0 0.0
        %2479 = vmatprep.subr.mxu0 0.0
        %2480 = vmatpush1.msra.mxu0 0.0
        %2481 = vmatprep.subr.mxu0 0.0
        %2482 = vmatpush1.msra.mxu0 0.0
        %2483 = vmatprep.subr.mxu0 0.0
        %2484 = vmatpush1.msra.mxu0 0.0
        %2485 = vmatprep.subr.mxu0 0.0
        %2486 = vmatpush1.msra.mxu0 0.0
        %2487 = vmatprep.subr.mxu0 0.0
        %2488 = vmatpush1.msra.mxu0 0.0
        %2489 = vmatprep.subr.mxu0 0.0
        %2490 = vmatpush1.msra.mxu0 0.0
        %2491 = vmatprep.subr.mxu0 0.0
        %2492 = vmatpush1.msra.mxu0 0.0
        %2493 = vmatprep.subr.mxu0 0.0
        %2494 = vmatpush1.msra.mxu0 0.0
        %2495 = vmatprep.subr.mxu0 0.0
        %2496 = vmatpush1.msra.mxu0 0.0
        %2497 = vmatprep.subr.mxu0 0.0
        %2498 = vmatpush1.msra.mxu0 0.0
        %2499 = vmatprep.subr.mxu0 0.0
        %2500 = vmatpush1.msra.mxu0 0.0
        %2501 = vmatprep.subr.mxu0 0.0
        %2502 = vmatpush1.msra.mxu0 0.0
        %2503 = vmatprep.subr.mxu0 0.0
        %2504 = vmatpush1.msra.mxu0 0.0
        %2505 = vmatprep.subr.mxu0 0.0
        %2506 = vmatpush1.msra.mxu0 0.0
        %2507 = vmatprep.subr.mxu0 0.0
        %2508 = vmatpush1.msra.mxu0 0.0
        %2509 = vmatprep.mubr.f32.mxu0 0.0
        %2510 = vmatmul.mubr.f32.gmra.mrb[0].mxu0 %v2443
        %v2511 = vpop.f32.mrb[0].mxu0
        %v2512 = vadd.f32 0.0, %v2511
        %v2513 = vpop.f32.mrb[0].mxu0
        %2514 = vdwg.mxu0
        %v2516 = vsel %vm1636, %v2289, 0
        %2518 = vmatprep.subr.mxu0 0.0
        %2519 = vmatpush1.msra.mxu0 %v2295
        %2520 = vmatprep.subr.mxu0 0.0
        %2521 = vmatpush1.msra.mxu0 0.0
        %2522 = vmatprep.subr.mxu0 0.0
        %2523 = vmatpush1.msra.mxu0 0.0
        %2524 = vmatprep.subr.mxu0 0.0
        %2525 = vmatpush1.msra.mxu0 0.0
        %2526 = vmatprep.subr.mxu0 0.0
        %2527 = vmatpush1.msra.mxu0 0.0
        %2528 = vmatprep.subr.mxu0 0.0
        %2529 = vmatpush1.msra.mxu0 0.0
        %2530 = vmatprep.subr.mxu0 0.0
        %2531 = vmatpush1.msra.mxu0 0.0
        %2532 = vmatprep.subr.mxu0 0.0
        %2533 = vmatpush1.msra.mxu0 0.0
        %2534 = vmatprep.subr.mxu0 0.0
        %2535 = vmatpush1.msra.mxu0 0.0
        %2536 = vmatprep.subr.mxu0 0.0
        %2537 = vmatpush1.msra.mxu0 0.0
        %2538 = vmatprep.subr.mxu0 0.0
        %2539 = vmatpush1.msra.mxu0 0.0
        %2540 = vmatprep.subr.mxu0 0.0
        %2541 = vmatpush1.msra.mxu0 0.0
        %2542 = vmatprep.subr.mxu0 0.0
        %2543 = vmatpush1.msra.mxu0 0.0
        %2544 = vmatprep.subr.mxu0 0.0
        %2545 = vmatpush1.msra.mxu0 0.0
        %2546 = vmatprep.subr.mxu0 0.0
        %2547 = vmatpush1.msra.mxu0 0.0
        %2548 = vmatprep.subr.mxu0 0.0
        %2549 = vmatpush1.msra.mxu0 0.0
        %2550 = vmatprep.subr.mxu0 0.0
        %2551 = vmatpush1.msra.mxu0 0.0
        %2552 = vmatprep.subr.mxu0 0.0
        %2553 = vmatpush1.msra.mxu0 0.0
        %2554 = vmatprep.subr.mxu0 0.0
        %2555 = vmatpush1.msra.mxu0 0.0
        %2556 = vmatprep.subr.mxu0 0.0
        %2557 = vmatpush1.msra.mxu0 0.0
        %2558 = vmatprep.subr.mxu0 0.0
        %2559 = vmatpush1.msra.mxu0 0.0
        %2560 = vmatprep.subr.mxu0 0.0
        %2561 = vmatpush1.msra.mxu0 0.0
        %2562 = vmatprep.subr.mxu0 0.0
        %2563 = vmatpush1.msra.mxu0 0.0
        %2564 = vmatprep.subr.mxu0 0.0
        %2565 = vmatpush1.msra.mxu0 0.0
        %2566 = vmatprep.subr.mxu0 0.0
        %2567 = vmatpush1.msra.mxu0 0.0
        %2568 = vmatprep.subr.mxu0 0.0
        %2569 = vmatpush1.msra.mxu0 0.0
        %2570 = vmatprep.subr.mxu0 0.0
        %2571 = vmatpush1.msra.mxu0 0.0
        %2572 = vmatprep.subr.mxu0 0.0
        %2573 = vmatpush1.msra.mxu0 0.0
        %2574 = vmatprep.subr.mxu0 0.0
        %2575 = vmatpush1.msra.mxu0 0.0
        %2576 = vmatprep.subr.mxu0 0.0
        %2577 = vmatpush1.msra.mxu0 0.0
        %2578 = vmatprep.subr.mxu0 0.0
        %2579 = vmatpush1.msra.mxu0 0.0
        %2580 = vmatprep.subr.mxu0 0.0
        %2581 = vmatpush1.msra.mxu0 0.0
        %2582 = vmatprep.mubr.f32.mxu0 0.0
        %2583 = vmatmul.mubr.f32.gmra.mrb[0].mxu0 %v2516
        %v2584 = vpop.f32.mrb[0].mxu0
        %v2585 = vadd.f32 0.0, %v2584
        %v2586 = vpop.f32.mrb[0].mxu0
        %2587 = vdwg.mxu0
        %v2588 = vsel %vm701, %v2366, 0.0
        %v2589 = vsel %vm701, %v2439, 0.0
        %v2590 = vadd.f32 %v2588, %v2589
        %v2591 = vsel %vm701, %v2512, 0.0
        %v2592 = vadd.f32 %v2590, %v2591
        %v2593 = vsel %vm701, %v2585, 0.0
        %v2594 = vadd.f32 %v2592, %v2593
        %v2595 = vld [vmem:[%s10] sm:$0x1]
        %v2597 = vlaneseq
        %v2598 = vshrl.u32 %v2597, 7
        %v2599 = vsub.s32 0, %v2598
        %v2600 = vrot.slane %v2595, %v2599
        %v2602 = vadd.f32 %v2594, %v2600
        %v2603 = vadd.f32 %v2602, %v654
        %v2604 = vsel %vm701, %v2603, 0.0
        %2605 = vadd.xlane.f32.xlu0 %v2604
        %v2606 = vpop.xlane.xlu0 %2605
        %v2607 = vrcp.pop 32.0
        %v2608 = vmul.f32 %v2606, %v2607
        %v2609 = vsub.f32 %v2603, %v2608
        %v2610 = vmul.f32 %v2609, %v2609
        %v2611 = vsel %vm701, %v2610, 0.0
        %2612 = vadd.xlane.f32.xlu0 %v2611
        %v2613 = vpop.xlane.xlu0 %2612
        %v2614 = vmul.f32 %v2613, %v2607
        %v2615 = vadd.f32 %v2614, 1e-05
        %v2616 = vrsqrt.pop %v2615
        %v2617 = vmul.f32 %v2609, %v2616
        %v2618 = vld [vmem:[%s11] sm:$0x1]
        %v2620 = vlaneseq
        %v2621 = vshrl.u32 %v2620, 7
        %v2622 = vsub.s32 0, %v2621
        %v2623 = vrot.slane %v2618, %v2622
        %v2625 = vmul.f32 %v2617, %v2623
        %v2626 = vld [vmem:[%s12] sm:$0x1]
        %v2628 = vlaneseq
        %v2629 = vshrl.u32 %v2628, 7
        %v2630 = vsub.s32 0, %v2629
        %v2631 = vrot.slane %v2626, %v2630
        %v2633 = vadd.f32 %v2625, %v2631
        %v2634 = vld [vmem:[%s13] sm:$0xff]
        %v2635 = vld [vmem:[%s13 + $0x8] sm:$0xff]
        %v2636 = vld [vmem:[%s13 + $0x10] sm:$0xff]
        %v2637 = vld [vmem:[%s13 + $0x18] sm:$0xff]
        %v2638 = vld [vmem:[%s14] sm:$0x1]
        %v2640 = vlaneseq
        %v2641 = vshrl.u32 %v2640, 7
        %v2642 = vsub.s32 0, %v2641
        %v2643 = vrot.slane %v2638, %v2642
        %v2646 = vsel %vm701, %v2633, 0
        %2648 = vmatprep.subr.mxu0 0.0
        %2649 = vmatpush1.msra.mxu0 %v2634
        %2650 = vmatprep.subr.mxu0 0.0
        %2651 = vmatpush1.msra.mxu0 %v2635
        %2652 = vmatprep.subr.mxu0 0.0
        %2653 = vmatpush1.msra.mxu0 %v2636
        %2654 = vmatprep.subr.mxu0 0.0
        %2655 = vmatpush1.msra.mxu0 %v2637
        %2656 = vmatprep.subr.mxu0 0.0
        %2657 = vmatpush1.msra.mxu0 0.0
        %2658 = vmatprep.subr.mxu0 0.0
        %2659 = vmatpush1.msra.mxu0 0.0
        %2660 = vmatprep.subr.mxu0 0.0
        %2661 = vmatpush1.msra.mxu0 0.0
        %2662 = vmatprep.subr.mxu0 0.0
        %2663 = vmatpush1.msra.mxu0 0.0
        %2664 = vmatprep.subr.mxu0 0.0
        %2665 = vmatpush1.msra.mxu0 0.0
        %2666 = vmatprep.subr.mxu0 0.0
        %2667 = vmatpush1.msra.mxu0 0.0
        %2668 = vmatprep.subr.mxu0 0.0
        %2669 = vmatpush1.msra.mxu0 0.0
        %2670 = vmatprep.subr.mxu0 0.0
        %2671 = vmatpush1.msra.mxu0 0.0
        %2672 = vmatprep.subr.mxu0 0.0
        %2673 = vmatpush1.msra.mxu0 0.0
        %2674 = vmatprep.subr.mxu0 0.0
        %2675 = vmatpush1.msra.mxu0 0.0
        %2676 = vmatprep.subr.mxu0 0.0
        %2677 = vmatpush1.msra.mxu0 0.0
        %2678 = vmatprep.subr.mxu0 0.0
        %2679 = vmatpush1.msra.mxu0 0.0
        %2680 = vmatprep.subr.mxu0 0.0
        %2681 = vmatpush1.msra.mxu0 0.0
        %2682 = vmatprep.subr.mxu0 0.0
        %2683 = vmatpush1.msra.mxu0 0.0
        %2684 = vmatprep.subr.mxu0 0.0
        %2685 = vmatpush1.msra.mxu0 0.0
        %2686 = vmatprep.subr.mxu0 0.0
        %2687 = vmatpush1.msra.mxu0 0.0
        %2688 = vmatprep.subr.mxu0 0.0
        %2689 = vmatpush1.msra.mxu0 0.0
        %2690 = vmatprep.subr.mxu0 0.0
        %2691 = vmatpush1.msra.mxu0 0.0
        %2692 = vmatprep.subr.mxu0 0.0
        %2693 = vmatpush1.msra.mxu0 0.0
        %2694 = vmatprep.subr.mxu0 0.0
        %2695 = vmatpush1.msra.mxu0 0.0
        %2696 = vmatprep.subr.mxu0 0.0
        %2697 = vmatpush1.msra.mxu0 0.0
        %2698 = vmatprep.subr.mxu0 0.0
        %2699 = vmatpush1.msra.mxu0 0.0
        %2700 = vmatprep.subr.mxu0 0.0
        %2701 = vmatpush1.msra.mxu0 0.0
        %2702 = vmatprep.subr.mxu0 0.0
        %2703 = vmatpush1.msra.mxu0 0.0
        %2704 = vmatprep.subr.mxu0 0.0
        %2705 = vmatpush1.msra.mxu0 0.0
        %2706 = vmatprep.subr.mxu0 0.0
        %2707 = vmatpush1.msra.mxu0 0.0
        %2708 = vmatprep.subr.mxu0 0.0
        %2709 = vmatpush1.msra.mxu0 0.0
        %2710 = vmatprep.subr.mxu0 0.0
        %2711 = vmatpush1.msra.mxu0 0.0
        %2712 = vmatprep.mubr.f32.mxu0 0.0
        %2713 = vmatmul.mubr.f32.gmra.mrb[0].mxu0 %v2646
        %v2714 = vpop.f32.mrb[0].mxu0
        %v2715 = vadd.f32 %v2643, %v2714
        %v2716 = vpop.f32.mrb[0].mxu0
        %2717 = vdwg.mxu0
        %v2718 = vmax.f32 %v2715, 0.0
        %v2719 = vld [vmem:[%s15] sm:$0xff]
        %v2720 = vld [vmem:[%s15 + $0x8] sm:$0xff]
        %v2721 = vld [vmem:[%s15 + $0x10] sm:$0xff]
        %v2722 = vld [vmem:[%s15 + $0x18] sm:$0xff]
        %v2723 = vld [vmem:[%s15 + $0x20] sm:$0xff]
        %v2724 = vld [vmem:[%s15 + $0x28] sm:$0xff]
        %v2725 = vld [vmem:[%s15 + $0x30] sm:$0xff]
        %v2726 = vld [vmem:[%s15 + $0x38] sm:$0xff]
        %v2727 = vld [vmem:[%s16] sm:$0x1]
        %v2729 = vlaneseq
        %v2730 = vshrl.u32 %v2729, 7
        %v2731 = vsub.s32 0, %v2730
        %v2732 = vrot.slane %v2727, %v2731
        %vm2734 = vcmask 523264
        %v2736 = vsel %vm2734, %v2718, 0
        %2738 = vmatprep.subr.mxu0 0.0
        %2739 = vmatpush1.msra.mxu0 %v2719
        %2740 = vmatprep.subr.mxu0 0.0
        %2741 = vmatpush1.msra.mxu0 %v2720
        %2742 = vmatprep.subr.mxu0 0.0
        %2743 = vmatpush1.msra.mxu0 %v2721
        %2744 = vmatprep.subr.mxu0 0.0
        %2745 = vmatpush1.msra.mxu0 %v2722
        %2746 = vmatprep.subr.mxu0 0.0
        %2747 = vmatpush1.msra.mxu0 %v2723
        %2748 = vmatprep.subr.mxu0 0.0
        %2749 = vmatpush1.msra.mxu0 %v2724
        %2750 = vmatprep.subr.mxu0 0.0
        %2751 = vmatpush1.msra.mxu0 %v2725
        %2752 = vmatprep.subr.mxu0 0.0
        %2753 = vmatpush1.msra.mxu0 %v2726
        %2754 = vmatprep.subr.mxu0 0.0
        %2755 = vmatpush1.msra.mxu0 0.0
        %2756 = vmatprep.subr.mxu0 0.0
        %2757 = vmatpush1.msra.mxu0 0.0
        %2758 = vmatprep.subr.mxu0 0.0
        %2759 = vmatpush1.msra.mxu0 0.0
        %2760 = vmatprep.subr.mxu0 0.0
        %2761 = vmatpush1.msra.mxu0 0.0
        %2762 = vmatprep.subr.mxu0 0.0
        %2763 = vmatpush1.msra.mxu0 0.0
        %2764 = vmatprep.subr.mxu0 0.0
        %2765 = vmatpush1.msra.mxu0 0.0
        %2766 = vmatprep.subr.mxu0 0.0
        %2767 = vmatpush1.msra.mxu0 0.0
        %2768 = vmatprep.subr.mxu0 0.0
        %2769 = vmatpush1.msra.mxu0 0.0
        %2770 = vmatprep.subr.mxu0 0.0
        %2771 = vmatpush1.msra.mxu0 0.0
        %2772 = vmatprep.subr.mxu0 0.0
        %2773 = vmatpush1.msra.mxu0 0.0
        %2774 = vmatprep.subr.mxu0 0.0
        %2775 = vmatpush1.msra.mxu0 0.0
        %2776 = vmatprep.subr.mxu0 0.0
        %2777 = vmatpush1.msra.mxu0 0.0
        %2778 = vmatprep.subr.mxu0 0.0
        %2779 = vmatpush1.msra.mxu0 0.0
        %2780 = vmatprep.subr.mxu0 0.0
        %2781 = vmatpush1.msra.mxu0 0.0
        %2782 = vmatprep.subr.mxu0 0.0
        %2783 = vmatpush1.msra.mxu0 0.0
        %2784 = vmatprep.subr.mxu0 0.0
        %2785 = vmatpush1.msra.mxu0 0.0
        %2786 = vmatprep.subr.mxu0 0.0
        %2787 = vmatpush1.msra.mxu0 0.0
        %2788 = vmatprep.subr.mxu0 0.0
        %2789 = vmatpush1.msra.mxu0 0.0
        %2790 = vmatprep.subr.mxu0 0.0
        %2791 = vmatpush1.msra.mxu0 0.0
        %2792 = vmatprep.subr.mxu0 0.0
        %2793 = vmatpush1.msra.mxu0 0.0
        %2794 = vmatprep.subr.mxu0 0.0
        %2795 = vmatpush1.msra.mxu0 0.0
        %2796 = vmatprep.subr.mxu0 0.0
        %2797 = vmatpush1.msra.mxu0 0.0
        %2798 = vmatprep.subr.mxu0 0.0
        %2799 = vmatpush1.msra.mxu0 0.0
        %2800 = vmatprep.subr.mxu0 0.0
        %2801 = vmatpush1.msra.mxu0 0.0
        %2802 = vmatprep.mubr.f32.mxu0 0.0
        %2803 = vmatmul.mubr.f32.gmra.mrb[0].mxu0 %v2736
        %v2804 = vpop.f32.mrb[0].mxu0
        %v2805 = vadd.f32 %v2732, %v2804
        %v2806 = vpop.f32.mrb[0].mxu0
        %2807 = vdwg.mxu0
        %v2808 = vadd.f32 %v2805, %v2633
        %v2809 = vsel %vm701, %v2808, 0.0
        %2810 = vadd.xlane.f32.xlu0 %v2809
        %v2811 = vpop.xlane.xlu0 %2810
        %v2812 = vmul.f32 %v2811, %v2607
        %v2813 = vsub.f32 %v2808, %v2812
        %v2814 = vmul.f32 %v2813, %v2813
        %v2815 = vsel %vm701, %v2814, 0.0
        %2816 = vadd.xlane.f32.xlu0 %v2815
        %v2817 = vpop.xlane.xlu0 %2816
        %v2818 = vmul.f32 %v2817, %v2607
        %v2819 = vadd.f32 %v2818, 1e-05
        %v2820 = vrsqrt.pop %v2819
        %v2821 = vmul.f32 %v2813, %v2820
        %v2822 = vld [vmem:[%s17] sm:$0x1]
        %v2824 = vlaneseq
        %v2825 = vshrl.u32 %v2824, 7
        %v2826 = vsub.s32 0, %v2825
        %v2827 = vrot.slane %v2822, %v2826
        %v2829 = vmul.f32 %v2821, %v2827
        %v2830 = vld [vmem:[%s18] sm:$0x1]
        %v2832 = vlaneseq
        %v2833 = vshrl.u32 %v2832, 7
        %v2834 = vsub.s32 0, %v2833
        %v2835 = vrot.slane %v2830, %v2834
        %v2837 = vadd.f32 %v2829, %v2835
        %2838 = vst.msk [vmem:[%s639] sm:$0xff] %vm701, %v2837
        %s2839 = sand.u32 %s471, 1
        %s2840 = scalar_lea.sflag [#allocation3], %s2839
        %s2841 = sand.u32 %s471, 1
        %s2842 = smul.addr %s2841, 8
        %s2843 = scalar_lea.vmem [#allocation2], %s2842
        // Predicated region
        $region97: #{tpu_custom_call.1} parent=95 // pred_check
          %p2844 = pneg %p481
        $region98: #{tpu_custom_call.1} parent=95 // pred_check_branch
          %2846 = sbr.rel (%p2844) target = $region100
        $region99: #{tpu_custom_call.1} parent=95 // pred_region
          %s2848 = ssub.s32 128, 128
          %2849 = vsyncadd %s2840, %s2848
          %s2850 = sadd.s32 %s38, %s37
          %s2851 = smul.addr %s2850, 128
          %s2852 = scalar_lea.hbm %s19, %s2851
          %s2854 = sshll.u32 %s2843, 4
          %s2855 = int_to_ptr.vmem [resolvable:$true] %s2854
          %2857 = dma.vmem_to_hbm [thread:$0]  %s2855, 128, %s2852, %s2840
        $region100: #{tpu_custom_call.1} parent=95 // pred_fallthru
          _
      $region96: #{tpu_custom_call.1} parent=5 // pred_fallthru
        _
      %p2858 = scmp.le.s32.totalorder 2, %s28
      // Predicated region
      $region101: #{tpu_custom_call.1} parent=5 // pred_check
        %p2859 = pneg %p2858
      $region102: #{tpu_custom_call.1} parent=5 // pred_check_branch
        %2861 = sbr.rel (%p2859) target = $region104
      $region103: #{tpu_custom_call.1} parent=5 // pred_region
        %s2862 = ssub.s32 %s28, 2
        // Predicated region
        $region105: #{tpu_custom_call.1} parent=103 // pred_check
          %p2863 = pneg %p487
        $region106: #{tpu_custom_call.1} parent=103 // pred_check_branch
          %2865 = sbr.rel (%p2863) target = $region108
        $region107: #{tpu_custom_call.1} parent=103 // pred_region
          %s2866 = sand.u32 %s472, 1
          %s2867 = scalar_lea.sflag [#allocation3], %s2866
          %s2868 = sand.u32 %s472, 1
          %s2869 = smul.addr %s2868, 8
          %s2870 = scalar_lea.vmem [#allocation2], %s2869
          %2871 = dma.done %s2867, 128
        $region108: #{tpu_custom_call.1} parent=103 // pred_fallthru
          _
      $region104: #{tpu_custom_call.1} parent=5 // pred_fallthru
        _
    $region6: #{tpu_custom_call.1} parent=1 // loop_footer
      %s32 = sadd.s32 1, %s28
    $region7: #{tpu_custom_call.1} parent=1 // loop_footer_branch
      %27 = sbr.rel target = $region3
    $region8: #{tpu_custom_call.1} parent=1 // loop_exit
      _
    %2872 = vsyncpa [#allocation3], 1
    %s2873 = scalar_lea.sflag [#allocation3], 1
    %2874 = vsyncpa %s2873, 1

</llo_original>
